<compile_context>
chip_gen: v7x
topology: tpu7x:2x2x1
jax: 0.10.0
libtpu: 0.0.40
codegen_flags: <defaults>
</compile_context>

<pallas_src>
import functools

import numpy as np
import jax
import jax.numpy as jnp
from jax import lax
from jax.experimental import pallas as pl
from jax.experimental.pallas import tpu as pltpu

IMG_H = 16
IMG_W = 16
C_IN = 3
C1, C2, C3 = 32, 64, 128
NUM_CLASSES = 9
FC_HIDDEN = 512
FC1_IN = C3 * (IMG_H // 8) * (IMG_W // 8)      # 512
FC2_PAD = 128                                   # lane-dense padded logits width


# ---------------------------------------------------------------------------
# Fused whole-network kernel. One grid step = one block of BB images.
# ---------------------------------------------------------------------------
def _fused_cnn_kernel(x_ref,
                      t1_ref, b1_ref, t2_ref, b2_ref, t3_ref, b3_ref,
                      fc1w_ref, fc1b_ref, fc2w_ref, fc2b_ref,
                      o_ref,
                      pad1_ref, pad2_ref, pad3_ref, *, BB):
    f32 = jnp.float32

    def conv_relu_pool(pad_ref, t_ref, b_ref, interior_bf16, H):
        """'same' 3x3 conv + bias + ReLU + 2x2/2 max-pool via block-Toeplitz matmuls.

        pad_ref : (H+2, BB, W*Cin) bf16 scratch. Rows 1..H hold the activation,
                  rows 0 / H+1 are the zero H-halo.  W-direction zero padding is
                  folded into zero rows of t_ref, so no lane halo exists.
        t_ref   : (3, W*Cin, 2*Nh) bf16 Toeplitz weights (one per kh); columns
                  [:Nh] produce even output columns, [Nh:] odd ones,
                  Nh = (W//2)*Cout.
        b_ref   : (1, Nh) f32 bias, pre-tiled over pooled W positions.
        Returns the pooled activation, (H//2, BB, Nh) float32.
        """
        K = pad_ref.shape[2]
        Nh = t_ref.shape[2] // 2
        zero_row = jnp.zeros((1, BB, K), pad_ref.dtype)
        pad_ref[0:1, :, :] = zero_row                    # top H-halo row
        pad_ref[H + 1:H + 2, :, :] = zero_row            # bottom H-halo row
        pad_ref[1:H + 1, :, :] = interior_bf16           # cast-once interior write

        acc = None
        for kh in range(3):                              # 3 MXU matmuls, K = W*Cin
            lhs = pad_ref[kh:kh + H, :, :].reshape(H * BB, K)
            d = jnp.dot(lhs, t_ref[kh], preferred_element_type=f32)
            acc = d if acc is None else acc + d

        # 2x2 max-pool: W side = even vs odd column halves (from the weight
        # layout), H side = row pairs.  Pure VPU maxima; one bias + ReLU pass on
        # the pooled (quarter-size) result (valid: bias is per-channel constant,
        # ReLU is monotone).
        m = jnp.maximum(acc[:, :Nh], acc[:, Nh:])
        m = m.reshape(H // 2, 2, BB, Nh)
        m = jnp.maximum(m[:, 0], m[:, 1])
        return jnp.maximum(m + b_ref[...], 0.0)          # f32 bias + ReLU

    a1 = conv_relu_pool(pad1_ref, t1_ref, b1_ref,
                        x_ref[...].astype(jnp.bfloat16), IMG_H)        # (8, BB, 256)
    a2 = conv_relu_pool(pad2_ref, t2_ref, b2_ref,
                        a1.astype(jnp.bfloat16), IMG_H // 2)           # (4, BB, 256)
    a3 = conv_relu_pool(pad3_ref, t3_ref, b3_ref,
                        a2.astype(jnp.bfloat16), IMG_H // 4)           # (2, BB, 256)

    # fc1 as two (BB,256)x(256,512) matmuls (one per pooled row): fc1 weight rows
    # were permuted at pack time, so no (row, batch) transpose is needed.
    h = (jnp.dot(a3[0].astype(jnp.bfloat16), fc1w_ref[0],
                 preferred_element_type=f32)
         + jnp.dot(a3[1].astype(jnp.bfloat16), fc1w_ref[1],
                   preferred_element_type=f32))
    h = jnp.maximum(h + fc1b_ref[...], 0.0)
    # TODO(synk): Dropout(0.5) is identity here (inference mode); training-mode
    # random masking is not implemented.
    out = jnp.dot(h.astype(jnp.bfloat16), fc2w_ref[...],
                  preferred_element_type=f32)
    o_ref[...] = (out + fc2b_ref[...]).astype(o_ref.dtype)             # (BB, 128)


# ---------------------------------------------------------------------------
# Wrapper: NCHW input -> (H, N, W*C) layout, batch-block grid, slice to 9 logits.
# ---------------------------------------------------------------------------
def _ceil_to(x, m):
    return -(-x // m) * m


@functools.partial(jax.jit, static_argnames=("batch_block",))
def cnn_forward(params, x_nchw, batch_block=64):
    """Forward pass. x_nchw: (N, 3, 16, 16) float32 -> (N, 9) float32 logits."""
    N = x_nchw.shape[0]

    # Wrapper-side layout plumbing: NCHW -> (H, N, W*C) so kh-shifted conv windows
    # are leading-dim slices and (w, c) fold into lanes (no lane-padding blowup).
    x = jnp.transpose(x_nchw, (2, 0, 3, 1)).reshape(IMG_H, N, IMG_W * C_IN)

    # Batch tile: multiple of 8 (sublane rule); aim for >=2 grid blocks when N
    # allows so the "parallel" batch axis splits across v7x's two TensorCores.
    BB = max(8, min(_ceil_to(batch_block, 8), _ceil_to(-(-N // 2), 8)))
    n_blocks = -(-N // BB)
    N_pad = n_blocks * BB
    if N_pad != N:
        x = jnp.pad(x, ((0, 0), (0, N_pad - N), (0, 0)))

    # Advisory cost estimate (MXU flops of the Toeplitz convs + fc layers).
    flops = 2 * N_pad * (IMG_H * (IMG_W * C_IN) * 512 * 3
                         + (IMG_H // 2) * 256 * 512 * 3
                         + (IMG_H // 4) * 256 * 512 * 3
                         + 2 * 256 * FC_HIDDEN
                         + FC_HIDDEN * FC2_PAD)
    bytes_accessed = (IMG_H * N_pad * IMG_W * C_IN * 4 + N_pad * FC2_PAD * 4
                      + sum(int(v.size) * v.dtype.itemsize for v in params.values()))

    out_pad = pl.pallas_call(
        functools.partial(_fused_cnn_kernel, BB=BB),
        out_shape=jax.ShapeDtypeStruct((N_pad, FC2_PAD), jnp.float32),
        grid_spec=pltpu.PrefetchScalarGridSpec(
            num_scalar_prefetch=0,
            grid=(n_blocks,),
            in_specs=[
                pl.BlockSpec((IMG_H, BB, IMG_W * C_IN), lambda n: (0, n, 0)),
                pl.BlockSpec((3, IMG_W * C_IN, 2 * (IMG_W // 2) * C1),
                             lambda n: (0, 0, 0)),
                pl.BlockSpec((1, (IMG_W // 2) * C1), lambda n: (0, 0)),
                pl.BlockSpec((3, (IMG_W // 2) * C1, 2 * (IMG_W // 4) * C2),
                             lambda n: (0, 0, 0)),
                pl.BlockSpec((1, (IMG_W // 4) * C2), lambda n: (0, 0)),
                pl.BlockSpec((3, (IMG_W // 4) * C2, 2 * (IMG_W // 8) * C3),
                             lambda n: (0, 0, 0)),
                pl.BlockSpec((1, (IMG_W // 8) * C3), lambda n: (0, 0)),
                pl.BlockSpec((IMG_H // 8, (IMG_W // 8) * C3, FC_HIDDEN),
                             lambda n: (0, 0, 0)),
                pl.BlockSpec((1, FC_HIDDEN), lambda n: (0, 0)),
                pl.BlockSpec((FC_HIDDEN, FC2_PAD), lambda n: (0, 0)),
                pl.BlockSpec((1, FC2_PAD), lambda n: (0, 0)),
            ],
            out_specs=pl.BlockSpec((BB, FC2_PAD), lambda n: (n, 0)),
            scratch_shapes=[
                pltpu.VMEM((IMG_H + 2, BB, IMG_W * C_IN), jnp.bfloat16),
                pltpu.VMEM((IMG_H // 2 + 2, BB, (IMG_W // 2) * C1), jnp.bfloat16),
                pltpu.VMEM((IMG_H // 4 + 2, BB, (IMG_W // 4) * C2), jnp.bfloat16),
            ],
        ),
        compiler_params=pltpu.CompilerParams(
            dimension_semantics=("parallel",),
            vmem_limit_bytes=48 * 1024 * 1024),
        cost_estimate=pl.CostEstimate(flops=flops, transcendentals=0,
                                      bytes_accessed=bytes_accessed),
    )(x, params["t1"], params["b1"], params["t2"], params["b2"],
      params["t3"], params["b3"], params["fc1_w"], params["fc1_b"],
      params["fc2_w"], params["fc2_b"])

    return out_pad[:N, :NUM_CLASSES]


# ---------------------------------------------------------------------------
# Parameter packing: PyTorch-layout weights -> kernel layout.
#  * conv weights (OIHW) -> per-kh block-Toeplitz (W*Cin, 2*(W//2)*Cout) bf16
#    matrices with the W-direction 'same' padding and even/odd pooling split
#    folded in.
#  * conv biases -> f32, tiled over pooled W positions.
#  * fc1 weight rows permuted from PyTorch (C,H,W) flatten order to the kernel's
#    (h, w*C3 + c) order, split per pooled row h.
#  * fc2 weight/bias zero-padded from 9 to 128 output lanes.
# ---------------------------------------------------------------------------
def pack_params(raw):
    def toeplitz(w_oihw, W):
        w = np.asarray(w_oihw, np.float32)
        cout, cin = w.shape[0], w.shape[1]
        wt = w.transpose(2, 3, 1, 0)                    # (kh, kw, cin, cout)
        wh = W // 2
        nh = wh * cout
        T = np.zeros((3, W * cin, 2 * nh), np.float32)
        for kh in range(3):
            for parity in range(2):                     # even / odd output column
                for wp in range(wh):
                    for kw in range(3):
                        w_in = 2 * wp + parity + kw - 1  # input col ('same' pad)
                        if 0 <= w_in < W:
                            T[kh, w_in * cin:(w_in + 1) * cin,
                              parity * nh + wp * cout:parity * nh + (wp + 1) * cout] \
                                = wt[kh, kw]
        return jnp.asarray(T, jnp.bfloat16)

    def pooled_bias(b, W):
        return jnp.asarray(np.tile(np.asarray(b, np.float32), W // 2)[None, :],
                           jnp.float32)

    fc1 = np.asarray(raw["fc1_w"], np.float32)
    fc1 = fc1.reshape(FC_HIDDEN, C3, IMG_H // 8, IMG_W // 8)      # (out, c, h, w)
    fc1 = fc1.transpose(2, 3, 1, 0).reshape(IMG_H // 8, (IMG_W // 8) * C3, FC_HIDDEN)

    fc2 = np.zeros((FC_HIDDEN, FC2_PAD), np.float32)
    fc2[:, :NUM_CLASSES] = np.asarray(raw["fc2_w"], np.float32).T
    fc2_b = np.zeros((1, FC2_PAD), np.float32)
    fc2_b[0, :NUM_CLASSES] = np.asarray(raw["fc2_b"], np.float32)

    return {
        "t1": toeplitz(raw["conv1_w"], IMG_W),
        "b1": pooled_bias(raw["conv1_b"], IMG_W),
        "t2": toeplitz(raw["conv2_w"], IMG_W // 2),
        "b2": pooled_bias(raw["conv2_b"], IMG_W // 2),
        "t3": toeplitz(raw["conv3_w"], IMG_W // 4),
        "b3": pooled_bias(raw["conv3_b"], IMG_W // 4),
        "fc1_w": jnp.asarray(fc1, jnp.bfloat16),
        "fc1_b": jnp.asarray(np.asarray(raw["fc1_b"], np.float32)[None, :]),
        "fc2_w": jnp.asarray(fc2, jnp.bfloat16),
        "fc2_b": jnp.asarray(fc2_b),
    }


def init_raw_params(key):
    """Deterministic synthetic parameters in PyTorch layout (OIHW / (out,in))."""
    ks = jax.random.split(key, 10)
    s = 0.05

    def normal(k, shape):
        return s * jax.random.normal(k, shape, jnp.float32)

    return {
        "conv1_w": normal(ks[0], (C1, C_IN, 3, 3)), "conv1_b": normal(ks[1], (C1,)),
        "conv2_w": normal(ks[2], (C2, C1, 3, 3)),  "conv2_b": normal(ks[3], (C2,)),
        "conv3_w": normal(ks[4], (C3, C2, 3, 3)),  "conv3_b": normal(ks[5], (C3,)),
        "fc1_w": normal(ks[6], (FC_HIDDEN, FC1_IN)), "fc1_b": normal(ks[7], (FC_HIDDEN,)),
        "fc2_w": normal(ks[8], (NUM_CLASSES, FC_HIDDEN)),
        "fc2_b": normal(ks[9], (NUM_CLASSES,)),
    }


def reference_forward(raw, x_nchw):
    """Pure-JAX f32 reference matching the PyTorch module (eval mode)."""
    hi = lax.Precision.HIGHEST
    x = x_nchw
    for i in (1, 2, 3):
        w, b = raw[f"conv{i}_w"], raw[f"conv{i}_b"]
        x = lax.conv_general_dilated(
            x, w, window_strides=(1, 1), padding="SAME",
            dimension_numbers=("NCHW", "OIHW", "NCHW"), precision=hi)
        x = jnp.maximum(x + b[None, :, None, None], 0.0)
        x = lax.reduce_window(x, -jnp.inf, lax.max,
                              (1, 1, 2, 2), (1, 1, 2, 2), "VALID")
    x = x.reshape(x.shape[0], -1)                       # PyTorch (C,H,W) flatten
    h = jnp.maximum(jnp.dot(x, raw["fc1_w"].T, precision=hi) + raw["fc1_b"], 0.0)
    return jnp.dot(h, raw["fc2_w"].T, precision=hi) + raw["fc2_b"]


if __name__ == "__main__":
    key = jax.random.PRNGKey(0)
    pkey, xkey = jax.random.split(key)
    raw = init_raw_params(pkey)
    params = pack_params(raw)
    x = jax.random.normal(xkey, (2, C_IN, IMG_H, IMG_W), jnp.float32)   # NCHW input

    out = cnn_forward(params, x)
    jax.block_until_ready(out)
    assert out.shape == (2, NUM_CLASSES), out.shape

    # Numerical check vs. a pure-JAX f32 reference (bf16-MXU tolerance).
    ref = reference_forward(raw, x)
    err = float(jnp.max(jnp.abs(out - ref)))
    assert err < 5e-2, f"max |pallas - reference| = {err}"
    print("KERNEL_OK")
</pallas_src>

<mosaic_0001>
module attributes {stable_mosaic.version = 11 : i64} {
  func.func @_fused_cnn_kernel(%arg0: i32, %arg1: memref<16x8x48xf32, #tpu.memory_space<vmem>>, %arg2: memref<3x48x512xbf16, #tpu.memory_space<vmem>>, %arg3: memref<1x256xf32, #tpu.memory_space<vmem>>, %arg4: memref<3x256x512xbf16, #tpu.memory_space<vmem>>, %arg5: memref<1x256xf32, #tpu.memory_space<vmem>>, %arg6: memref<3x256x512xbf16, #tpu.memory_space<vmem>>, %arg7: memref<1x256xf32, #tpu.memory_space<vmem>>, %arg8: memref<2x256x512xbf16, #tpu.memory_space<vmem>>, %arg9: memref<1x512xf32, #tpu.memory_space<vmem>>, %arg10: memref<512x128xbf16, #tpu.memory_space<vmem>>, %arg11: memref<1x128xf32, #tpu.memory_space<vmem>>, %arg12: memref<8x128xf32, #tpu.memory_space<vmem>>, %arg13: memref<18x8x48xbf16, #tpu.memory_space<vmem>>, %arg14: memref<10x8x256xbf16, #tpu.memory_space<vmem>>, %arg15: memref<6x8x256xbf16, #tpu.memory_space<vmem>>) attributes {dimension_semantics = [#tpu.dimension_semantics<parallel>], iteration_bounds = array<i64: 1>, scalar_prefetch = 0 : i64, scratch_operands = 3 : i64, tpu.core_type = #tpu.core_type<tc>, window_params = [{transform_indices = @transform_0, window_bounds = array<i64: 16, 8, 48>}, {pipeline_mode = #tpu.pipeline_mode<synchronous>, transform_indices = @transform_1, window_bounds = array<i64: 3, 48, 512>}, {pipeline_mode = #tpu.pipeline_mode<synchronous>, transform_indices = @transform_2, window_bounds = array<i64: 1, 256>}, {pipeline_mode = #tpu.pipeline_mode<synchronous>, transform_indices = @transform_3, window_bounds = array<i64: 3, 256, 512>}, {pipeline_mode = #tpu.pipeline_mode<synchronous>, transform_indices = @transform_4, window_bounds = array<i64: 1, 256>}, {pipeline_mode = #tpu.pipeline_mode<synchronous>, transform_indices = @transform_5, window_bounds = array<i64: 3, 256, 512>}, {pipeline_mode = #tpu.pipeline_mode<synchronous>, transform_indices = @transform_6, window_bounds = array<i64: 1, 256>}, {pipeline_mode = #tpu.pipeline_mode<synchronous>, transform_indices = @transform_7, window_bounds = array<i64: 2, 256, 512>}, {pipeline_mode = #tpu.pipeline_mode<synchronous>, transform_indices = @transform_8, window_bounds = array<i64: 1, 512>}, {pipeline_mode = #tpu.pipeline_mode<synchronous>, transform_indices = @transform_9, window_bounds = array<i64: 512, 128>}, {pipeline_mode = #tpu.pipeline_mode<synchronous>, transform_indices = @transform_10, window_bounds = array<i64: 1, 128>}, {transform_indices = @transform_11, window_bounds = array<i64: 8, 128>}]} {
    %c0 = arith.constant 0 : index
    %c0_0 = arith.constant 0 : index
    %c0_1 = arith.constant 0 : index
    %0 = vector.load %arg1[%c0, %c0_0, %c0_1] : memref<16x8x48xf32, #tpu.memory_space<vmem>>, vector<16x8x48xf32>
    %1 = arith.truncf %0 : vector<16x8x48xf32> to vector<16x8x48xbf16>
    %cst = arith.constant 0.000000e+00 : bf16
    %2 = vector.broadcast %cst : bf16 to vector<1x8x48xbf16>
    %c0_2 = arith.constant 0 : index
    %c0_3 = arith.constant 0 : index
    %c0_4 = arith.constant 0 : index
    %3 = vector.load %arg13[%c0_2, %c0_3, %c0_4] : memref<18x8x48xbf16, #tpu.memory_space<vmem>>, vector<1x8x48xbf16>
    tpu.vector_store %arg13[%c0_2, %c0_3, %c0_4], %2 {strides = array<i32>} : memref<18x8x48xbf16, #tpu.memory_space<vmem>>, vector<1x8x48xbf16>,
    %c17 = arith.constant 17 : index
    %c0_5 = arith.constant 0 : index
    %c0_6 = arith.constant 0 : index
    %4 = vector.load %arg13[%c17, %c0_5, %c0_6] : memref<18x8x48xbf16, #tpu.memory_space<vmem>>, vector<1x8x48xbf16>
    tpu.vector_store %arg13[%c17, %c0_5, %c0_6], %2 {strides = array<i32>} : memref<18x8x48xbf16, #tpu.memory_space<vmem>>, vector<1x8x48xbf16>,
    %c1 = arith.constant 1 : index
    %c0_7 = arith.constant 0 : index
    %c0_8 = arith.constant 0 : index
    %5 = vector.load %arg13[%c1, %c0_7, %c0_8] : memref<18x8x48xbf16, #tpu.memory_space<vmem>>, vector<16x8x48xbf16>
    tpu.vector_store %arg13[%c1, %c0_7, %c0_8], %1 {strides = array<i32>} : memref<18x8x48xbf16, #tpu.memory_space<vmem>>, vector<16x8x48xbf16>,
    %c0_9 = arith.constant 0 : index
    %c0_10 = arith.constant 0 : index
    %c0_11 = arith.constant 0 : index
    %6 = vector.load %arg13[%c0_9, %c0_10, %c0_11] : memref<18x8x48xbf16, #tpu.memory_space<vmem>>, vector<16x8x48xbf16>
    %7 = vector.shape_cast %6 : vector<16x8x48xbf16> to vector<128x48xbf16>
    %c0_12 = arith.constant 0 : index
    %c0_13 = arith.constant 0 : index
    %c0_14 = arith.constant 0 : index
    %8 = vector.load %arg2[%c0_12, %c0_13, %c0_14] : memref<3x48x512xbf16, #tpu.memory_space<vmem>>, vector<1x48x512xbf16>
    %9 = vector.shape_cast %8 : vector<1x48x512xbf16> to vector<48x512xbf16>
    %cst_15 = arith.constant dense<0.000000e+00> : vector<128x512xf32>
    %10 = tpu.matmul %7, %9, %cst_15 {dimension_numbers = #tpu.dot_dimension_numbers<[1], [0], [0], [1], [0, 0, 1, 1], [], []>} : vector<128x48xbf16>, vector<48x512xbf16>, vector<128x512xf32> -> vector<128x512xf32>
    %c1_16 = arith.constant 1 : index
    %c0_17 = arith.constant 0 : index
    %c0_18 = arith.constant 0 : index
    %11 = vector.load %arg13[%c1_16, %c0_17, %c0_18] : memref<18x8x48xbf16, #tpu.memory_space<vmem>>, vector<16x8x48xbf16>
    %12 = vector.shape_cast %11 : vector<16x8x48xbf16> to vector<128x48xbf16>
    %c1_19 = arith.constant 1 : index
    %c0_20 = arith.constant 0 : index
    %c0_21 = arith.constant 0 : index
    %13 = vector.load %arg2[%c1_19, %c0_20, %c0_21] : memref<3x48x512xbf16, #tpu.memory_space<vmem>>, vector<1x48x512xbf16>
    %14 = vector.shape_cast %13 : vector<1x48x512xbf16> to vector<48x512xbf16>
    %cst_22 = arith.constant dense<0.000000e+00> : vector<128x512xf32>
    %15 = tpu.matmul %12, %14, %cst_22 {dimension_numbers = #tpu.dot_dimension_numbers<[1], [0], [0], [1], [0, 0, 1, 1], [], []>} : vector<128x48xbf16>, vector<48x512xbf16>, vector<128x512xf32> -> vector<128x512xf32>
    %16 = arith.addf %10, %15 : vector<128x512xf32>
    %c2 = arith.constant 2 : index
    %c0_23 = arith.constant 0 : index
    %c0_24 = arith.constant 0 : index
    %17 = vector.load %arg13[%c2, %c0_23, %c0_24] : memref<18x8x48xbf16, #tpu.memory_space<vmem>>, vector<16x8x48xbf16>
    %18 = vector.shape_cast %17 : vector<16x8x48xbf16> to vector<128x48xbf16>
    %c2_25 = arith.constant 2 : index
    %c0_26 = arith.constant 0 : index
    %c0_27 = arith.constant 0 : index
    %19 = vector.load %arg2[%c2_25, %c0_26, %c0_27] : memref<3x48x512xbf16, #tpu.memory_space<vmem>>, vector<1x48x512xbf16>
    %20 = vector.shape_cast %19 : vector<1x48x512xbf16> to vector<48x512xbf16>
    %cst_28 = arith.constant dense<0.000000e+00> : vector<128x512xf32>
    %21 = tpu.matmul %18, %20, %cst_28 {dimension_numbers = #tpu.dot_dimension_numbers<[1], [0], [0], [1], [0, 0, 1, 1], [], []>} : vector<128x48xbf16>, vector<48x512xbf16>, vector<128x512xf32> -> vector<128x512xf32>
    %22 = arith.addf %16, %21 : vector<128x512xf32>
    %23 = vector.extract_strided_slice %22 {offsets = [0, 0], sizes = [128, 256], strides = [1, 1]} : vector<128x512xf32> to vector<128x256xf32>
    %24 = vector.extract_strided_slice %22 {offsets = [0, 256], sizes = [128, 256], strides = [1, 1]} : vector<128x512xf32> to vector<128x256xf32>
    %25 = arith.maximumf %23, %24 : vector<128x256xf32>
    %26 = vector.shape_cast %25 : vector<128x256xf32> to vector<8x2x8x256xf32>
    %27 = vector.extract_strided_slice %26 {offsets = [0, 0, 0, 0], sizes = [8, 1, 8, 256], strides = [1, 1, 1, 1]} : vector<8x2x8x256xf32> to vector<8x1x8x256xf32>
    %28 = vector.shape_cast %27 : vector<8x1x8x256xf32> to vector<8x8x256xf32>
    %29 = vector.extract_strided_slice %26 {offsets = [0, 1, 0, 0], sizes = [8, 1, 8, 256], strides = [1, 1, 1, 1]} : vector<8x2x8x256xf32> to vector<8x1x8x256xf32>
    %30 = vector.shape_cast %29 : vector<8x1x8x256xf32> to vector<8x8x256xf32>
    %31 = arith.maximumf %28, %30 : vector<8x8x256xf32>
    %c0_29 = arith.constant 0 : index
    %c0_30 = arith.constant 0 : index
    %32 = vector.load %arg3[%c0_29, %c0_30] : memref<1x256xf32, #tpu.memory_space<vmem>>, vector<1x256xf32>
    %33 = vector.shape_cast %32 : vector<1x256xf32> to vector<1x1x256xf32>
    %34 = vector.broadcast %33 : vector<1x1x256xf32> to vector<8x8x256xf32>
    %35 = arith.addf %31, %34 : vector<8x8x256xf32>
    %cst_31 = arith.constant 0.000000e+00 : f32
    %36 = vector.broadcast %cst_31 : f32 to vector<8x8x256xf32>
    %37 = arith.maximumf %35, %36 : vector<8x8x256xf32>
    %38 = arith.truncf %37 : vector<8x8x256xf32> to vector<8x8x256xbf16>
    %cst_32 = arith.constant 0.000000e+00 : bf16
    %39 = vector.broadcast %cst_32 : bf16 to vector<1x8x256xbf16>
    %c0_33 = arith.constant 0 : index
    %c0_34 = arith.constant 0 : index
    %c0_35 = arith.constant 0 : index
    %40 = vector.load %arg14[%c0_33, %c0_34, %c0_35] : memref<10x8x256xbf16, #tpu.memory_space<vmem>>, vector<1x8x256xbf16>
    tpu.vector_store %arg14[%c0_33, %c0_34, %c0_35], %39 {strides = array<i32>} : memref<10x8x256xbf16, #tpu.memory_space<vmem>>, vector<1x8x256xbf16>,
    %c9 = arith.constant 9 : index
    %c0_36 = arith.constant 0 : index
    %c0_37 = arith.constant 0 : index
    %41 = vector.load %arg14[%c9, %c0_36, %c0_37] : memref<10x8x256xbf16, #tpu.memory_space<vmem>>, vector<1x8x256xbf16>
    tpu.vector_store %arg14[%c9, %c0_36, %c0_37], %39 {strides = array<i32>} : memref<10x8x256xbf16, #tpu.memory_space<vmem>>, vector<1x8x256xbf16>,
    %c1_38 = arith.constant 1 : index
    %c0_39 = arith.constant 0 : index
    %c0_40 = arith.constant 0 : index
    %42 = vector.load %arg14[%c1_38, %c0_39, %c0_40] : memref<10x8x256xbf16, #tpu.memory_space<vmem>>, vector<8x8x256xbf16>
    tpu.vector_store %arg14[%c1_38, %c0_39, %c0_40], %38 {strides = array<i32>} : memref<10x8x256xbf16, #tpu.memory_space<vmem>>, vector<8x8x256xbf16>,
    %c0_41 = arith.constant 0 : index
    %c0_42 = arith.constant 0 : index
    %c0_43 = arith.constant 0 : index
    %43 = vector.load %arg14[%c0_41, %c0_42, %c0_43] : memref<10x8x256xbf16, #tpu.memory_space<vmem>>, vector<8x8x256xbf16>
    %44 = vector.shape_cast %43 : vector<8x8x256xbf16> to vector<64x256xbf16>
    %c0_44 = arith.constant 0 : index
    %c0_45 = arith.constant 0 : index
    %c0_46 = arith.constant 0 : index
    %45 = vector.load %arg4[%c0_44, %c0_45, %c0_46] : memref<3x256x512xbf16, #tpu.memory_space<vmem>>, vector<1x256x512xbf16>
    %46 = vector.shape_cast %45 : vector<1x256x512xbf16> to vector<256x512xbf16>
    %cst_47 = arith.constant dense<0.000000e+00> : vector<64x512xf32>
    %47 = tpu.matmul %44, %46, %cst_47 {dimension_numbers = #tpu.dot_dimension_numbers<[1], [0], [0], [1], [0, 0, 1, 1], [], []>} : vector<64x256xbf16>, vector<256x512xbf16>, vector<64x512xf32> -> vector<64x512xf32>
    %c1_48 = arith.constant 1 : index
    %c0_49 = arith.constant 0 : index
    %c0_50 = arith.constant 0 : index
    %48 = vector.load %arg14[%c1_48, %c0_49, %c0_50] : memref<10x8x256xbf16, #tpu.memory_space<vmem>>, vector<8x8x256xbf16>
    %49 = vector.shape_cast %48 : vector<8x8x256xbf16> to vector<64x256xbf16>
    %c1_51 = arith.constant 1 : index
    %c0_52 = arith.constant 0 : index
    %c0_53 = arith.constant 0 : index
    %50 = vector.load %arg4[%c1_51, %c0_52, %c0_53] : memref<3x256x512xbf16, #tpu.memory_space<vmem>>, vector<1x256x512xbf16>
    %51 = vector.shape_cast %50 : vector<1x256x512xbf16> to vector<256x512xbf16>
    %cst_54 = arith.constant dense<0.000000e+00> : vector<64x512xf32>
    %52 = tpu.matmul %49, %51, %cst_54 {dimension_numbers = #tpu.dot_dimension_numbers<[1], [0], [0], [1], [0, 0, 1, 1], [], []>} : vector<64x256xbf16>, vector<256x512xbf16>, vector<64x512xf32> -> vector<64x512xf32>
    %53 = arith.addf %47, %52 : vector<64x512xf32>
    %c2_55 = arith.constant 2 : index
    %c0_56 = arith.constant 0 : index
    %c0_57 = arith.constant 0 : index
    %54 = vector.load %arg14[%c2_55, %c0_56, %c0_57] : memref<10x8x256xbf16, #tpu.memory_space<vmem>>, vector<8x8x256xbf16>
    %55 = vector.shape_cast %54 : vector<8x8x256xbf16> to vector<64x256xbf16>
    %c2_58 = arith.constant 2 : index
    %c0_59 = arith.constant 0 : index
    %c0_60 = arith.constant 0 : index
    %56 = vector.load %arg4[%c2_58, %c0_59, %c0_60] : memref<3x256x512xbf16, #tpu.memory_space<vmem>>, vector<1x256x512xbf16>
    %57 = vector.shape_cast %56 : vector<1x256x512xbf16> to vector<256x512xbf16>
    %cst_61 = arith.constant dense<0.000000e+00> : vector<64x512xf32>
    %58 = tpu.matmul %55, %57, %cst_61 {dimension_numbers = #tpu.dot_dimension_numbers<[1], [0], [0], [1], [0, 0, 1, 1], [], []>} : vector<64x256xbf16>, vector<256x512xbf16>, vector<64x512xf32> -> vector<64x512xf32>
    %59 = arith.addf %53, %58 : vector<64x512xf32>
    %60 = vector.extract_strided_slice %59 {offsets = [0, 0], sizes = [64, 256], strides = [1, 1]} : vector<64x512xf32> to vector<64x256xf32>
    %61 = vector.extract_strided_slice %59 {offsets = [0, 256], sizes = [64, 256], strides = [1, 1]} : vector<64x512xf32> to vector<64x256xf32>
    %62 = arith.maximumf %60, %61 : vector<64x256xf32>
    %63 = vector.shape_cast %62 : vector<64x256xf32> to vector<4x2x8x256xf32>
    %64 = vector.extract_strided_slice %63 {offsets = [0, 0, 0, 0], sizes = [4, 1, 8, 256], strides = [1, 1, 1, 1]} : vector<4x2x8x256xf32> to vector<4x1x8x256xf32>
    %65 = vector.shape_cast %64 : vector<4x1x8x256xf32> to vector<4x8x256xf32>
    %66 = vector.extract_strided_slice %63 {offsets = [0, 1, 0, 0], sizes = [4, 1, 8, 256], strides = [1, 1, 1, 1]} : vector<4x2x8x256xf32> to vector<4x1x8x256xf32>
    %67 = vector.shape_cast %66 : vector<4x1x8x256xf32> to vector<4x8x256xf32>
    %68 = arith.maximumf %65, %67 : vector<4x8x256xf32>
    %c0_62 = arith.constant 0 : index
    %c0_63 = arith.constant 0 : index
    %69 = vector.load %arg5[%c0_62, %c0_63] : memref<1x256xf32, #tpu.memory_space<vmem>>, vector<1x256xf32>
    %70 = vector.shape_cast %69 : vector<1x256xf32> to vector<1x1x256xf32>
    %71 = vector.broadcast %70 : vector<1x1x256xf32> to vector<4x8x256xf32>
    %72 = arith.addf %68, %71 : vector<4x8x256xf32>
    %cst_64 = arith.constant 0.000000e+00 : f32
    %73 = vector.broadcast %cst_64 : f32 to vector<4x8x256xf32>
    %74 = arith.maximumf %72, %73 : vector<4x8x256xf32>
    %75 = arith.truncf %74 : vector<4x8x256xf32> to vector<4x8x256xbf16>
    %cst_65 = arith.constant 0.000000e+00 : bf16
    %76 = vector.broadcast %cst_65 : bf16 to vector<1x8x256xbf16>
    %c0_66 = arith.constant 0 : index
    %c0_67 = arith.constant 0 : index
    %c0_68 = arith.constant 0 : index
    %77 = vector.load %arg15[%c0_66, %c0_67, %c0_68] : memref<6x8x256xbf16, #tpu.memory_space<vmem>>, vector<1x8x256xbf16>
    tpu.vector_store %arg15[%c0_66, %c0_67, %c0_68], %76 {strides = array<i32>} : memref<6x8x256xbf16, #tpu.memory_space<vmem>>, vector<1x8x256xbf16>,
    %c5 = arith.constant 5 : index
    %c0_69 = arith.constant 0 : index
    %c0_70 = arith.constant 0 : index
    %78 = vector.load %arg15[%c5, %c0_69, %c0_70] : memref<6x8x256xbf16, #tpu.memory_space<vmem>>, vector<1x8x256xbf16>
    tpu.vector_store %arg15[%c5, %c0_69, %c0_70], %76 {strides = array<i32>} : memref<6x8x256xbf16, #tpu.memory_space<vmem>>, vector<1x8x256xbf16>,
    %c1_71 = arith.constant 1 : index
    %c0_72 = arith.constant 0 : index
    %c0_73 = arith.constant 0 : index
    %79 = vector.load %arg15[%c1_71, %c0_72, %c0_73] : memref<6x8x256xbf16, #tpu.memory_space<vmem>>, vector<4x8x256xbf16>
    tpu.vector_store %arg15[%c1_71, %c0_72, %c0_73], %75 {strides = array<i32>} : memref<6x8x256xbf16, #tpu.memory_space<vmem>>, vector<4x8x256xbf16>,
    %c0_74 = arith.constant 0 : index
    %c0_75 = arith.constant 0 : index
    %c0_76 = arith.constant 0 : index
    %80 = vector.load %arg15[%c0_74, %c0_75, %c0_76] : memref<6x8x256xbf16, #tpu.memory_space<vmem>>, vector<4x8x256xbf16>
    %81 = vector.shape_cast %80 : vector<4x8x256xbf16> to vector<32x256xbf16>
    %c0_77 = arith.constant 0 : index
    %c0_78 = arith.constant 0 : index
    %c0_79 = arith.constant 0 : index
    %82 = vector.load %arg6[%c0_77, %c0_78, %c0_79] : memref<3x256x512xbf16, #tpu.memory_space<vmem>>, vector<1x256x512xbf16>
    %83 = vector.shape_cast %82 : vector<1x256x512xbf16> to vector<256x512xbf16>
    %cst_80 = arith.constant dense<0.000000e+00> : vector<32x512xf32>
    %84 = tpu.matmul %81, %83, %cst_80 {dimension_numbers = #tpu.dot_dimension_numbers<[1], [0], [0], [1], [0, 0, 1, 1], [], []>} : vector<32x256xbf16>, vector<256x512xbf16>, vector<32x512xf32> -> vector<32x512xf32>
    %c1_81 = arith.constant 1 : index
    %c0_82 = arith.constant 0 : index
    %c0_83 = arith.constant 0 : index
    %85 = vector.load %arg15[%c1_81, %c0_82, %c0_83] : memref<6x8x256xbf16, #tpu.memory_space<vmem>>, vector<4x8x256xbf16>
    %86 = vector.shape_cast %85 : vector<4x8x256xbf16> to vector<32x256xbf16>
    %c1_84 = arith.constant 1 : index
    %c0_85 = arith.constant 0 : index
    %c0_86 = arith.constant 0 : index
    %87 = vector.load %arg6[%c1_84, %c0_85, %c0_86] : memref<3x256x512xbf16, #tpu.memory_space<vmem>>, vector<1x256x512xbf16>
    %88 = vector.shape_cast %87 : vector<1x256x512xbf16> to vector<256x512xbf16>
    %cst_87 = arith.constant dense<0.000000e+00> : vector<32x512xf32>
    %89 = tpu.matmul %86, %88, %cst_87 {dimension_numbers = #tpu.dot_dimension_numbers<[1], [0], [0], [1], [0, 0, 1, 1], [], []>} : vector<32x256xbf16>, vector<256x512xbf16>, vector<32x512xf32> -> vector<32x512xf32>
    %90 = arith.addf %84, %89 : vector<32x512xf32>
    %c2_88 = arith.constant 2 : index
    %c0_89 = arith.constant 0 : index
    %c0_90 = arith.constant 0 : index
    %91 = vector.load %arg15[%c2_88, %c0_89, %c0_90] : memref<6x8x256xbf16, #tpu.memory_space<vmem>>, vector<4x8x256xbf16>
    %92 = vector.shape_cast %91 : vector<4x8x256xbf16> to vector<32x256xbf16>
    %c2_91 = arith.constant 2 : index
    %c0_92 = arith.constant 0 : index
    %c0_93 = arith.constant 0 : index
    %93 = vector.load %arg6[%c2_91, %c0_92, %c0_93] : memref<3x256x512xbf16, #tpu.memory_space<vmem>>, vector<1x256x512xbf16>
    %94 = vector.shape_cast %93 : vector<1x256x512xbf16> to vector<256x512xbf16>
    %cst_94 = arith.constant dense<0.000000e+00> : vector<32x512xf32>
    %95 = tpu.matmul %92, %94, %cst_94 {dimension_numbers = #tpu.dot_dimension_numbers<[1], [0], [0], [1], [0, 0, 1, 1], [], []>} : vector<32x256xbf16>, vector<256x512xbf16>, vector<32x512xf32> -> vector<32x512xf32>
    %96 = arith.addf %90, %95 : vector<32x512xf32>
    %97 = vector.extract_strided_slice %96 {offsets = [0, 0], sizes = [32, 256], strides = [1, 1]} : vector<32x512xf32> to vector<32x256xf32>
    %98 = vector.extract_strided_slice %96 {offsets = [0, 256], sizes = [32, 256], strides = [1, 1]} : vector<32x512xf32> to vector<32x256xf32>
    %99 = arith.maximumf %97, %98 : vector<32x256xf32>
    %100 = vector.shape_cast %99 : vector<32x256xf32> to vector<2x2x8x256xf32>
    %101 = vector.extract_strided_slice %100 {offsets = [0, 0, 0, 0], sizes = [2, 1, 8, 256], strides = [1, 1, 1, 1]} : vector<2x2x8x256xf32> to vector<2x1x8x256xf32>
    %102 = vector.shape_cast %101 : vector<2x1x8x256xf32> to vector<2x8x256xf32>
    %103 = vector.extract_strided_slice %100 {offsets = [0, 1, 0, 0], sizes = [2, 1, 8, 256], strides = [1, 1, 1, 1]} : vector<2x2x8x256xf32> to vector<2x1x8x256xf32>
    %104 = vector.shape_cast %103 : vector<2x1x8x256xf32> to vector<2x8x256xf32>
    %105 = arith.maximumf %102, %104 : vector<2x8x256xf32>
    %c0_95 = arith.constant 0 : index
    %c0_96 = arith.constant 0 : index
    %106 = vector.load %arg7[%c0_95, %c0_96] : memref<1x256xf32, #tpu.memory_space<vmem>>, vector<1x256xf32>
    %107 = vector.shape_cast %106 : vector<1x256xf32> to vector<1x1x256xf32>
    %108 = vector.broadcast %107 : vector<1x1x256xf32> to vector<2x8x256xf32>
    %109 = arith.addf %105, %108 : vector<2x8x256xf32>
    %cst_97 = arith.constant 0.000000e+00 : f32
    %110 = vector.broadcast %cst_97 : f32 to vector<2x8x256xf32>
    %111 = arith.maximumf %109, %110 : vector<2x8x256xf32>
    %112 = vector.extract_strided_slice %111 {offsets = [0, 0, 0], sizes = [1, 8, 256], strides = [1, 1, 1]} : vector<2x8x256xf32> to vector<1x8x256xf32>
    %113 = vector.shape_cast %112 : vector<1x8x256xf32> to vector<8x256xf32>
    %114 = arith.truncf %113 : vector<8x256xf32> to vector<8x256xbf16>
    %c0_98 = arith.constant 0 : index
    %c0_99 = arith.constant 0 : index
    %c0_100 = arith.constant 0 : index
    %115 = vector.load %arg8[%c0_98, %c0_99, %c0_100] : memref<2x256x512xbf16, #tpu.memory_space<vmem>>, vector<1x256x512xbf16>
    %116 = vector.shape_cast %115 : vector<1x256x512xbf16> to vector<256x512xbf16>
    %cst_101 = arith.constant dense<0.000000e+00> : vector<8x512xf32>
    %117 = tpu.matmul %114, %116, %cst_101 {dimension_numbers = #tpu.dot_dimension_numbers<[1], [0], [0], [1], [0, 0, 1, 1], [], []>} : vector<8x256xbf16>, vector<256x512xbf16>, vector<8x512xf32> -> vector<8x512xf32>
    %118 = vector.extract_strided_slice %111 {offsets = [1, 0, 0], sizes = [1, 8, 256], strides = [1, 1, 1]} : vector<2x8x256xf32> to vector<1x8x256xf32>
    %119 = vector.shape_cast %118 : vector<1x8x256xf32> to vector<8x256xf32>
    %120 = arith.truncf %119 : vector<8x256xf32> to vector<8x256xbf16>
    %c1_102 = arith.constant 1 : index
    %c0_103 = arith.constant 0 : index
    %c0_104 = arith.constant 0 : index
    %121 = vector.load %arg8[%c1_102, %c0_103, %c0_104] : memref<2x256x512xbf16, #tpu.memory_space<vmem>>, vector<1x256x512xbf16>
    %122 = vector.shape_cast %121 : vector<1x256x512xbf16> to vector<256x512xbf16>
    %cst_105 = arith.constant dense<0.000000e+00> : vector<8x512xf32>
    %123 = tpu.matmul %120, %122, %cst_105 {dimension_numbers = #tpu.dot_dimension_numbers<[1], [0], [0], [1], [0, 0, 1, 1], [], []>} : vector<8x256xbf16>, vector<256x512xbf16>, vector<8x512xf32> -> vector<8x512xf32>
    %124 = arith.addf %117, %123 : vector<8x512xf32>
    %c0_106 = arith.constant 0 : index
    %c0_107 = arith.constant 0 : index
    %125 = vector.load %arg9[%c0_106, %c0_107] : memref<1x512xf32, #tpu.memory_space<vmem>>, vector<1x512xf32>
    %126 = vector.broadcast %125 : vector<1x512xf32> to vector<8x512xf32>
    %127 = arith.addf %124, %126 : vector<8x512xf32>
    %cst_108 = arith.constant 0.000000e+00 : f32
    %128 = vector.broadcast %cst_108 : f32 to vector<8x512xf32>
    %129 = arith.maximumf %127, %128 : vector<8x512xf32>
    %130 = arith.truncf %129 : vector<8x512xf32> to vector<8x512xbf16>
    %c0_109 = arith.constant 0 : index
    %c0_110 = arith.constant 0 : index
    %131 = vector.load %arg10[%c0_109, %c0_110] : memref<512x128xbf16, #tpu.memory_space<vmem>>, vector<512x128xbf16>
    %cst_111 = arith.constant dense<0.000000e+00> : vector<8x128xf32>
    %132 = tpu.matmul %130, %131, %cst_111 {dimension_numbers = #tpu.dot_dimension_numbers<[1], [0], [0], [1], [0, 0, 1, 1], [], []>} : vector<8x512xbf16>, vector<512x128xbf16>, vector<8x128xf32> -> vector<8x128xf32>
    %c0_112 = arith.constant 0 : index
    %c0_113 = arith.constant 0 : index
    %133 = vector.load %arg11[%c0_112, %c0_113] : memref<1x128xf32, #tpu.memory_space<vmem>>, vector<1x128xf32>
    %134 = vector.broadcast %133 : vector<1x128xf32> to vector<8x128xf32>
    %135 = arith.addf %132, %134 : vector<8x128xf32>
    %c0_114 = arith.constant 0 : index
    %c0_115 = arith.constant 0 : index
    %136 = vector.load %arg12[%c0_114, %c0_115] : memref<8x128xf32, #tpu.memory_space<vmem>>, vector<8x128xf32>
    tpu.vector_store %arg12[%c0_114, %c0_115], %135 {strides = array<i32>} : memref<8x128xf32, #tpu.memory_space<vmem>>, vector<8x128xf32>,
    return
  }
  func.func @transform_0(%arg0: i32) -> (i32, i32, i32) {
    %c0_i32 = arith.constant 0 : i32
    %c0_i32_0 = arith.constant 0 : i32
    %c0_i32_1 = arith.constant 0 : i32
    return %c0_i32, %arg0, %c0_i32_0 : i32, i32, i32
  }
  func.func @transform_1(%arg0: i32) -> (i32, i32, i32) {
    %c0_i32 = arith.constant 0 : i32
    %c0_i32_0 = arith.constant 0 : i32
    %c0_i32_1 = arith.constant 0 : i32
    %c0_i32_2 = arith.constant 0 : i32
    return %c0_i32, %c0_i32_0, %c0_i32_1 : i32, i32, i32
  }
  func.func @transform_2(%arg0: i32) -> (i32, i32) {
    %c0_i32 = arith.constant 0 : i32
    %c0_i32_0 = arith.constant 0 : i32
    %c0_i32_1 = arith.constant 0 : i32
    return %c0_i32, %c0_i32_0 : i32, i32
  }
  func.func @transform_3(%arg0: i32) -> (i32, i32, i32) {
    %c0_i32 = arith.constant 0 : i32
    %c0_i32_0 = arith.constant 0 : i32
    %c0_i32_1 = arith.constant 0 : i32
    %c0_i32_2 = arith.constant 0 : i32
    return %c0_i32, %c0_i32_0, %c0_i32_1 : i32, i32, i32
  }
  func.func @transform_4(%arg0: i32) -> (i32, i32) {
    %c0_i32 = arith.constant 0 : i32
    %c0_i32_0 = arith.constant 0 : i32
    %c0_i32_1 = arith.constant 0 : i32
    return %c0_i32, %c0_i32_0 : i32, i32
  }
  func.func @transform_5(%arg0: i32) -> (i32, i32, i32) {
    %c0_i32 = arith.constant 0 : i32
    %c0_i32_0 = arith.constant 0 : i32
    %c0_i32_1 = arith.constant 0 : i32
    %c0_i32_2 = arith.constant 0 : i32
    return %c0_i32, %c0_i32_0, %c0_i32_1 : i32, i32, i32
  }
  func.func @transform_6(%arg0: i32) -> (i32, i32) {
    %c0_i32 = arith.constant 0 : i32
    %c0_i32_0 = arith.constant 0 : i32
    %c0_i32_1 = arith.constant 0 : i32
    return %c0_i32, %c0_i32_0 : i32, i32
  }
  func.func @transform_7(%arg0: i32) -> (i32, i32, i32) {
    %c0_i32 = arith.constant 0 : i32
    %c0_i32_0 = arith.constant 0 : i32
    %c0_i32_1 = arith.constant 0 : i32
    %c0_i32_2 = arith.constant 0 : i32
    return %c0_i32, %c0_i32_0, %c0_i32_1 : i32, i32, i32
  }
  func.func @transform_8(%arg0: i32) -> (i32, i32) {
    %c0_i32 = arith.constant 0 : i32
    %c0_i32_0 = arith.constant 0 : i32
    %c0_i32_1 = arith.constant 0 : i32
    return %c0_i32, %c0_i32_0 : i32, i32
  }
  func.func @transform_9(%arg0: i32) -> (i32, i32) {
    %c0_i32 = arith.constant 0 : i32
    %c0_i32_0 = arith.constant 0 : i32
    %c0_i32_1 = arith.constant 0 : i32
    return %c0_i32, %c0_i32_0 : i32, i32
  }
  func.func @transform_10(%arg0: i32) -> (i32, i32) {
    %c0_i32 = arith.constant 0 : i32
    %c0_i32_0 = arith.constant 0 : i32
    %c0_i32_1 = arith.constant 0 : i32
    return %c0_i32, %c0_i32_0 : i32, i32
  }
  func.func @transform_11(%arg0: i32) -> (i32, i32) {
    %c0_i32 = arith.constant 0 : i32
    %c0_i32_0 = arith.constant 0 : i32
    return %arg0, %c0_i32 : i32, i32
  }
}

</mosaic_0001>

<llo_original>
// kernel: cnn_forward.1
$region0: #{cnn_forward.1}
  #allocation0 [shape = 'u32[]', space=smem, size = 0x4, offset = 0x4, fixed_abs, tag = 'smem constant byte address 0x4 - core index']
  #allocation1 [shape = 'u32[144,128]{1,0:T(1,128)}', space=vmem, size = 0x12000, scoped, tag = 'internal scratch']
  #allocation2 [shape = 'bf16[18,8,48]{2,1,0:T(8,128)(2,1)}', space=vmem, size = 0x9000, scoped, tag = 'scratch operand']
  #allocation3 [shape = 'bf16[10,8,256]{2,1,0:T(8,128)(2,1)}', space=vmem, size = 0xa000, scoped, tag = 'scratch operand']
  #allocation4 [shape = 'bf16[6,8,256]{2,1,0:T(8,128)(2,1)}', space=vmem, size = 0x6000, scoped, tag = 'scratch operand']
  %s0 = inlined_call_operand.vmem [shape: f32[16,8,48], index: 0, kind: input, shape index: {}]
  %s1 = inlined_call_operand.vmem [shape: bf16[3,48,512], index: 1, kind: input, shape index: {}]
  %s2 = inlined_call_operand.vmem [shape: f32[1,256], index: 2, kind: input, shape index: {}]
  %s3 = inlined_call_operand.hbm [shape: bf16[3,256,512], index: 3, kind: input, shape index: {}]
  %s4 = inlined_call_operand.vmem [shape: f32[1,256], index: 4, kind: input, shape index: {}]
  %s5 = inlined_call_operand.hbm [shape: bf16[3,256,512], index: 5, kind: input, shape index: {}]
  %s6 = inlined_call_operand.vmem [shape: f32[1,256], index: 6, kind: input, shape index: {}]
  %s7 = inlined_call_operand.hbm [shape: bf16[2,256,512], index: 7, kind: input, shape index: {}]
  %s8 = inlined_call_operand.vmem [shape: f32[1,512], index: 8, kind: input, shape index: {}]
  %s9 = inlined_call_operand.hbm [shape: bf16[512,128], index: 9, kind: input, shape index: {}]
  %s10 = inlined_call_operand.vmem [shape: f32[1,128], index: 10, kind: input, shape index: {}]
  %s11 = inlined_call_operand.vmem [shape: f32[8,128], index: 11, kind: output, shape index: {}]
  %s12 = sld [smem:[#allocation0]]
  $region70: #{cnn_forward.1} parent=0
    _
  %s14 = ssub.s32 1, %s12
  %s15 = scalar_select 0, %s14, %s12
  $region1: #{cnn_forward.1} parent=0
    #allocation5 [shape = 'u8[786432]{0}', space=vmem, size = 0xc0000, scoped, tag = 'input window, operand 3, single buffered']
    #allocation6 [shape = 's32[1]{0}', space=sflag, size = 0x4, scoped, tag = 'scoped memory for cnn_forward.1']
    #allocation7 [shape = 'u8[786432]{0}', space=vmem, size = 0xc0000, scoped, tag = 'input window, operand 5, single buffered']
    #allocation8 [shape = 's32[1]{0}', space=sflag, size = 0x4, scoped, tag = 'scoped memory for cnn_forward.1']
    #allocation9 [shape = 'u8[524288]{0}', space=vmem, size = 0x80000, scoped, tag = 'input window, operand 7, single buffered']
    #allocation10 [shape = 'u8[131072]{0}', space=vmem, size = 0x20000, scoped, tag = 'input window, operand 9, single buffered']
    #allocation11 [shape = 's32[1]{0}', space=sflag, size = 0x4, scoped, tag = 'scoped memory for cnn_forward.1']
    %16 = vsyncpa [#allocation6], 0
    %17 = vsyncpa [#allocation8], 0
    %18 = vsyncpa [#allocation11], 0
    // Predicated region
    $region2: #{cnn_forward.1} parent=1 // pred_check
      _
    $region3: #{cnn_forward.1} parent=1 // pred_check_branch
      %20 = sbr.rel (0) target = $region5
    $region4: #{cnn_forward.1} parent=1 // pred_region
      _
    $region5: #{cnn_forward.1} parent=1 // pred_fallthru
      _
    // Predicated region
    $region6: #{cnn_forward.1} parent=1 // pred_check
      _
    $region7: #{cnn_forward.1} parent=1 // pred_check_branch
      %22 = sbr.rel (0) target = $region9
    $region8: #{cnn_forward.1} parent=1 // pred_region
      _
    $region9: #{cnn_forward.1} parent=1 // pred_fallthru
      _
    // Predicated region
    $region10: #{cnn_forward.1} parent=1 // pred_check
      _
    $region11: #{cnn_forward.1} parent=1 // pred_check_branch
      %24 = sbr.rel (0) target = $region13
    $region12: #{cnn_forward.1} parent=1 // pred_region
      _
    $region13: #{cnn_forward.1} parent=1 // pred_fallthru
      _
    // Predicated region
    $region14: #{cnn_forward.1} parent=1 // pred_check
      _
    $region15: #{cnn_forward.1} parent=1 // pred_check_branch
      %26 = sbr.rel (0) target = $region17
    $region16: #{cnn_forward.1} parent=1 // pred_region
      %s28 = ssub.s32 24576, 24576
      %29 = vsyncadd [#allocation6], %s28
      %s30 = sshll.u32 [#allocation5], 4
      %s31 = int_to_ptr.vmem [resolvable:$true] %s30
      %36 = dma.hbm_to_vmem [thread:$0]  %s3, 24576, %s31, [#allocation6], 256, 256, 16
    $region17: #{cnn_forward.1} parent=1 // pred_fallthru
      _
    // Predicated region
    $region18: #{cnn_forward.1} parent=1 // pred_check
      _
    $region19: #{cnn_forward.1} parent=1 // pred_check_branch
      %38 = sbr.rel (0) target = $region21
    $region20: #{cnn_forward.1} parent=1 // pred_region
      _
    $region21: #{cnn_forward.1} parent=1 // pred_fallthru
      _
    // Predicated region
    $region22: #{cnn_forward.1} parent=1 // pred_check
      _
    $region23: #{cnn_forward.1} parent=1 // pred_check_branch
      %40 = sbr.rel (0) target = $region25
    $region24: #{cnn_forward.1} parent=1 // pred_region
      %s42 = ssub.s32 24576, 24576
      %43 = vsyncadd [#allocation8], %s42
      %s44 = sshll.u32 [#allocation7], 4
      %s45 = int_to_ptr.vmem [resolvable:$true] %s44
      %50 = dma.hbm_to_vmem [thread:$0]  %s5, 24576, %s45, [#allocation8], 256, 256, 16
    $region25: #{cnn_forward.1} parent=1 // pred_fallthru
      _
    // Predicated region
    $region26: #{cnn_forward.1} parent=1 // pred_check
      _
    $region27: #{cnn_forward.1} parent=1 // pred_check_branch
      %52 = sbr.rel (0) target = $region29
    $region28: #{cnn_forward.1} parent=1 // pred_region
      _
    $region29: #{cnn_forward.1} parent=1 // pred_fallthru
      _
    // Predicated region
    $region30: #{cnn_forward.1} parent=1 // pred_check
      _
    $region31: #{cnn_forward.1} parent=1 // pred_check_branch
      %54 = sbr.rel (0) target = $region33
    $region32: #{cnn_forward.1} parent=1 // pred_region
      %s56 = ssub.s32 16384, 16384
      %57 = vsyncadd [#allocation8], %s56
      %s58 = sshll.u32 [#allocation9], 4
      %s59 = int_to_ptr.vmem [resolvable:$true] %s58
      %64 = dma.hbm_to_vmem [thread:$0]  %s7, 16384, %s59, [#allocation8], 256, 256, 16
    $region33: #{cnn_forward.1} parent=1 // pred_fallthru
      _
    // Predicated region
    $region34: #{cnn_forward.1} parent=1 // pred_check
      _
    $region35: #{cnn_forward.1} parent=1 // pred_check_branch
      %66 = sbr.rel (0) target = $region37
    $region36: #{cnn_forward.1} parent=1 // pred_region
      _
    $region37: #{cnn_forward.1} parent=1 // pred_fallthru
      _
    // Predicated region
    $region38: #{cnn_forward.1} parent=1 // pred_check
      _
    $region39: #{cnn_forward.1} parent=1 // pred_check_branch
      %68 = sbr.rel (0) target = $region41
    $region40: #{cnn_forward.1} parent=1 // pred_region
      %s70 = ssub.s32 4096, 4096
      %71 = vsyncadd [#allocation11], %s70
      %s72 = sshll.u32 [#allocation10], 4
      %s73 = int_to_ptr.vmem [resolvable:$true] %s72
      %78 = dma.hbm_to_vmem [thread:$0]  %s9, 4096, %s73, [#allocation11], 64, 64, 4
    $region41: #{cnn_forward.1} parent=1 // pred_fallthru
      _
    // Predicated region
    $region42: #{cnn_forward.1} parent=1 // pred_check
      _
    $region43: #{cnn_forward.1} parent=1 // pred_check_branch
      %80 = sbr.rel (0) target = $region45
    $region44: #{cnn_forward.1} parent=1 // pred_region
      _
    $region45: #{cnn_forward.1} parent=1 // pred_fallthru
      _
    // Predicated region
    $region46: #{cnn_forward.1} parent=1 // pred_check
      _
    $region47: #{cnn_forward.1} parent=1 // pred_check_branch
      %82 = sbr.rel (0) target = $region49
    $region48: #{cnn_forward.1} parent=1 // pred_region
      %83 = dma.done [#allocation6], 24576
    $region49: #{cnn_forward.1} parent=1 // pred_fallthru
      _
    // Predicated region
    $region50: #{cnn_forward.1} parent=1 // pred_check
      _
    $region51: #{cnn_forward.1} parent=1 // pred_check_branch
      %85 = sbr.rel (0) target = $region53
    $region52: #{cnn_forward.1} parent=1 // pred_region
      %86 = dma.done [#allocation8], 24576
    $region53: #{cnn_forward.1} parent=1 // pred_fallthru
      _
    // Predicated region
    $region54: #{cnn_forward.1} parent=1 // pred_check
      _
    $region55: #{cnn_forward.1} parent=1 // pred_check_branch
      %88 = sbr.rel (0) target = $region57
    $region56: #{cnn_forward.1} parent=1 // pred_region
      %89 = dma.done [#allocation8], 16384
    $region57: #{cnn_forward.1} parent=1 // pred_fallthru
      _
    // Predicated region
    $region58: #{cnn_forward.1} parent=1 // pred_check
      _
    $region59: #{cnn_forward.1} parent=1 // pred_check_branch
      %91 = sbr.rel (0) target = $region61
    $region60: #{cnn_forward.1} parent=1 // pred_region
      %92 = dma.done [#allocation11], 4096
    $region61: #{cnn_forward.1} parent=1 // pred_fallthru
      _
    %v94 = vld [vmem:[%s0] sm:$0xff]
    %v95 = vld [vmem:[%s0 + $0x8] sm:$0xff]
    %v96 = vld [vmem:[%s0 + $0x10] sm:$0xff]
    %v97 = vld [vmem:[%s0 + $0x18] sm:$0xff]
    %v98 = vld [vmem:[%s0 + $0x20] sm:$0xff]
    %v99 = vld [vmem:[%s0 + $0x28] sm:$0xff]
    %v100 = vld [vmem:[%s0 + $0x30] sm:$0xff]
    %v101 = vld [vmem:[%s0 + $0x38] sm:$0xff]
    %v102 = vld [vmem:[%s0 + $0x40] sm:$0xff]
    %v103 = vld [vmem:[%s0 + $0x48] sm:$0xff]
    %v104 = vld [vmem:[%s0 + $0x50] sm:$0xff]
    %v105 = vld [vmem:[%s0 + $0x58] sm:$0xff]
    %v106 = vld [vmem:[%s0 + $0x60] sm:$0xff]
    %v107 = vld [vmem:[%s0 + $0x68] sm:$0xff]
    %v108 = vld [vmem:[%s0 + $0x70] sm:$0xff]
    %v109 = vld [vmem:[%s0 + $0x78] sm:$0xff]
    %v110 = vpack.c.bf16 %v94, %v94
    %v111 = vpack.c.bf16 %v95, %v95
    %v112 = vpack.c.bf16 %v96, %v96
    %v113 = vpack.c.bf16 %v97, %v97
    %v114 = vpack.c.bf16 %v98, %v98
    %v115 = vpack.c.bf16 %v99, %v99
    %v116 = vpack.c.bf16 %v100, %v100
    %v117 = vpack.c.bf16 %v101, %v101
    %v118 = vpack.c.bf16 %v102, %v102
    %v119 = vpack.c.bf16 %v103, %v103
    %v120 = vpack.c.bf16 %v104, %v104
    %v121 = vpack.c.bf16 %v105, %v105
    %v122 = vpack.c.bf16 %v106, %v106
    %v123 = vpack.c.bf16 %v107, %v107
    %v124 = vpack.c.bf16 %v108, %v108
    %v125 = vpack.c.bf16 %v109, %v109
    %vm126 = vcmask 388096
    %127 = vst.msk [vmem:[#allocation2] sm:$0xf] %vm126, 0
    %s128 = scalar_lea.vmem [#allocation2], 68
    %129 = vst.msk [vmem:[%s128] sm:$0xf] %vm126, 0
    %s130 = scalar_lea.vmem [#allocation2], 4
    %131 = vst.msk [vmem:[%s130] sm:$0xf] %vm126, %v110
    %132 = vst.msk [vmem:[%s130 + $0x4] sm:$0xf] %vm126, %v111
    %133 = vst.msk [vmem:[%s130 + $0x8] sm:$0xf] %vm126, %v112
    %134 = vst.msk [vmem:[%s130 + $0xc] sm:$0xf] %vm126, %v113
    %135 = vst.msk [vmem:[%s130 + $0x10] sm:$0xf] %vm126, %v114
    %136 = vst.msk [vmem:[%s130 + $0x14] sm:$0xf] %vm126, %v115
    %137 = vst.msk [vmem:[%s130 + $0x18] sm:$0xf] %vm126, %v116
    %138 = vst.msk [vmem:[%s130 + $0x1c] sm:$0xf] %vm126, %v117
    %139 = vst.msk [vmem:[%s130 + $0x20] sm:$0xf] %vm126, %v118
    %140 = vst.msk [vmem:[%s130 + $0x24] sm:$0xf] %vm126, %v119
    %141 = vst.msk [vmem:[%s130 + $0x28] sm:$0xf] %vm126, %v120
    %142 = vst.msk [vmem:[%s130 + $0x2c] sm:$0xf] %vm126, %v121
    %143 = vst.msk [vmem:[%s130 + $0x30] sm:$0xf] %vm126, %v122
    %144 = vst.msk [vmem:[%s130 + $0x34] sm:$0xf] %vm126, %v123
    %145 = vst.msk [vmem:[%s130 + $0x38] sm:$0xf] %vm126, %v124
    %146 = vst.msk [vmem:[%s130 + $0x3c] sm:$0xf] %vm126, %v125
    %v147 = vld [vmem:[#allocation2] sm:$0xf]
    %v148 = vld [vmem:[#allocation2 + $0x4] sm:$0xf]
    %v149 = vld [vmem:[#allocation2 + $0x8] sm:$0xf]
    %v150 = vld [vmem:[#allocation2 + $0xc] sm:$0xf]
    %v151 = vld [vmem:[#allocation2 + $0x10] sm:$0xf]
    %v152 = vld [vmem:[#allocation2 + $0x14] sm:$0xf]
    %v153 = vld [vmem:[#allocation2 + $0x18] sm:$0xf]
    %v154 = vld [vmem:[#allocation2 + $0x1c] sm:$0xf]
    %v155 = vld [vmem:[#allocation2 + $0x20] sm:$0xf]
    %v156 = vld [vmem:[#allocation2 + $0x24] sm:$0xf]
    %v157 = vld [vmem:[#allocation2 + $0x28] sm:$0xf]
    %v158 = vld [vmem:[#allocation2 + $0x2c] sm:$0xf]
    %v159 = vld [vmem:[#allocation2 + $0x30] sm:$0xf]
    %v160 = vld [vmem:[#allocation2 + $0x34] sm:$0xf]
    %v161 = vld [vmem:[#allocation2 + $0x38] sm:$0xf]
    %v162 = vld [vmem:[#allocation2 + $0x3c] sm:$0xf]
    %v163 = vld [vmem:[%s1] sm:$0xff]
    %v164 = vld [vmem:[%s1 + $0x8] sm:$0xff]
    %v165 = vld [vmem:[%s1 + $0x10] sm:$0xff]
    %v166 = vld [vmem:[%s1 + $0x18] sm:$0xff]
    %v167 = vld [vmem:[%s1 + $0x20] sm:$0xff]
    %v168 = vld [vmem:[%s1 + $0x28] sm:$0xff]
    %v169 = vld [vmem:[%s1 + $0x30] sm:$0xff]
    %v170 = vld [vmem:[%s1 + $0x38] sm:$0xff]
    %v171 = vld [vmem:[%s1 + $0x40] sm:$0xff]
    %v172 = vld [vmem:[%s1 + $0x48] sm:$0xff]
    %v173 = vld [vmem:[%s1 + $0x50] sm:$0xff]
    %v174 = vld [vmem:[%s1 + $0x58] sm:$0xff]
    %v175 = vld [vmem:[%s130] sm:$0xf]
    %v176 = vld [vmem:[%s130 + $0x4] sm:$0xf]
    %v177 = vld [vmem:[%s130 + $0x8] sm:$0xf]
    %v178 = vld [vmem:[%s130 + $0xc] sm:$0xf]
    %v179 = vld [vmem:[%s130 + $0x10] sm:$0xf]
    %v180 = vld [vmem:[%s130 + $0x14] sm:$0xf]
    %v181 = vld [vmem:[%s130 + $0x18] sm:$0xf]
    %v182 = vld [vmem:[%s130 + $0x1c] sm:$0xf]
    %v183 = vld [vmem:[%s130 + $0x20] sm:$0xf]
    %v184 = vld [vmem:[%s130 + $0x24] sm:$0xf]
    %v185 = vld [vmem:[%s130 + $0x28] sm:$0xf]
    %v186 = vld [vmem:[%s130 + $0x2c] sm:$0xf]
    %v187 = vld [vmem:[%s130 + $0x30] sm:$0xf]
    %v188 = vld [vmem:[%s130 + $0x34] sm:$0xf]
    %v189 = vld [vmem:[%s130 + $0x38] sm:$0xf]
    %v190 = vld [vmem:[%s130 + $0x3c] sm:$0xf]
    %s191 = scalar_lea.vmem %s1, 96
    %v192 = vld [vmem:[%s191] sm:$0xff]
    %v193 = vld [vmem:[%s191 + $0x8] sm:$0xff]
    %v194 = vld [vmem:[%s191 + $0x10] sm:$0xff]
    %v195 = vld [vmem:[%s191 + $0x18] sm:$0xff]
    %v196 = vld [vmem:[%s191 + $0x20] sm:$0xff]
    %v197 = vld [vmem:[%s191 + $0x28] sm:$0xff]
    %v198 = vld [vmem:[%s191 + $0x30] sm:$0xff]
    %v199 = vld [vmem:[%s191 + $0x38] sm:$0xff]
    %v200 = vld [vmem:[%s191 + $0x40] sm:$0xff]
    %v201 = vld [vmem:[%s191 + $0x48] sm:$0xff]
    %v202 = vld [vmem:[%s191 + $0x50] sm:$0xff]
    %v203 = vld [vmem:[%s191 + $0x58] sm:$0xff]
    %v220 = vunpack.c.l.b16 %v175
    %v221 = vunpack.c.l.b16 %v176
    %v222 = vunpack.c.l.b16 %v177
    %v223 = vunpack.c.l.b16 %v178
    %v224 = vunpack.c.l.b16 %v179
    %v225 = vunpack.c.l.b16 %v180
    %v226 = vunpack.c.l.b16 %v181
    %v227 = vunpack.c.l.b16 %v182
    %v228 = vunpack.c.l.b16 %v183
    %v229 = vunpack.c.l.b16 %v184
    %v230 = vunpack.c.l.b16 %v185
    %v231 = vunpack.c.l.b16 %v186
    %v232 = vunpack.c.l.b16 %v187
    %v233 = vunpack.c.l.b16 %v188
    %v234 = vunpack.c.l.b16 %v189
    %v235 = vunpack.c.l.b16 %v190
    %v236 = vpack.c.b16 %v221, %v220
    %v237 = vpack.c.b16 %v223, %v222
    %v238 = vpack.c.b16 %v225, %v224
    %v239 = vpack.c.b16 %v227, %v226
    %v240 = vpack.c.b16 %v229, %v228
    %v241 = vpack.c.b16 %v231, %v230
    %v242 = vpack.c.b16 %v233, %v232
    %v243 = vpack.c.b16 %v235, %v234
    %v256 = vunpack.c.l.b16 %v192
    %v257 = vunpack.c.h.b16 %v192
    %v258 = vunpack.c.l.b16 %v193
    %v259 = vunpack.c.h.b16 %v193
    %v260 = vunpack.c.l.b16 %v194
    %v261 = vunpack.c.h.b16 %v194
    %v262 = vunpack.c.l.b16 %v195
    %v263 = vunpack.c.h.b16 %v195
    %v264 = vunpack.c.l.b16 %v196
    %v265 = vunpack.c.h.b16 %v196
    %v266 = vunpack.c.l.b16 %v197
    %v267 = vunpack.c.h.b16 %v197
    %v268 = vunpack.c.l.b16 %v198
    %v269 = vunpack.c.h.b16 %v198
    %v270 = vunpack.c.l.b16 %v199
    %v271 = vunpack.c.h.b16 %v199
    %v272 = vunpack.c.l.b16 %v200
    %v273 = vunpack.c.h.b16 %v200
    %v274 = vunpack.c.l.b16 %v201
    %v275 = vunpack.c.h.b16 %v201
    %v276 = vunpack.c.l.b16 %v202
    %v277 = vunpack.c.h.b16 %v202
    %v278 = vunpack.c.l.b16 %v203
    %v279 = vunpack.c.h.b16 %v203
    %v280 = vpack.c.b16 %v260, %v256
    %v281 = vpack.c.b16 %v261, %v257
    %v282 = vpack.c.b16 %v262, %v258
    %v283 = vpack.c.b16 %v263, %v259
    %v284 = vpack.c.b16 %v268, %v264
    %v285 = vpack.c.b16 %v269, %v265
    %v286 = vpack.c.b16 %v270, %v266
    %v287 = vpack.c.b16 %v271, %v267
    %v288 = vpack.c.b16 %v276, %v272
    %v289 = vpack.c.b16 %v277, %v273
    %v290 = vpack.c.b16 %v278, %v274
    %v291 = vpack.c.b16 %v279, %v275
    %vm304 = vcmask 392192
    %v306 = vsel %vm304, %v236, 0
    %v309 = vsel %vm304, %v237, 0
    %v312 = vsel %vm304, %v238, 0
    %v315 = vsel %vm304, %v239, 0
    %v318 = vsel %vm304, %v240, 0
    %v321 = vsel %vm304, %v241, 0
    %v324 = vsel %vm304, %v242, 0
    %v327 = vsel %vm304, %v243, 0
    %329 = vmatprep.subr.bf16.mxu0 %v281
    %330 = vmatpush1.bf16.msra.mxu0 %v280
    %331 = vmatprep.subr.bf16.mxu0 %v285
    %332 = vmatpush1.bf16.msra.mxu0 %v284
    %333 = vmatprep.subr.bf16.mxu0 %v289
    %334 = vmatpush1.bf16.msra.mxu0 %v288
    %335 = vmatprep.subr.bf16.mxu0 0
    %336 = vmatpush1.bf16.msra.mxu0 0
    %337 = vmatprep.subr.bf16.mxu0 0
    %338 = vmatpush1.bf16.msra.mxu0 0
    %339 = vmatprep.subr.bf16.mxu0 0
    %340 = vmatpush1.bf16.msra.mxu0 0
    %341 = vmatprep.subr.bf16.mxu0 0
    %342 = vmatpush1.bf16.msra.mxu0 0
    %343 = vmatprep.subr.bf16.mxu0 0
    %344 = vmatpush1.bf16.msra.mxu0 0
    %345 = vmatprep.subr.bf16.mxu0 0
    %346 = vmatpush1.bf16.msra.mxu0 0
    %347 = vmatprep.subr.bf16.mxu0 0
    %348 = vmatpush1.bf16.msra.mxu0 0
    %349 = vmatprep.subr.bf16.mxu0 0
    %350 = vmatpush1.bf16.msra.mxu0 0
    %351 = vmatprep.subr.bf16.mxu0 0
    %352 = vmatpush1.bf16.msra.mxu0 0
    %353 = vmatprep.subr.bf16.mxu0 0
    %354 = vmatpush1.bf16.msra.mxu0 0
    %355 = vmatprep.subr.bf16.mxu0 0
    %356 = vmatpush1.bf16.msra.mxu0 0
    %357 = vmatprep.subr.bf16.mxu0 0
    %358 = vmatpush1.bf16.msra.mxu0 0
    %359 = vmatprep.subr.bf16.mxu0 0
    %360 = vmatpush1.bf16.msra.mxu0 0
    %361 = vmatprep.mubr.bf16.mxu0 0
    %362 = vmatmul.mubr.bf16.gmra.mrb[0].mxu0 %v306
    %v363 = vpop.f32.mrb[0].mxu0
    %v364 = vadd.f32 0.0, %v363
    %v365 = vpop.f32.mrb[0].mxu0
    %v366 = vadd.f32 0.0, %v365
    %v367 = vpop.f32.mrb[0].mxu0
    %v368 = vadd.f32 0.0, %v367
    %v369 = vpop.f32.mrb[0].mxu0
    %v370 = vadd.f32 0.0, %v369
    %371 = vmatprep.mubr.bf16.mxu0 0
    %372 = vmatmul.mubr.bf16.gmra.mrb[0].mxu0 %v309
    %v373 = vpop.f32.mrb[0].mxu0
    %v374 = vadd.f32 0.0, %v373
    %v375 = vpop.f32.mrb[0].mxu0
    %v376 = vadd.f32 0.0, %v375
    %v377 = vpop.f32.mrb[0].mxu0
    %v378 = vadd.f32 0.0, %v377
    %v379 = vpop.f32.mrb[0].mxu0
    %v380 = vadd.f32 0.0, %v379
    %381 = vmatprep.mubr.bf16.mxu0 0
    %382 = vmatmul.mubr.bf16.gmra.mrb[0].mxu0 %v312
    %v383 = vpop.f32.mrb[0].mxu0
    %v384 = vadd.f32 0.0, %v383
    %v385 = vpop.f32.mrb[0].mxu0
    %v386 = vadd.f32 0.0, %v385
    %v387 = vpop.f32.mrb[0].mxu0
    %v388 = vadd.f32 0.0, %v387
    %v389 = vpop.f32.mrb[0].mxu0
    %v390 = vadd.f32 0.0, %v389
    %391 = vmatprep.mubr.bf16.mxu0 0
    %392 = vmatmul.mubr.bf16.gmra.mrb[0].mxu0 %v315
    %v393 = vpop.f32.mrb[0].mxu0
    %v394 = vadd.f32 0.0, %v393
    %v395 = vpop.f32.mrb[0].mxu0
    %v396 = vadd.f32 0.0, %v395
    %v397 = vpop.f32.mrb[0].mxu0
    %v398 = vadd.f32 0.0, %v397
    %v399 = vpop.f32.mrb[0].mxu0
    %v400 = vadd.f32 0.0, %v399
    %401 = vmatprep.mubr.bf16.mxu0 0
    %402 = vmatmul.mubr.bf16.gmra.mrb[0].mxu0 %v318
    %v403 = vpop.f32.mrb[0].mxu0
    %v404 = vadd.f32 0.0, %v403
    %v405 = vpop.f32.mrb[0].mxu0
    %v406 = vadd.f32 0.0, %v405
    %v407 = vpop.f32.mrb[0].mxu0
    %v408 = vadd.f32 0.0, %v407
    %v409 = vpop.f32.mrb[0].mxu0
    %v410 = vadd.f32 0.0, %v409
    %411 = vmatprep.mubr.bf16.mxu0 0
    %412 = vmatmul.mubr.bf16.gmra.mrb[0].mxu0 %v321
    %v413 = vpop.f32.mrb[0].mxu0
    %v414 = vadd.f32 0.0, %v413
    %v415 = vpop.f32.mrb[0].mxu0
    %v416 = vadd.f32 0.0, %v415
    %v417 = vpop.f32.mrb[0].mxu0
    %v418 = vadd.f32 0.0, %v417
    %v419 = vpop.f32.mrb[0].mxu0
    %v420 = vadd.f32 0.0, %v419
    %421 = vmatprep.mubr.bf16.mxu0 0
    %422 = vmatmul.mubr.bf16.gmra.mrb[0].mxu0 %v324
    %v423 = vpop.f32.mrb[0].mxu0
    %v424 = vadd.f32 0.0, %v423
    %v425 = vpop.f32.mrb[0].mxu0
    %v426 = vadd.f32 0.0, %v425
    %v427 = vpop.f32.mrb[0].mxu0
    %v428 = vadd.f32 0.0, %v427
    %v429 = vpop.f32.mrb[0].mxu0
    %v430 = vadd.f32 0.0, %v429
    %431 = vmatprep.mubr.bf16.mxu0 0
    %432 = vmatmul.mubr.bf16.gmra.mrb[0].mxu0 %v327
    %v433 = vpop.f32.mrb[0].mxu0
    %v434 = vadd.f32 0.0, %v433
    %v435 = vpop.f32.mrb[0].mxu0
    %v436 = vadd.f32 0.0, %v435
    %v437 = vpop.f32.mrb[0].mxu0
    %v438 = vadd.f32 0.0, %v437
    %v439 = vpop.f32.mrb[0].mxu0
    %v440 = vadd.f32 0.0, %v439
    %441 = vdwg.mxu0
    %442 = vmatprep.subr.bf16.mxu0 %v283
    %443 = vmatpush1.bf16.msra.mxu0 %v282
    %444 = vmatprep.subr.bf16.mxu0 %v287
    %445 = vmatpush1.bf16.msra.mxu0 %v286
    %446 = vmatprep.subr.bf16.mxu0 %v291
    %447 = vmatpush1.bf16.msra.mxu0 %v290
    %448 = vmatprep.subr.bf16.mxu0 0
    %449 = vmatpush1.bf16.msra.mxu0 0
    %450 = vmatprep.subr.bf16.mxu0 0
    %451 = vmatpush1.bf16.msra.mxu0 0
    %452 = vmatprep.subr.bf16.mxu0 0
    %453 = vmatpush1.bf16.msra.mxu0 0
    %454 = vmatprep.subr.bf16.mxu0 0
    %455 = vmatpush1.bf16.msra.mxu0 0
    %456 = vmatprep.subr.bf16.mxu0 0
    %457 = vmatpush1.bf16.msra.mxu0 0
    %458 = vmatprep.subr.bf16.mxu0 0
    %459 = vmatpush1.bf16.msra.mxu0 0
    %460 = vmatprep.subr.bf16.mxu0 0
    %461 = vmatpush1.bf16.msra.mxu0 0
    %462 = vmatprep.subr.bf16.mxu0 0
    %463 = vmatpush1.bf16.msra.mxu0 0
    %464 = vmatprep.subr.bf16.mxu0 0
    %465 = vmatpush1.bf16.msra.mxu0 0
    %466 = vmatprep.subr.bf16.mxu0 0
    %467 = vmatpush1.bf16.msra.mxu0 0
    %468 = vmatprep.subr.bf16.mxu0 0
    %469 = vmatpush1.bf16.msra.mxu0 0
    %470 = vmatprep.subr.bf16.mxu0 0
    %471 = vmatpush1.bf16.msra.mxu0 0
    %472 = vmatprep.subr.bf16.mxu0 0
    %473 = vmatpush1.bf16.msra.mxu0 0
    %474 = vmatprep.mubr.bf16.mxu0 0
    %475 = vmatmul.mubr.bf16.gmra.mrb[0].mxu0 %v306
    %v476 = vpop.f32.mrb[0].mxu0
    %v477 = vadd.f32 0.0, %v476
    %v478 = vpop.f32.mrb[0].mxu0
    %v479 = vadd.f32 0.0, %v478
    %v480 = vpop.f32.mrb[0].mxu0
    %v481 = vadd.f32 0.0, %v480
    %v482 = vpop.f32.mrb[0].mxu0
    %v483 = vadd.f32 0.0, %v482
    %484 = vmatprep.mubr.bf16.mxu0 0
    %485 = vmatmul.mubr.bf16.gmra.mrb[0].mxu0 %v309
    %v486 = vpop.f32.mrb[0].mxu0
    %v487 = vadd.f32 0.0, %v486
    %v488 = vpop.f32.mrb[0].mxu0
    %v489 = vadd.f32 0.0, %v488
    %v490 = vpop.f32.mrb[0].mxu0
    %v491 = vadd.f32 0.0, %v490
    %v492 = vpop.f32.mrb[0].mxu0
    %v493 = vadd.f32 0.0, %v492
    %494 = vmatprep.mubr.bf16.mxu0 0
    %495 = vmatmul.mubr.bf16.gmra.mrb[0].mxu0 %v312
    %v496 = vpop.f32.mrb[0].mxu0
    %v497 = vadd.f32 0.0, %v496
    %v498 = vpop.f32.mrb[0].mxu0
    %v499 = vadd.f32 0.0, %v498
    %v500 = vpop.f32.mrb[0].mxu0
    %v501 = vadd.f32 0.0, %v500
    %v502 = vpop.f32.mrb[0].mxu0
    %v503 = vadd.f32 0.0, %v502
    %504 = vmatprep.mubr.bf16.mxu0 0
    %505 = vmatmul.mubr.bf16.gmra.mrb[0].mxu0 %v315
    %v506 = vpop.f32.mrb[0].mxu0
    %v507 = vadd.f32 0.0, %v506
    %v508 = vpop.f32.mrb[0].mxu0
    %v509 = vadd.f32 0.0, %v508
    %v510 = vpop.f32.mrb[0].mxu0
    %v511 = vadd.f32 0.0, %v510
    %v512 = vpop.f32.mrb[0].mxu0
    %v513 = vadd.f32 0.0, %v512
    %514 = vmatprep.mubr.bf16.mxu0 0
    %515 = vmatmul.mubr.bf16.gmra.mrb[0].mxu0 %v318
    %v516 = vpop.f32.mrb[0].mxu0
    %v517 = vadd.f32 0.0, %v516
    %v518 = vpop.f32.mrb[0].mxu0
    %v519 = vadd.f32 0.0, %v518
    %v520 = vpop.f32.mrb[0].mxu0
    %v521 = vadd.f32 0.0, %v520
    %v522 = vpop.f32.mrb[0].mxu0
    %v523 = vadd.f32 0.0, %v522
    %524 = vmatprep.mubr.bf16.mxu0 0
    %525 = vmatmul.mubr.bf16.gmra.mrb[0].mxu0 %v321
    %v526 = vpop.f32.mrb[0].mxu0
    %v527 = vadd.f32 0.0, %v526
    %v528 = vpop.f32.mrb[0].mxu0
    %v529 = vadd.f32 0.0, %v528
    %v530 = vpop.f32.mrb[0].mxu0
    %v531 = vadd.f32 0.0, %v530
    %v532 = vpop.f32.mrb[0].mxu0
    %v533 = vadd.f32 0.0, %v532
    %534 = vmatprep.mubr.bf16.mxu0 0
    %535 = vmatmul.mubr.bf16.gmra.mrb[0].mxu0 %v324
    %v536 = vpop.f32.mrb[0].mxu0
    %v537 = vadd.f32 0.0, %v536
    %v538 = vpop.f32.mrb[0].mxu0
    %v539 = vadd.f32 0.0, %v538
    %v540 = vpop.f32.mrb[0].mxu0
    %v541 = vadd.f32 0.0, %v540
    %v542 = vpop.f32.mrb[0].mxu0
    %v543 = vadd.f32 0.0, %v542
    %544 = vmatprep.mubr.bf16.mxu0 0
    %545 = vmatmul.mubr.bf16.gmra.mrb[0].mxu0 %v327
    %v546 = vpop.f32.mrb[0].mxu0
    %v547 = vadd.f32 0.0, %v546
    %v548 = vpop.f32.mrb[0].mxu0
    %v549 = vadd.f32 0.0, %v548
    %v550 = vpop.f32.mrb[0].mxu0
    %v551 = vadd.f32 0.0, %v550
    %v552 = vpop.f32.mrb[0].mxu0
    %v553 = vadd.f32 0.0, %v552
    %554 = vdwg.mxu0
    %v571 = vunpack.c.l.b16 %v147
    %v572 = vunpack.c.l.b16 %v148
    %v573 = vunpack.c.l.b16 %v149
    %v574 = vunpack.c.l.b16 %v150
    %v575 = vunpack.c.l.b16 %v151
    %v576 = vunpack.c.l.b16 %v152
    %v577 = vunpack.c.l.b16 %v153
    %v578 = vunpack.c.l.b16 %v154
    %v579 = vunpack.c.l.b16 %v155
    %v580 = vunpack.c.l.b16 %v156
    %v581 = vunpack.c.l.b16 %v157
    %v582 = vunpack.c.l.b16 %v158
    %v583 = vunpack.c.l.b16 %v159
    %v584 = vunpack.c.l.b16 %v160
    %v585 = vunpack.c.l.b16 %v161
    %v586 = vunpack.c.l.b16 %v162
    %v587 = vpack.c.b16 %v572, %v571
    %v588 = vpack.c.b16 %v574, %v573
    %v589 = vpack.c.b16 %v576, %v575
    %v590 = vpack.c.b16 %v578, %v577
    %v591 = vpack.c.b16 %v580, %v579
    %v592 = vpack.c.b16 %v582, %v581
    %v593 = vpack.c.b16 %v584, %v583
    %v594 = vpack.c.b16 %v586, %v585
    %v607 = vunpack.c.l.b16 %v163
    %v608 = vunpack.c.h.b16 %v163
    %v609 = vunpack.c.l.b16 %v164
    %v610 = vunpack.c.h.b16 %v164
    %v611 = vunpack.c.l.b16 %v165
    %v612 = vunpack.c.h.b16 %v165
    %v613 = vunpack.c.l.b16 %v166
    %v614 = vunpack.c.h.b16 %v166
    %v615 = vunpack.c.l.b16 %v167
    %v616 = vunpack.c.h.b16 %v167
    %v617 = vunpack.c.l.b16 %v168
    %v618 = vunpack.c.h.b16 %v168
    %v619 = vunpack.c.l.b16 %v169
    %v620 = vunpack.c.h.b16 %v169
    %v621 = vunpack.c.l.b16 %v170
    %v622 = vunpack.c.h.b16 %v170
    %v623 = vunpack.c.l.b16 %v171
    %v624 = vunpack.c.h.b16 %v171
    %v625 = vunpack.c.l.b16 %v172
    %v626 = vunpack.c.h.b16 %v172
    %v627 = vunpack.c.l.b16 %v173
    %v628 = vunpack.c.h.b16 %v173
    %v629 = vunpack.c.l.b16 %v174
    %v630 = vunpack.c.h.b16 %v174
    %v631 = vpack.c.b16 %v611, %v607
    %v632 = vpack.c.b16 %v612, %v608
    %v633 = vpack.c.b16 %v613, %v609
    %v634 = vpack.c.b16 %v614, %v610
    %v635 = vpack.c.b16 %v619, %v615
    %v636 = vpack.c.b16 %v620, %v616
    %v637 = vpack.c.b16 %v621, %v617
    %v638 = vpack.c.b16 %v622, %v618
    %v639 = vpack.c.b16 %v627, %v623
    %v640 = vpack.c.b16 %v628, %v624
    %v641 = vpack.c.b16 %v629, %v625
    %v642 = vpack.c.b16 %v630, %v626
    %v656 = vsel %vm304, %v587, 0
    %v659 = vsel %vm304, %v588, 0
    %v662 = vsel %vm304, %v589, 0
    %v665 = vsel %vm304, %v590, 0
    %v668 = vsel %vm304, %v591, 0
    %v671 = vsel %vm304, %v592, 0
    %v674 = vsel %vm304, %v593, 0
    %v677 = vsel %vm304, %v594, 0
    %679 = vmatprep.subr.bf16.mxu0 %v632
    %680 = vmatpush1.bf16.msra.mxu0 %v631
    %681 = vmatprep.subr.bf16.mxu0 %v636
    %682 = vmatpush1.bf16.msra.mxu0 %v635
    %683 = vmatprep.subr.bf16.mxu0 %v640
    %684 = vmatpush1.bf16.msra.mxu0 %v639
    %685 = vmatprep.subr.bf16.mxu0 0
    %686 = vmatpush1.bf16.msra.mxu0 0
    %687 = vmatprep.subr.bf16.mxu0 0
    %688 = vmatpush1.bf16.msra.mxu0 0
    %689 = vmatprep.subr.bf16.mxu0 0
    %690 = vmatpush1.bf16.msra.mxu0 0
    %691 = vmatprep.subr.bf16.mxu0 0
    %692 = vmatpush1.bf16.msra.mxu0 0
    %693 = vmatprep.subr.bf16.mxu0 0
    %694 = vmatpush1.bf16.msra.mxu0 0
    %695 = vmatprep.subr.bf16.mxu0 0
    %696 = vmatpush1.bf16.msra.mxu0 0
    %697 = vmatprep.subr.bf16.mxu0 0
    %698 = vmatpush1.bf16.msra.mxu0 0
    %699 = vmatprep.subr.bf16.mxu0 0
    %700 = vmatpush1.bf16.msra.mxu0 0
    %701 = vmatprep.subr.bf16.mxu0 0
    %702 = vmatpush1.bf16.msra.mxu0 0
    %703 = vmatprep.subr.bf16.mxu0 0
    %704 = vmatpush1.bf16.msra.mxu0 0
    %705 = vmatprep.subr.bf16.mxu0 0
    %706 = vmatpush1.bf16.msra.mxu0 0
    %707 = vmatprep.subr.bf16.mxu0 0
    %708 = vmatpush1.bf16.msra.mxu0 0
    %709 = vmatprep.subr.bf16.mxu0 0
    %710 = vmatpush1.bf16.msra.mxu0 0
    %711 = vmatprep.mubr.bf16.mxu0 0
    %712 = vmatmul.mubr.bf16.gmra.mrb[0].mxu0 %v656
    %v713 = vpop.f32.mrb[0].mxu0
    %v714 = vadd.f32 %v364, %v713
    %v715 = vpop.f32.mrb[0].mxu0
    %v716 = vadd.f32 %v366, %v715
    %v717 = vpop.f32.mrb[0].mxu0
    %v718 = vadd.f32 %v368, %v717
    %v719 = vpop.f32.mrb[0].mxu0
    %v720 = vadd.f32 %v370, %v719
    %721 = vmatprep.mubr.bf16.mxu0 0
    %722 = vmatmul.mubr.bf16.gmra.mrb[0].mxu0 %v659
    %v723 = vpop.f32.mrb[0].mxu0
    %v724 = vadd.f32 %v374, %v723
    %v725 = vpop.f32.mrb[0].mxu0
    %v726 = vadd.f32 %v376, %v725
    %v727 = vpop.f32.mrb[0].mxu0
    %v728 = vadd.f32 %v378, %v727
    %v729 = vpop.f32.mrb[0].mxu0
    %v730 = vadd.f32 %v380, %v729
    %731 = vmatprep.mubr.bf16.mxu0 0
    %732 = vmatmul.mubr.bf16.gmra.mrb[0].mxu0 %v662
    %v733 = vpop.f32.mrb[0].mxu0
    %v734 = vadd.f32 %v384, %v733
    %v735 = vpop.f32.mrb[0].mxu0
    %v736 = vadd.f32 %v386, %v735
    %v737 = vpop.f32.mrb[0].mxu0
    %v738 = vadd.f32 %v388, %v737
    %v739 = vpop.f32.mrb[0].mxu0
    %v740 = vadd.f32 %v390, %v739
    %741 = vmatprep.mubr.bf16.mxu0 0
    %742 = vmatmul.mubr.bf16.gmra.mrb[0].mxu0 %v665
    %v743 = vpop.f32.mrb[0].mxu0
    %v744 = vadd.f32 %v394, %v743
    %v745 = vpop.f32.mrb[0].mxu0
    %v746 = vadd.f32 %v396, %v745
    %v747 = vpop.f32.mrb[0].mxu0
    %v748 = vadd.f32 %v398, %v747
    %v749 = vpop.f32.mrb[0].mxu0
    %v750 = vadd.f32 %v400, %v749
    %751 = vmatprep.mubr.bf16.mxu0 0
    %752 = vmatmul.mubr.bf16.gmra.mrb[0].mxu0 %v668
    %v753 = vpop.f32.mrb[0].mxu0
    %v754 = vadd.f32 %v404, %v753
    %v755 = vpop.f32.mrb[0].mxu0
    %v756 = vadd.f32 %v406, %v755
    %v757 = vpop.f32.mrb[0].mxu0
    %v758 = vadd.f32 %v408, %v757
    %v759 = vpop.f32.mrb[0].mxu0
    %v760 = vadd.f32 %v410, %v759
    %761 = vmatprep.mubr.bf16.mxu0 0
    %762 = vmatmul.mubr.bf16.gmra.mrb[0].mxu0 %v671
    %v763 = vpop.f32.mrb[0].mxu0
    %v764 = vadd.f32 %v414, %v763
    %v765 = vpop.f32.mrb[0].mxu0
    %v766 = vadd.f32 %v416, %v765
    %v767 = vpop.f32.mrb[0].mxu0
    %v768 = vadd.f32 %v418, %v767
    %v769 = vpop.f32.mrb[0].mxu0
    %v770 = vadd.f32 %v420, %v769
    %771 = vmatprep.mubr.bf16.mxu0 0
    %772 = vmatmul.mubr.bf16.gmra.mrb[0].mxu0 %v674
    %v773 = vpop.f32.mrb[0].mxu0
    %v774 = vadd.f32 %v424, %v773
    %v775 = vpop.f32.mrb[0].mxu0
    %v776 = vadd.f32 %v426, %v775
    %v777 = vpop.f32.mrb[0].mxu0
    %v778 = vadd.f32 %v428, %v777
    %v779 = vpop.f32.mrb[0].mxu0
    %v780 = vadd.f32 %v430, %v779
    %781 = vmatprep.mubr.bf16.mxu0 0
    %782 = vmatmul.mubr.bf16.gmra.mrb[0].mxu0 %v677
    %v783 = vpop.f32.mrb[0].mxu0
    %v784 = vadd.f32 %v434, %v783
    %v785 = vpop.f32.mrb[0].mxu0
    %v786 = vadd.f32 %v436, %v785
    %v787 = vpop.f32.mrb[0].mxu0
    %v788 = vadd.f32 %v438, %v787
    %v789 = vpop.f32.mrb[0].mxu0
    %v790 = vadd.f32 %v440, %v789
    %791 = vdwg.mxu0
    %792 = vmatprep.subr.bf16.mxu0 %v634
    %793 = vmatpush1.bf16.msra.mxu0 %v633
    %794 = vmatprep.subr.bf16.mxu0 %v638
    %795 = vmatpush1.bf16.msra.mxu0 %v637
    %796 = vmatprep.subr.bf16.mxu0 %v642
    %797 = vmatpush1.bf16.msra.mxu0 %v641
    %798 = vmatprep.subr.bf16.mxu0 0
    %799 = vmatpush1.bf16.msra.mxu0 0
    %800 = vmatprep.subr.bf16.mxu0 0
    %801 = vmatpush1.bf16.msra.mxu0 0
    %802 = vmatprep.subr.bf16.mxu0 0
    %803 = vmatpush1.bf16.msra.mxu0 0
    %804 = vmatprep.subr.bf16.mxu0 0
    %805 = vmatpush1.bf16.msra.mxu0 0
    %806 = vmatprep.subr.bf16.mxu0 0
    %807 = vmatpush1.bf16.msra.mxu0 0
    %808 = vmatprep.subr.bf16.mxu0 0
    %809 = vmatpush1.bf16.msra.mxu0 0
    %810 = vmatprep.subr.bf16.mxu0 0
    %811 = vmatpush1.bf16.msra.mxu0 0
    %812 = vmatprep.subr.bf16.mxu0 0
    %813 = vmatpush1.bf16.msra.mxu0 0
    %814 = vmatprep.subr.bf16.mxu0 0
    %815 = vmatpush1.bf16.msra.mxu0 0
    %816 = vmatprep.subr.bf16.mxu0 0
    %817 = vmatpush1.bf16.msra.mxu0 0
    %818 = vmatprep.subr.bf16.mxu0 0
    %819 = vmatpush1.bf16.msra.mxu0 0
    %820 = vmatprep.subr.bf16.mxu0 0
    %821 = vmatpush1.bf16.msra.mxu0 0
    %822 = vmatprep.subr.bf16.mxu0 0
    %823 = vmatpush1.bf16.msra.mxu0 0
    %824 = vmatprep.mubr.bf16.mxu0 0
    %825 = vmatmul.mubr.bf16.gmra.mrb[0].mxu0 %v656
    %v826 = vpop.f32.mrb[0].mxu0
    %v827 = vadd.f32 %v477, %v826
    %v828 = vpop.f32.mrb[0].mxu0
    %v829 = vadd.f32 %v479, %v828
    %v830 = vpop.f32.mrb[0].mxu0
    %v831 = vadd.f32 %v481, %v830
    %v832 = vpop.f32.mrb[0].mxu0
    %v833 = vadd.f32 %v483, %v832
    %834 = vmatprep.mubr.bf16.mxu0 0
    %835 = vmatmul.mubr.bf16.gmra.mrb[0].mxu0 %v659
    %v836 = vpop.f32.mrb[0].mxu0
    %v837 = vadd.f32 %v487, %v836
    %v838 = vpop.f32.mrb[0].mxu0
    %v839 = vadd.f32 %v489, %v838
    %v840 = vpop.f32.mrb[0].mxu0
    %v841 = vadd.f32 %v491, %v840
    %v842 = vpop.f32.mrb[0].mxu0
    %v843 = vadd.f32 %v493, %v842
    %844 = vmatprep.mubr.bf16.mxu0 0
    %845 = vmatmul.mubr.bf16.gmra.mrb[0].mxu0 %v662
    %v846 = vpop.f32.mrb[0].mxu0
    %v847 = vadd.f32 %v497, %v846
    %v848 = vpop.f32.mrb[0].mxu0
    %v849 = vadd.f32 %v499, %v848
    %v850 = vpop.f32.mrb[0].mxu0
    %v851 = vadd.f32 %v501, %v850
    %v852 = vpop.f32.mrb[0].mxu0
    %v853 = vadd.f32 %v503, %v852
    %854 = vmatprep.mubr.bf16.mxu0 0
    %855 = vmatmul.mubr.bf16.gmra.mrb[0].mxu0 %v665
    %v856 = vpop.f32.mrb[0].mxu0
    %v857 = vadd.f32 %v507, %v856
    %v858 = vpop.f32.mrb[0].mxu0
    %v859 = vadd.f32 %v509, %v858
    %v860 = vpop.f32.mrb[0].mxu0
    %v861 = vadd.f32 %v511, %v860
    %v862 = vpop.f32.mrb[0].mxu0
    %v863 = vadd.f32 %v513, %v862
    %864 = vmatprep.mubr.bf16.mxu0 0
    %865 = vmatmul.mubr.bf16.gmra.mrb[0].mxu0 %v668
    %v866 = vpop.f32.mrb[0].mxu0
    %v867 = vadd.f32 %v517, %v866
    %v868 = vpop.f32.mrb[0].mxu0
    %v869 = vadd.f32 %v519, %v868
    %v870 = vpop.f32.mrb[0].mxu0
    %v871 = vadd.f32 %v521, %v870
    %v872 = vpop.f32.mrb[0].mxu0
    %v873 = vadd.f32 %v523, %v872
    %874 = vmatprep.mubr.bf16.mxu0 0
    %875 = vmatmul.mubr.bf16.gmra.mrb[0].mxu0 %v671
    %v876 = vpop.f32.mrb[0].mxu0
    %v877 = vadd.f32 %v527, %v876
    %v878 = vpop.f32.mrb[0].mxu0
    %v879 = vadd.f32 %v529, %v878
    %v880 = vpop.f32.mrb[0].mxu0
    %v881 = vadd.f32 %v531, %v880
    %v882 = vpop.f32.mrb[0].mxu0
    %v883 = vadd.f32 %v533, %v882
    %884 = vmatprep.mubr.bf16.mxu0 0
    %885 = vmatmul.mubr.bf16.gmra.mrb[0].mxu0 %v674
    %v886 = vpop.f32.mrb[0].mxu0
    %v887 = vadd.f32 %v537, %v886
    %v888 = vpop.f32.mrb[0].mxu0
    %v889 = vadd.f32 %v539, %v888
    %v890 = vpop.f32.mrb[0].mxu0
    %v891 = vadd.f32 %v541, %v890
    %v892 = vpop.f32.mrb[0].mxu0
    %v893 = vadd.f32 %v543, %v892
    %894 = vmatprep.mubr.bf16.mxu0 0
    %895 = vmatmul.mubr.bf16.gmra.mrb[0].mxu0 %v677
    %v896 = vpop.f32.mrb[0].mxu0
    %v897 = vadd.f32 %v547, %v896
    %v898 = vpop.f32.mrb[0].mxu0
    %v899 = vadd.f32 %v549, %v898
    %v900 = vpop.f32.mrb[0].mxu0
    %v901 = vadd.f32 %v551, %v900
    %v902 = vpop.f32.mrb[0].mxu0
    %v903 = vadd.f32 %v553, %v902
    %904 = vdwg.mxu0
    %s905 = scalar_lea.vmem [#allocation2], 8
    %v906 = vld [vmem:[%s905] sm:$0xf]
    %v907 = vld [vmem:[%s905 + $0x4] sm:$0xf]
    %v908 = vld [vmem:[%s905 + $0x8] sm:$0xf]
    %v909 = vld [vmem:[%s905 + $0xc] sm:$0xf]
    %v910 = vld [vmem:[%s905 + $0x10] sm:$0xf]
    %v911 = vld [vmem:[%s905 + $0x14] sm:$0xf]
    %v912 = vld [vmem:[%s905 + $0x18] sm:$0xf]
    %v913 = vld [vmem:[%s905 + $0x1c] sm:$0xf]
    %v914 = vld [vmem:[%s905 + $0x20] sm:$0xf]
    %v915 = vld [vmem:[%s905 + $0x24] sm:$0xf]
    %v916 = vld [vmem:[%s905 + $0x28] sm:$0xf]
    %v917 = vld [vmem:[%s905 + $0x2c] sm:$0xf]
    %v918 = vld [vmem:[%s905 + $0x30] sm:$0xf]
    %v919 = vld [vmem:[%s905 + $0x34] sm:$0xf]
    %v920 = vld [vmem:[%s905 + $0x38] sm:$0xf]
    %v921 = vld [vmem:[%s905 + $0x3c] sm:$0xf]
    %s922 = scalar_lea.vmem %s1, 192
    %v923 = vld [vmem:[%s922] sm:$0xff]
    %v924 = vld [vmem:[%s922 + $0x8] sm:$0xff]
    %v925 = vld [vmem:[%s922 + $0x10] sm:$0xff]
    %v926 = vld [vmem:[%s922 + $0x18] sm:$0xff]
    %v927 = vld [vmem:[%s922 + $0x20] sm:$0xff]
    %v928 = vld [vmem:[%s922 + $0x28] sm:$0xff]
    %v929 = vld [vmem:[%s922 + $0x30] sm:$0xff]
    %v930 = vld [vmem:[%s922 + $0x38] sm:$0xff]
    %v931 = vld [vmem:[%s922 + $0x40] sm:$0xff]
    %v932 = vld [vmem:[%s922 + $0x48] sm:$0xff]
    %v933 = vld [vmem:[%s922 + $0x50] sm:$0xff]
    %v934 = vld [vmem:[%s922 + $0x58] sm:$0xff]
    %v951 = vunpack.c.l.b16 %v906
    %v952 = vunpack.c.l.b16 %v907
    %v953 = vunpack.c.l.b16 %v908
    %v954 = vunpack.c.l.b16 %v909
    %v955 = vunpack.c.l.b16 %v910
    %v956 = vunpack.c.l.b16 %v911
    %v957 = vunpack.c.l.b16 %v912
    %v958 = vunpack.c.l.b16 %v913
    %v959 = vunpack.c.l.b16 %v914
    %v960 = vunpack.c.l.b16 %v915
    %v961 = vunpack.c.l.b16 %v916
    %v962 = vunpack.c.l.b16 %v917
    %v963 = vunpack.c.l.b16 %v918
    %v964 = vunpack.c.l.b16 %v919
    %v965 = vunpack.c.l.b16 %v920
    %v966 = vunpack.c.l.b16 %v921
    %v967 = vpack.c.b16 %v952, %v951
    %v968 = vpack.c.b16 %v954, %v953
    %v969 = vpack.c.b16 %v956, %v955
    %v970 = vpack.c.b16 %v958, %v957
    %v971 = vpack.c.b16 %v960, %v959
    %v972 = vpack.c.b16 %v962, %v961
    %v973 = vpack.c.b16 %v964, %v963
    %v974 = vpack.c.b16 %v966, %v965
    %v987 = vunpack.c.l.b16 %v923
    %v988 = vunpack.c.h.b16 %v923
    %v989 = vunpack.c.l.b16 %v924
    %v990 = vunpack.c.h.b16 %v924
    %v991 = vunpack.c.l.b16 %v925
    %v992 = vunpack.c.h.b16 %v925
    %v993 = vunpack.c.l.b16 %v926
    %v994 = vunpack.c.h.b16 %v926
    %v995 = vunpack.c.l.b16 %v927
    %v996 = vunpack.c.h.b16 %v927
    %v997 = vunpack.c.l.b16 %v928
    %v998 = vunpack.c.h.b16 %v928
    %v999 = vunpack.c.l.b16 %v929
    %v1000 = vunpack.c.h.b16 %v929
    %v1001 = vunpack.c.l.b16 %v930
    %v1002 = vunpack.c.h.b16 %v930
    %v1003 = vunpack.c.l.b16 %v931
    %v1004 = vunpack.c.h.b16 %v931
    %v1005 = vunpack.c.l.b16 %v932
    %v1006 = vunpack.c.h.b16 %v932
    %v1007 = vunpack.c.l.b16 %v933
    %v1008 = vunpack.c.h.b16 %v933
    %v1009 = vunpack.c.l.b16 %v934
    %v1010 = vunpack.c.h.b16 %v934
    %v1011 = vpack.c.b16 %v991, %v987
    %v1012 = vpack.c.b16 %v992, %v988
    %v1013 = vpack.c.b16 %v993, %v989
    %v1014 = vpack.c.b16 %v994, %v990
    %v1015 = vpack.c.b16 %v999, %v995
    %v1016 = vpack.c.b16 %v1000, %v996
    %v1017 = vpack.c.b16 %v1001, %v997
    %v1018 = vpack.c.b16 %v1002, %v998
    %v1019 = vpack.c.b16 %v1007, %v1003
    %v1020 = vpack.c.b16 %v1008, %v1004
    %v1021 = vpack.c.b16 %v1009, %v1005
    %v1022 = vpack.c.b16 %v1010, %v1006
    %v1036 = vsel %vm304, %v967, 0
    %v1039 = vsel %vm304, %v968, 0
    %v1042 = vsel %vm304, %v969, 0
    %v1045 = vsel %vm304, %v970, 0
    %v1048 = vsel %vm304, %v971, 0
    %v1051 = vsel %vm304, %v972, 0
    %v1054 = vsel %vm304, %v973, 0
    %v1057 = vsel %vm304, %v974, 0
    %1059 = vmatprep.subr.bf16.mxu0 %v1012
    %1060 = vmatpush1.bf16.msra.mxu0 %v1011
    %1061 = vmatprep.subr.bf16.mxu0 %v1016
    %1062 = vmatpush1.bf16.msra.mxu0 %v1015
    %1063 = vmatprep.subr.bf16.mxu0 %v1020
    %1064 = vmatpush1.bf16.msra.mxu0 %v1019
    %1065 = vmatprep.subr.bf16.mxu0 0
    %1066 = vmatpush1.bf16.msra.mxu0 0
    %1067 = vmatprep.subr.bf16.mxu0 0
    %1068 = vmatpush1.bf16.msra.mxu0 0
    %1069 = vmatprep.subr.bf16.mxu0 0
    %1070 = vmatpush1.bf16.msra.mxu0 0
    %1071 = vmatprep.subr.bf16.mxu0 0
    %1072 = vmatpush1.bf16.msra.mxu0 0
    %1073 = vmatprep.subr.bf16.mxu0 0
    %1074 = vmatpush1.bf16.msra.mxu0 0
    %1075 = vmatprep.subr.bf16.mxu0 0
    %1076 = vmatpush1.bf16.msra.mxu0 0
    %1077 = vmatprep.subr.bf16.mxu0 0
    %1078 = vmatpush1.bf16.msra.mxu0 0
    %1079 = vmatprep.subr.bf16.mxu0 0
    %1080 = vmatpush1.bf16.msra.mxu0 0
    %1081 = vmatprep.subr.bf16.mxu0 0
    %1082 = vmatpush1.bf16.msra.mxu0 0
    %1083 = vmatprep.subr.bf16.mxu0 0
    %1084 = vmatpush1.bf16.msra.mxu0 0
    %1085 = vmatprep.subr.bf16.mxu0 0
    %1086 = vmatpush1.bf16.msra.mxu0 0
    %1087 = vmatprep.subr.bf16.mxu0 0
    %1088 = vmatpush1.bf16.msra.mxu0 0
    %1089 = vmatprep.subr.bf16.mxu0 0
    %1090 = vmatpush1.bf16.msra.mxu0 0
    %1091 = vmatprep.mubr.bf16.mxu0 0
    %1092 = vmatmul.mubr.bf16.gmra.mrb[0].mxu0 %v1036
    %v1093 = vpop.f32.mrb[0].mxu0
    %v1094 = vadd.f32 0.0, %v1093
    %v1095 = vpop.f32.mrb[0].mxu0
    %v1096 = vadd.f32 0.0, %v1095
    %v1097 = vpop.f32.mrb[0].mxu0
    %v1098 = vadd.f32 0.0, %v1097
    %v1099 = vpop.f32.mrb[0].mxu0
    %v1100 = vadd.f32 0.0, %v1099
    %1101 = vmatprep.mubr.bf16.mxu0 0
    %1102 = vmatmul.mubr.bf16.gmra.mrb[0].mxu0 %v1039
    %v1103 = vpop.f32.mrb[0].mxu0
    %v1104 = vadd.f32 0.0, %v1103
    %v1105 = vpop.f32.mrb[0].mxu0
    %v1106 = vadd.f32 0.0, %v1105
    %v1107 = vpop.f32.mrb[0].mxu0
    %v1108 = vadd.f32 0.0, %v1107
    %v1109 = vpop.f32.mrb[0].mxu0
    %v1110 = vadd.f32 0.0, %v1109
    %1111 = vmatprep.mubr.bf16.mxu0 0
    %1112 = vmatmul.mubr.bf16.gmra.mrb[0].mxu0 %v1042
    %v1113 = vpop.f32.mrb[0].mxu0
    %v1114 = vadd.f32 0.0, %v1113
    %v1115 = vpop.f32.mrb[0].mxu0
    %v1116 = vadd.f32 0.0, %v1115
    %v1117 = vpop.f32.mrb[0].mxu0
    %v1118 = vadd.f32 0.0, %v1117
    %v1119 = vpop.f32.mrb[0].mxu0
    %v1120 = vadd.f32 0.0, %v1119
    %1121 = vmatprep.mubr.bf16.mxu0 0
    %1122 = vmatmul.mubr.bf16.gmra.mrb[0].mxu0 %v1045
    %v1123 = vpop.f32.mrb[0].mxu0
    %v1124 = vadd.f32 0.0, %v1123
    %v1125 = vpop.f32.mrb[0].mxu0
    %v1126 = vadd.f32 0.0, %v1125
    %v1127 = vpop.f32.mrb[0].mxu0
    %v1128 = vadd.f32 0.0, %v1127
    %v1129 = vpop.f32.mrb[0].mxu0
    %v1130 = vadd.f32 0.0, %v1129
    %1131 = vmatprep.mubr.bf16.mxu0 0
    %1132 = vmatmul.mubr.bf16.gmra.mrb[0].mxu0 %v1048
    %v1133 = vpop.f32.mrb[0].mxu0
    %v1134 = vadd.f32 0.0, %v1133
    %v1135 = vpop.f32.mrb[0].mxu0
    %v1136 = vadd.f32 0.0, %v1135
    %v1137 = vpop.f32.mrb[0].mxu0
    %v1138 = vadd.f32 0.0, %v1137
    %v1139 = vpop.f32.mrb[0].mxu0
    %v1140 = vadd.f32 0.0, %v1139
    %1141 = vmatprep.mubr.bf16.mxu0 0
    %1142 = vmatmul.mubr.bf16.gmra.mrb[0].mxu0 %v1051
    %v1143 = vpop.f32.mrb[0].mxu0
    %v1144 = vadd.f32 0.0, %v1143
    %v1145 = vpop.f32.mrb[0].mxu0
    %v1146 = vadd.f32 0.0, %v1145
    %v1147 = vpop.f32.mrb[0].mxu0
    %v1148 = vadd.f32 0.0, %v1147
    %v1149 = vpop.f32.mrb[0].mxu0
    %v1150 = vadd.f32 0.0, %v1149
    %1151 = vmatprep.mubr.bf16.mxu0 0
    %1152 = vmatmul.mubr.bf16.gmra.mrb[0].mxu0 %v1054
    %v1153 = vpop.f32.mrb[0].mxu0
    %v1154 = vadd.f32 0.0, %v1153
    %v1155 = vpop.f32.mrb[0].mxu0
    %v1156 = vadd.f32 0.0, %v1155
    %v1157 = vpop.f32.mrb[0].mxu0
    %v1158 = vadd.f32 0.0, %v1157
    %v1159 = vpop.f32.mrb[0].mxu0
    %v1160 = vadd.f32 0.0, %v1159
    %1161 = vmatprep.mubr.bf16.mxu0 0
    %1162 = vmatmul.mubr.bf16.gmra.mrb[0].mxu0 %v1057
    %v1163 = vpop.f32.mrb[0].mxu0
    %v1164 = vadd.f32 0.0, %v1163
    %v1165 = vpop.f32.mrb[0].mxu0
    %v1166 = vadd.f32 0.0, %v1165
    %v1167 = vpop.f32.mrb[0].mxu0
    %v1168 = vadd.f32 0.0, %v1167
    %v1169 = vpop.f32.mrb[0].mxu0
    %v1170 = vadd.f32 0.0, %v1169
    %1171 = vdwg.mxu0
    %1172 = vmatprep.subr.bf16.mxu0 %v1014
    %1173 = vmatpush1.bf16.msra.mxu0 %v1013
    %1174 = vmatprep.subr.bf16.mxu0 %v1018
    %1175 = vmatpush1.bf16.msra.mxu0 %v1017
    %1176 = vmatprep.subr.bf16.mxu0 %v1022
    %1177 = vmatpush1.bf16.msra.mxu0 %v1021
    %1178 = vmatprep.subr.bf16.mxu0 0
    %1179 = vmatpush1.bf16.msra.mxu0 0
    %1180 = vmatprep.subr.bf16.mxu0 0
    %1181 = vmatpush1.bf16.msra.mxu0 0
    %1182 = vmatprep.subr.bf16.mxu0 0
    %1183 = vmatpush1.bf16.msra.mxu0 0
    %1184 = vmatprep.subr.bf16.mxu0 0
    %1185 = vmatpush1.bf16.msra.mxu0 0
    %1186 = vmatprep.subr.bf16.mxu0 0
    %1187 = vmatpush1.bf16.msra.mxu0 0
    %1188 = vmatprep.subr.bf16.mxu0 0
    %1189 = vmatpush1.bf16.msra.mxu0 0
    %1190 = vmatprep.subr.bf16.mxu0 0
    %1191 = vmatpush1.bf16.msra.mxu0 0
    %1192 = vmatprep.subr.bf16.mxu0 0
    %1193 = vmatpush1.bf16.msra.mxu0 0
    %1194 = vmatprep.subr.bf16.mxu0 0
    %1195 = vmatpush1.bf16.msra.mxu0 0
    %1196 = vmatprep.subr.bf16.mxu0 0
    %1197 = vmatpush1.bf16.msra.mxu0 0
    %1198 = vmatprep.subr.bf16.mxu0 0
    %1199 = vmatpush1.bf16.msra.mxu0 0
    %1200 = vmatprep.subr.bf16.mxu0 0
    %1201 = vmatpush1.bf16.msra.mxu0 0
    %1202 = vmatprep.subr.bf16.mxu0 0
    %1203 = vmatpush1.bf16.msra.mxu0 0
    %1204 = vmatprep.mubr.bf16.mxu0 0
    %1205 = vmatmul.mubr.bf16.gmra.mrb[0].mxu0 %v1036
    %v1206 = vpop.f32.mrb[0].mxu0
    %v1207 = vadd.f32 0.0, %v1206
    %v1208 = vpop.f32.mrb[0].mxu0
    %v1209 = vadd.f32 0.0, %v1208
    %v1210 = vpop.f32.mrb[0].mxu0
    %v1211 = vadd.f32 0.0, %v1210
    %v1212 = vpop.f32.mrb[0].mxu0
    %v1213 = vadd.f32 0.0, %v1212
    %1214 = vmatprep.mubr.bf16.mxu0 0
    %1215 = vmatmul.mubr.bf16.gmra.mrb[0].mxu0 %v1039
    %v1216 = vpop.f32.mrb[0].mxu0
    %v1217 = vadd.f32 0.0, %v1216
    %v1218 = vpop.f32.mrb[0].mxu0
    %v1219 = vadd.f32 0.0, %v1218
    %v1220 = vpop.f32.mrb[0].mxu0
    %v1221 = vadd.f32 0.0, %v1220
    %v1222 = vpop.f32.mrb[0].mxu0
    %v1223 = vadd.f32 0.0, %v1222
    %1224 = vmatprep.mubr.bf16.mxu0 0
    %1225 = vmatmul.mubr.bf16.gmra.mrb[0].mxu0 %v1042
    %v1226 = vpop.f32.mrb[0].mxu0
    %v1227 = vadd.f32 0.0, %v1226
    %v1228 = vpop.f32.mrb[0].mxu0
    %v1229 = vadd.f32 0.0, %v1228
    %v1230 = vpop.f32.mrb[0].mxu0
    %v1231 = vadd.f32 0.0, %v1230
    %v1232 = vpop.f32.mrb[0].mxu0
    %v1233 = vadd.f32 0.0, %v1232
    %1234 = vmatprep.mubr.bf16.mxu0 0
    %1235 = vmatmul.mubr.bf16.gmra.mrb[0].mxu0 %v1045
    %v1236 = vpop.f32.mrb[0].mxu0
    %v1237 = vadd.f32 0.0, %v1236
    %v1238 = vpop.f32.mrb[0].mxu0
    %v1239 = vadd.f32 0.0, %v1238
    %v1240 = vpop.f32.mrb[0].mxu0
    %v1241 = vadd.f32 0.0, %v1240
    %v1242 = vpop.f32.mrb[0].mxu0
    %v1243 = vadd.f32 0.0, %v1242
    %1244 = vmatprep.mubr.bf16.mxu0 0
    %1245 = vmatmul.mubr.bf16.gmra.mrb[0].mxu0 %v1048
    %v1246 = vpop.f32.mrb[0].mxu0
    %v1247 = vadd.f32 0.0, %v1246
    %v1248 = vpop.f32.mrb[0].mxu0
    %v1249 = vadd.f32 0.0, %v1248
    %v1250 = vpop.f32.mrb[0].mxu0
    %v1251 = vadd.f32 0.0, %v1250
    %v1252 = vpop.f32.mrb[0].mxu0
    %v1253 = vadd.f32 0.0, %v1252
    %1254 = vmatprep.mubr.bf16.mxu0 0
    %1255 = vmatmul.mubr.bf16.gmra.mrb[0].mxu0 %v1051
    %v1256 = vpop.f32.mrb[0].mxu0
    %v1257 = vadd.f32 0.0, %v1256
    %v1258 = vpop.f32.mrb[0].mxu0
    %v1259 = vadd.f32 0.0, %v1258
    %v1260 = vpop.f32.mrb[0].mxu0
    %v1261 = vadd.f32 0.0, %v1260
    %v1262 = vpop.f32.mrb[0].mxu0
    %v1263 = vadd.f32 0.0, %v1262
    %1264 = vmatprep.mubr.bf16.mxu0 0
    %1265 = vmatmul.mubr.bf16.gmra.mrb[0].mxu0 %v1054
    %v1266 = vpop.f32.mrb[0].mxu0
    %v1267 = vadd.f32 0.0, %v1266
    %v1268 = vpop.f32.mrb[0].mxu0
    %v1269 = vadd.f32 0.0, %v1268
    %v1270 = vpop.f32.mrb[0].mxu0
    %v1271 = vadd.f32 0.0, %v1270
    %v1272 = vpop.f32.mrb[0].mxu0
    %v1273 = vadd.f32 0.0, %v1272
    %1274 = vmatprep.mubr.bf16.mxu0 0
    %1275 = vmatmul.mubr.bf16.gmra.mrb[0].mxu0 %v1057
    %v1276 = vpop.f32.mrb[0].mxu0
    %v1277 = vadd.f32 0.0, %v1276
    %v1278 = vpop.f32.mrb[0].mxu0
    %v1279 = vadd.f32 0.0, %v1278
    %v1280 = vpop.f32.mrb[0].mxu0
    %v1281 = vadd.f32 0.0, %v1280
    %v1282 = vpop.f32.mrb[0].mxu0
    %v1283 = vadd.f32 0.0, %v1282
    %1284 = vdwg.mxu0
    %v1285 = vadd.f32 %v714, %v1094
    %v1286 = vadd.f32 %v716, %v1096
    %v1287 = vadd.f32 %v827, %v1207
    %v1288 = vadd.f32 %v829, %v1209
    %v1289 = vadd.f32 %v718, %v1098
    %v1290 = vadd.f32 %v720, %v1100
    %v1291 = vadd.f32 %v831, %v1211
    %v1292 = vadd.f32 %v833, %v1213
    %v1293 = vadd.f32 %v724, %v1104
    %v1294 = vadd.f32 %v726, %v1106
    %v1295 = vadd.f32 %v837, %v1217
    %v1296 = vadd.f32 %v839, %v1219
    %v1297 = vadd.f32 %v728, %v1108
    %v1298 = vadd.f32 %v730, %v1110
    %v1299 = vadd.f32 %v841, %v1221
    %v1300 = vadd.f32 %v843, %v1223
    %v1301 = vadd.f32 %v734, %v1114
    %v1302 = vadd.f32 %v736, %v1116
    %v1303 = vadd.f32 %v847, %v1227
    %v1304 = vadd.f32 %v849, %v1229
    %v1305 = vadd.f32 %v738, %v1118
    %v1306 = vadd.f32 %v740, %v1120
    %v1307 = vadd.f32 %v851, %v1231
    %v1308 = vadd.f32 %v853, %v1233
    %v1309 = vadd.f32 %v744, %v1124
    %v1310 = vadd.f32 %v746, %v1126
    %v1311 = vadd.f32 %v857, %v1237
    %v1312 = vadd.f32 %v859, %v1239
    %v1313 = vadd.f32 %v748, %v1128
    %v1314 = vadd.f32 %v750, %v1130
    %v1315 = vadd.f32 %v861, %v1241
    %v1316 = vadd.f32 %v863, %v1243
    %v1317 = vadd.f32 %v754, %v1134
    %v1318 = vadd.f32 %v756, %v1136
    %v1319 = vadd.f32 %v867, %v1247
    %v1320 = vadd.f32 %v869, %v1249
    %v1321 = vadd.f32 %v758, %v1138
    %v1322 = vadd.f32 %v760, %v1140
    %v1323 = vadd.f32 %v871, %v1251
    %v1324 = vadd.f32 %v873, %v1253
    %v1325 = vadd.f32 %v764, %v1144
    %v1326 = vadd.f32 %v766, %v1146
    %v1327 = vadd.f32 %v877, %v1257
    %v1328 = vadd.f32 %v879, %v1259
    %v1329 = vadd.f32 %v768, %v1148
    %v1330 = vadd.f32 %v770, %v1150
    %v1331 = vadd.f32 %v881, %v1261
    %v1332 = vadd.f32 %v883, %v1263
    %v1333 = vadd.f32 %v774, %v1154
    %v1334 = vadd.f32 %v776, %v1156
    %v1335 = vadd.f32 %v887, %v1267
    %v1336 = vadd.f32 %v889, %v1269
    %v1337 = vadd.f32 %v778, %v1158
    %v1338 = vadd.f32 %v780, %v1160
    %v1339 = vadd.f32 %v891, %v1271
    %v1340 = vadd.f32 %v893, %v1273
    %v1341 = vadd.f32 %v784, %v1164
    %v1342 = vadd.f32 %v786, %v1166
    %v1343 = vadd.f32 %v897, %v1277
    %v1344 = vadd.f32 %v899, %v1279
    %v1345 = vadd.f32 %v788, %v1168
    %v1346 = vadd.f32 %v790, %v1170
    %v1347 = vadd.f32 %v901, %v1281
    %v1348 = vadd.f32 %v903, %v1283
    %v1349 = vmax.f32 %v1285, %v1287
    %v1350 = vmax.f32 %v1286, %v1288
    %v1351 = vmax.f32 %v1289, %v1291
    %v1352 = vmax.f32 %v1290, %v1292
    %v1353 = vmax.f32 %v1293, %v1295
    %v1354 = vmax.f32 %v1294, %v1296
    %v1355 = vmax.f32 %v1297, %v1299
    %v1356 = vmax.f32 %v1298, %v1300
    %v1357 = vmax.f32 %v1301, %v1303
    %v1358 = vmax.f32 %v1302, %v1304
    %v1359 = vmax.f32 %v1305, %v1307
    %v1360 = vmax.f32 %v1306, %v1308
    %v1361 = vmax.f32 %v1309, %v1311
    %v1362 = vmax.f32 %v1310, %v1312
    %v1363 = vmax.f32 %v1313, %v1315
    %v1364 = vmax.f32 %v1314, %v1316
    %v1365 = vmax.f32 %v1317, %v1319
    %v1366 = vmax.f32 %v1318, %v1320
    %v1367 = vmax.f32 %v1321, %v1323
    %v1368 = vmax.f32 %v1322, %v1324
    %v1369 = vmax.f32 %v1325, %v1327
    %v1370 = vmax.f32 %v1326, %v1328
    %v1371 = vmax.f32 %v1329, %v1331
    %v1372 = vmax.f32 %v1330, %v1332
    %v1373 = vmax.f32 %v1333, %v1335
    %v1374 = vmax.f32 %v1334, %v1336
    %v1375 = vmax.f32 %v1337, %v1339
    %v1376 = vmax.f32 %v1338, %v1340
    %v1377 = vmax.f32 %v1341, %v1343
    %v1378 = vmax.f32 %v1342, %v1344
    %v1379 = vmax.f32 %v1345, %v1347
    %v1380 = vmax.f32 %v1346, %v1348
    %v1381 = vmax.f32 %v1349, %v1351
    %v1382 = vmax.f32 %v1350, %v1352
    %v1383 = vmax.f32 %v1353, %v1355
    %v1384 = vmax.f32 %v1354, %v1356
    %v1385 = vmax.f32 %v1357, %v1359
    %v1386 = vmax.f32 %v1358, %v1360
    %v1387 = vmax.f32 %v1361, %v1363
    %v1388 = vmax.f32 %v1362, %v1364
    %v1389 = vmax.f32 %v1365, %v1367
    %v1390 = vmax.f32 %v1366, %v1368
    %v1391 = vmax.f32 %v1369, %v1371
    %v1392 = vmax.f32 %v1370, %v1372
    %v1393 = vmax.f32 %v1373, %v1375
    %v1394 = vmax.f32 %v1374, %v1376
    %v1395 = vmax.f32 %v1377, %v1379
    %v1396 = vmax.f32 %v1378, %v1380
    %v1397 = vld [vmem:[%s2] sm:$0x3]
    %v1399 = vlaneseq
    %v1400 = vshrl.u32 %v1399, 7
    %v1401 = vsub.s32 0, %v1400
    %v1402 = vrot.slane %v1397, %v1401
    %v1403 = vlaneseq
    %v1404 = vshrl.u32 %v1403, 7
    %v1405 = vsub.s32 1, %v1404
    %v1406 = vrot.slane %v1397, %v1405
    %v1409 = vadd.f32 %v1381, %v1402
    %v1410 = vadd.f32 %v1382, %v1406
    %v1411 = vadd.f32 %v1383, %v1402
    %v1412 = vadd.f32 %v1384, %v1406
    %v1413 = vadd.f32 %v1385, %v1402
    %v1414 = vadd.f32 %v1386, %v1406
    %v1415 = vadd.f32 %v1387, %v1402
    %v1416 = vadd.f32 %v1388, %v1406
    %v1417 = vadd.f32 %v1389, %v1402
    %v1418 = vadd.f32 %v1390, %v1406
    %v1419 = vadd.f32 %v1391, %v1402
    %v1420 = vadd.f32 %v1392, %v1406
    %v1421 = vadd.f32 %v1393, %v1402
    %v1422 = vadd.f32 %v1394, %v1406
    %v1423 = vadd.f32 %v1395, %v1402
    %v1424 = vadd.f32 %v1396, %v1406
    %v1425 = vmax.f32 %v1409, 0.0
    %v1426 = vmax.f32 %v1410, 0.0
    %v1427 = vmax.f32 %v1411, 0.0
    %v1428 = vmax.f32 %v1412, 0.0
    %v1429 = vmax.f32 %v1413, 0.0
    %v1430 = vmax.f32 %v1414, 0.0
    %v1431 = vmax.f32 %v1415, 0.0
    %v1432 = vmax.f32 %v1416, 0.0
    %v1433 = vmax.f32 %v1417, 0.0
    %v1434 = vmax.f32 %v1418, 0.0
    %v1435 = vmax.f32 %v1419, 0.0
    %v1436 = vmax.f32 %v1420, 0.0
    %v1437 = vmax.f32 %v1421, 0.0
    %v1438 = vmax.f32 %v1422, 0.0
    %v1439 = vmax.f32 %v1423, 0.0
    %v1440 = vmax.f32 %v1424, 0.0
    %v1441 = vpack.c.bf16 %v1425, %v1425
    %v1442 = vpack.c.bf16 %v1426, %v1426
    %v1443 = vpack.c.bf16 %v1427, %v1427
    %v1444 = vpack.c.bf16 %v1428, %v1428
    %v1445 = vpack.c.bf16 %v1429, %v1429
    %v1446 = vpack.c.bf16 %v1430, %v1430
    %v1447 = vpack.c.bf16 %v1431, %v1431
    %v1448 = vpack.c.bf16 %v1432, %v1432
    %v1449 = vpack.c.bf16 %v1433, %v1433
    %v1450 = vpack.c.bf16 %v1434, %v1434
    %v1451 = vpack.c.bf16 %v1435, %v1435
    %v1452 = vpack.c.bf16 %v1436, %v1436
    %v1453 = vpack.c.bf16 %v1437, %v1437
    %v1454 = vpack.c.bf16 %v1438, %v1438
    %v1455 = vpack.c.bf16 %v1439, %v1439
    %v1456 = vpack.c.bf16 %v1440, %v1440
    %1457 = vst [vmem:[#allocation3] sm:$0xff] 0
    %s1458 = scalar_lea.vmem [#allocation3], 72
    %1459 = vst [vmem:[%s1458] sm:$0xff] 0
    %v1476 = vunpack.c.l.b16 %v1441
    %v1477 = vunpack.c.l.b16 %v1442
    %v1478 = vunpack.c.l.b16 %v1443
    %v1479 = vunpack.c.l.b16 %v1444
    %v1480 = vunpack.c.l.b16 %v1445
    %v1481 = vunpack.c.l.b16 %v1446
    %v1482 = vunpack.c.l.b16 %v1447
    %v1483 = vunpack.c.l.b16 %v1448
    %v1484 = vunpack.c.l.b16 %v1449
    %v1485 = vunpack.c.l.b16 %v1450
    %v1486 = vunpack.c.l.b16 %v1451
    %v1487 = vunpack.c.l.b16 %v1452
    %v1488 = vunpack.c.l.b16 %v1453
    %v1489 = vunpack.c.l.b16 %v1454
    %v1490 = vunpack.c.l.b16 %v1455
    %v1491 = vunpack.c.l.b16 %v1456
    %v1492 = vpack.c.b16 %v1477, %v1476
    %v1493 = vpack.c.b16 %v1479, %v1478
    %v1494 = vpack.c.b16 %v1481, %v1480
    %v1495 = vpack.c.b16 %v1483, %v1482
    %v1496 = vpack.c.b16 %v1485, %v1484
    %v1497 = vpack.c.b16 %v1487, %v1486
    %v1498 = vpack.c.b16 %v1489, %v1488
    %v1499 = vpack.c.b16 %v1491, %v1490
    %s1508 = scalar_lea.vmem [#allocation3], 8
    %1509 = vst [vmem:[%s1508] sm:$0xff] %v1492
    %1510 = vst [vmem:[%s1508 + $0x8] sm:$0xff] %v1493
    %1511 = vst [vmem:[%s1508 + $0x10] sm:$0xff] %v1494
    %1512 = vst [vmem:[%s1508 + $0x18] sm:$0xff] %v1495
    %1513 = vst [vmem:[%s1508 + $0x20] sm:$0xff] %v1496
    %1514 = vst [vmem:[%s1508 + $0x28] sm:$0xff] %v1497
    %1515 = vst [vmem:[%s1508 + $0x30] sm:$0xff] %v1498
    %1516 = vst [vmem:[%s1508 + $0x38] sm:$0xff] %v1499
    %v1517 = vld [vmem:[#allocation3] sm:$0xff]
    %v1518 = vld [vmem:[#allocation3 + $0x8] sm:$0xff]
    %v1519 = vld [vmem:[#allocation3 + $0x10] sm:$0xff]
    %v1520 = vld [vmem:[#allocation3 + $0x18] sm:$0xff]
    %v1521 = vld [vmem:[#allocation3 + $0x20] sm:$0xff]
    %v1522 = vld [vmem:[#allocation3 + $0x28] sm:$0xff]
    %v1523 = vld [vmem:[#allocation3 + $0x30] sm:$0xff]
    %v1524 = vld [vmem:[#allocation3 + $0x38] sm:$0xff]
    %v1525 = vld [vmem:[#allocation5] sm:$0xff]
    %v1526 = vld [vmem:[#allocation5 + $0x8] sm:$0xff]
    %v1527 = vld [vmem:[#allocation5 + $0x10] sm:$0xff]
    %v1528 = vld [vmem:[#allocation5 + $0x18] sm:$0xff]
    %v1529 = vld [vmem:[#allocation5 + $0x20] sm:$0xff]
    %v1530 = vld [vmem:[#allocation5 + $0x28] sm:$0xff]
    %v1531 = vld [vmem:[#allocation5 + $0x30] sm:$0xff]
    %v1532 = vld [vmem:[#allocation5 + $0x38] sm:$0xff]
    %v1533 = vld [vmem:[#allocation5 + $0x40] sm:$0xff]
    %v1534 = vld [vmem:[#allocation5 + $0x48] sm:$0xff]
    %v1535 = vld [vmem:[#allocation5 + $0x50] sm:$0xff]
    %v1536 = vld [vmem:[#allocation5 + $0x58] sm:$0xff]
    %v1537 = vld [vmem:[#allocation5 + $0x60] sm:$0xff]
    %v1538 = vld [vmem:[#allocation5 + $0x68] sm:$0xff]
    %v1539 = vld [vmem:[#allocation5 + $0x70] sm:$0xff]
    %v1540 = vld [vmem:[#allocation5 + $0x78] sm:$0xff]
    %v1541 = vld [vmem:[#allocation5 + $0x80] sm:$0xff]
    %v1542 = vld [vmem:[#allocation5 + $0x88] sm:$0xff]
    %v1543 = vld [vmem:[#allocation5 + $0x90] sm:$0xff]
    %v1544 = vld [vmem:[#allocation5 + $0x98] sm:$0xff]
    %v1545 = vld [vmem:[#allocation5 + $0xa0] sm:$0xff]
    %v1546 = vld [vmem:[#allocation5 + $0xa8] sm:$0xff]
    %v1547 = vld [vmem:[#allocation5 + $0xb0] sm:$0xff]
    %v1548 = vld [vmem:[#allocation5 + $0xb8] sm:$0xff]
    %v1549 = vld [vmem:[#allocation5 + $0xc0] sm:$0xff]
    %v1550 = vld [vmem:[#allocation5 + $0xc8] sm:$0xff]
    %v1551 = vld [vmem:[#allocation5 + $0xd0] sm:$0xff]
    %v1552 = vld [vmem:[#allocation5 + $0xd8] sm:$0xff]
    %v1553 = vld [vmem:[#allocation5 + $0xe0] sm:$0xff]
    %v1554 = vld [vmem:[#allocation5 + $0xe8] sm:$0xff]
    %v1555 = vld [vmem:[#allocation5 + $0xf0] sm:$0xff]
    %v1556 = vld [vmem:[#allocation5 + $0xf8] sm:$0xff]
    %v1557 = vld [vmem:[#allocation5 + $0x100] sm:$0xff]
    %v1558 = vld [vmem:[#allocation5 + $0x108] sm:$0xff]
    %v1559 = vld [vmem:[#allocation5 + $0x110] sm:$0xff]
    %v1560 = vld [vmem:[#allocation5 + $0x118] sm:$0xff]
    %v1561 = vld [vmem:[#allocation5 + $0x120] sm:$0xff]
    %v1562 = vld [vmem:[#allocation5 + $0x128] sm:$0xff]
    %v1563 = vld [vmem:[#allocation5 + $0x130] sm:$0xff]
    %v1564 = vld [vmem:[#allocation5 + $0x138] sm:$0xff]
    %v1565 = vld [vmem:[#allocation5 + $0x140] sm:$0xff]
    %v1566 = vld [vmem:[#allocation5 + $0x148] sm:$0xff]
    %v1567 = vld [vmem:[#allocation5 + $0x150] sm:$0xff]
    %v1568 = vld [vmem:[#allocation5 + $0x158] sm:$0xff]
    %v1569 = vld [vmem:[#allocation5 + $0x160] sm:$0xff]
    %v1570 = vld [vmem:[#allocation5 + $0x168] sm:$0xff]
    %v1571 = vld [vmem:[#allocation5 + $0x170] sm:$0xff]
    %v1572 = vld [vmem:[#allocation5 + $0x178] sm:$0xff]
    %v1573 = vld [vmem:[#allocation5 + $0x180] sm:$0xff]
    %v1574 = vld [vmem:[#allocation5 + $0x188] sm:$0xff]
    %v1575 = vld [vmem:[#allocation5 + $0x190] sm:$0xff]
    %v1576 = vld [vmem:[#allocation5 + $0x198] sm:$0xff]
    %v1577 = vld [vmem:[#allocation5 + $0x1a0] sm:$0xff]
    %v1578 = vld [vmem:[#allocation5 + $0x1a8] sm:$0xff]
    %v1579 = vld [vmem:[#allocation5 + $0x1b0] sm:$0xff]
    %v1580 = vld [vmem:[#allocation5 + $0x1b8] sm:$0xff]
    %v1581 = vld [vmem:[#allocation5 + $0x1c0] sm:$0xff]
    %v1582 = vld [vmem:[#allocation5 + $0x1c8] sm:$0xff]
    %v1583 = vld [vmem:[#allocation5 + $0x1d0] sm:$0xff]
    %v1584 = vld [vmem:[#allocation5 + $0x1d8] sm:$0xff]
    %v1585 = vld [vmem:[#allocation5 + $0x1e0] sm:$0xff]
    %v1586 = vld [vmem:[#allocation5 + $0x1e8] sm:$0xff]
    %v1587 = vld [vmem:[#allocation5 + $0x1f0] sm:$0xff]
    %v1588 = vld [vmem:[#allocation5 + $0x1f8] sm:$0xff]
    %v1589 = vld [vmem:[%s1508] sm:$0xff]
    %v1590 = vld [vmem:[%s1508 + $0x8] sm:$0xff]
    %v1591 = vld [vmem:[%s1508 + $0x10] sm:$0xff]
    %v1592 = vld [vmem:[%s1508 + $0x18] sm:$0xff]
    %v1593 = vld [vmem:[%s1508 + $0x20] sm:$0xff]
    %v1594 = vld [vmem:[%s1508 + $0x28] sm:$0xff]
    %v1595 = vld [vmem:[%s1508 + $0x30] sm:$0xff]
    %v1596 = vld [vmem:[%s1508 + $0x38] sm:$0xff]
    %s1597 = scalar_lea.vmem [#allocation5], 512
    %v1598 = vld [vmem:[%s1597] sm:$0xff]
    %v1599 = vld [vmem:[%s1597 + $0x8] sm:$0xff]
    %v1600 = vld [vmem:[%s1597 + $0x10] sm:$0xff]
    %v1601 = vld [vmem:[%s1597 + $0x18] sm:$0xff]
    %v1602 = vld [vmem:[%s1597 + $0x20] sm:$0xff]
    %v1603 = vld [vmem:[%s1597 + $0x28] sm:$0xff]
    %v1604 = vld [vmem:[%s1597 + $0x30] sm:$0xff]
    %v1605 = vld [vmem:[%s1597 + $0x38] sm:$0xff]
    %v1606 = vld [vmem:[%s1597 + $0x40] sm:$0xff]
    %v1607 = vld [vmem:[%s1597 + $0x48] sm:$0xff]
    %v1608 = vld [vmem:[%s1597 + $0x50] sm:$0xff]
    %v1609 = vld [vmem:[%s1597 + $0x58] sm:$0xff]
    %v1610 = vld [vmem:[%s1597 + $0x60] sm:$0xff]
    %v1611 = vld [vmem:[%s1597 + $0x68] sm:$0xff]
    %v1612 = vld [vmem:[%s1597 + $0x70] sm:$0xff]
    %v1613 = vld [vmem:[%s1597 + $0x78] sm:$0xff]
    %v1614 = vld [vmem:[%s1597 + $0x80] sm:$0xff]
    %v1615 = vld [vmem:[%s1597 + $0x88] sm:$0xff]
    %v1616 = vld [vmem:[%s1597 + $0x90] sm:$0xff]
    %v1617 = vld [vmem:[%s1597 + $0x98] sm:$0xff]
    %v1618 = vld [vmem:[%s1597 + $0xa0] sm:$0xff]
    %v1619 = vld [vmem:[%s1597 + $0xa8] sm:$0xff]
    %v1620 = vld [vmem:[%s1597 + $0xb0] sm:$0xff]
    %v1621 = vld [vmem:[%s1597 + $0xb8] sm:$0xff]
    %v1622 = vld [vmem:[%s1597 + $0xc0] sm:$0xff]
    %v1623 = vld [vmem:[%s1597 + $0xc8] sm:$0xff]
    %v1624 = vld [vmem:[%s1597 + $0xd0] sm:$0xff]
    %v1625 = vld [vmem:[%s1597 + $0xd8] sm:$0xff]
    %v1626 = vld [vmem:[%s1597 + $0xe0] sm:$0xff]
    %v1627 = vld [vmem:[%s1597 + $0xe8] sm:$0xff]
    %v1628 = vld [vmem:[%s1597 + $0xf0] sm:$0xff]
    %v1629 = vld [vmem:[%s1597 + $0xf8] sm:$0xff]
    %v1630 = vld [vmem:[%s1597 + $0x100] sm:$0xff]
    %v1631 = vld [vmem:[%s1597 + $0x108] sm:$0xff]
    %v1632 = vld [vmem:[%s1597 + $0x110] sm:$0xff]
    %v1633 = vld [vmem:[%s1597 + $0x118] sm:$0xff]
    %v1634 = vld [vmem:[%s1597 + $0x120] sm:$0xff]
    %v1635 = vld [vmem:[%s1597 + $0x128] sm:$0xff]
    %v1636 = vld [vmem:[%s1597 + $0x130] sm:$0xff]
    %v1637 = vld [vmem:[%s1597 + $0x138] sm:$0xff]
    %v1638 = vld [vmem:[%s1597 + $0x140] sm:$0xff]
    %v1639 = vld [vmem:[%s1597 + $0x148] sm:$0xff]
    %v1640 = vld [vmem:[%s1597 + $0x150] sm:$0xff]
    %v1641 = vld [vmem:[%s1597 + $0x158] sm:$0xff]
    %v1642 = vld [vmem:[%s1597 + $0x160] sm:$0xff]
    %v1643 = vld [vmem:[%s1597 + $0x168] sm:$0xff]
    %v1644 = vld [vmem:[%s1597 + $0x170] sm:$0xff]
    %v1645 = vld [vmem:[%s1597 + $0x178] sm:$0xff]
    %v1646 = vld [vmem:[%s1597 + $0x180] sm:$0xff]
    %v1647 = vld [vmem:[%s1597 + $0x188] sm:$0xff]
    %v1648 = vld [vmem:[%s1597 + $0x190] sm:$0xff]
    %v1649 = vld [vmem:[%s1597 + $0x198] sm:$0xff]
    %v1650 = vld [vmem:[%s1597 + $0x1a0] sm:$0xff]
    %v1651 = vld [vmem:[%s1597 + $0x1a8] sm:$0xff]
    %v1652 = vld [vmem:[%s1597 + $0x1b0] sm:$0xff]
    %v1653 = vld [vmem:[%s1597 + $0x1b8] sm:$0xff]
    %v1654 = vld [vmem:[%s1597 + $0x1c0] sm:$0xff]
    %v1655 = vld [vmem:[%s1597 + $0x1c8] sm:$0xff]
    %v1656 = vld [vmem:[%s1597 + $0x1d0] sm:$0xff]
    %v1657 = vld [vmem:[%s1597 + $0x1d8] sm:$0xff]
    %v1658 = vld [vmem:[%s1597 + $0x1e0] sm:$0xff]
    %v1659 = vld [vmem:[%s1597 + $0x1e8] sm:$0xff]
    %v1660 = vld [vmem:[%s1597 + $0x1f0] sm:$0xff]
    %v1661 = vld [vmem:[%s1597 + $0x1f8] sm:$0xff]
    %v1670 = vunpack.c.l.b16 %v1589
    %v1671 = vunpack.c.h.b16 %v1589
    %v1672 = vunpack.c.l.b16 %v1590
    %v1673 = vunpack.c.h.b16 %v1590
    %v1674 = vunpack.c.l.b16 %v1591
    %v1675 = vunpack.c.h.b16 %v1591
    %v1676 = vunpack.c.l.b16 %v1592
    %v1677 = vunpack.c.h.b16 %v1592
    %v1678 = vunpack.c.l.b16 %v1593
    %v1679 = vunpack.c.h.b16 %v1593
    %v1680 = vunpack.c.l.b16 %v1594
    %v1681 = vunpack.c.h.b16 %v1594
    %v1682 = vunpack.c.l.b16 %v1595
    %v1683 = vunpack.c.h.b16 %v1595
    %v1684 = vunpack.c.l.b16 %v1596
    %v1685 = vunpack.c.h.b16 %v1596
    %v1686 = vpack.c.b16 %v1672, %v1670
    %v1687 = vpack.c.b16 %v1673, %v1671
    %v1688 = vpack.c.b16 %v1676, %v1674
    %v1689 = vpack.c.b16 %v1677, %v1675
    %v1690 = vpack.c.b16 %v1680, %v1678
    %v1691 = vpack.c.b16 %v1681, %v1679
    %v1692 = vpack.c.b16 %v1684, %v1682
    %v1693 = vpack.c.b16 %v1685, %v1683
    %v1766 = vunpack.c.l.b16 %v1598
    %v1767 = vunpack.c.h.b16 %v1598
    %v1768 = vunpack.c.l.b16 %v1599
    %v1769 = vunpack.c.h.b16 %v1599
    %v1770 = vunpack.c.l.b16 %v1600
    %v1771 = vunpack.c.h.b16 %v1600
    %v1772 = vunpack.c.l.b16 %v1601
    %v1773 = vunpack.c.h.b16 %v1601
    %v1774 = vunpack.c.l.b16 %v1602
    %v1775 = vunpack.c.h.b16 %v1602
    %v1776 = vunpack.c.l.b16 %v1603
    %v1777 = vunpack.c.h.b16 %v1603
    %v1778 = vunpack.c.l.b16 %v1604
    %v1779 = vunpack.c.h.b16 %v1604
    %v1780 = vunpack.c.l.b16 %v1605
    %v1781 = vunpack.c.h.b16 %v1605
    %v1782 = vunpack.c.l.b16 %v1606
    %v1783 = vunpack.c.h.b16 %v1606
    %v1784 = vunpack.c.l.b16 %v1607
    %v1785 = vunpack.c.h.b16 %v1607
    %v1786 = vunpack.c.l.b16 %v1608
    %v1787 = vunpack.c.h.b16 %v1608
    %v1788 = vunpack.c.l.b16 %v1609
    %v1789 = vunpack.c.h.b16 %v1609
    %v1790 = vunpack.c.l.b16 %v1610
    %v1791 = vunpack.c.h.b16 %v1610
    %v1792 = vunpack.c.l.b16 %v1611
    %v1793 = vunpack.c.h.b16 %v1611
    %v1794 = vunpack.c.l.b16 %v1612
    %v1795 = vunpack.c.h.b16 %v1612
    %v1796 = vunpack.c.l.b16 %v1613
    %v1797 = vunpack.c.h.b16 %v1613
    %v1798 = vunpack.c.l.b16 %v1614
    %v1799 = vunpack.c.h.b16 %v1614
    %v1800 = vunpack.c.l.b16 %v1615
    %v1801 = vunpack.c.h.b16 %v1615
    %v1802 = vunpack.c.l.b16 %v1616
    %v1803 = vunpack.c.h.b16 %v1616
    %v1804 = vunpack.c.l.b16 %v1617
    %v1805 = vunpack.c.h.b16 %v1617
    %v1806 = vunpack.c.l.b16 %v1618
    %v1807 = vunpack.c.h.b16 %v1618
    %v1808 = vunpack.c.l.b16 %v1619
    %v1809 = vunpack.c.h.b16 %v1619
    %v1810 = vunpack.c.l.b16 %v1620
    %v1811 = vunpack.c.h.b16 %v1620
    %v1812 = vunpack.c.l.b16 %v1621
    %v1813 = vunpack.c.h.b16 %v1621
    %v1814 = vunpack.c.l.b16 %v1622
    %v1815 = vunpack.c.h.b16 %v1622
    %v1816 = vunpack.c.l.b16 %v1623
    %v1817 = vunpack.c.h.b16 %v1623
    %v1818 = vunpack.c.l.b16 %v1624
    %v1819 = vunpack.c.h.b16 %v1624
    %v1820 = vunpack.c.l.b16 %v1625
    %v1821 = vunpack.c.h.b16 %v1625
    %v1822 = vunpack.c.l.b16 %v1626
    %v1823 = vunpack.c.h.b16 %v1626
    %v1824 = vunpack.c.l.b16 %v1627
    %v1825 = vunpack.c.h.b16 %v1627
    %v1826 = vunpack.c.l.b16 %v1628
    %v1827 = vunpack.c.h.b16 %v1628
    %v1828 = vunpack.c.l.b16 %v1629
    %v1829 = vunpack.c.h.b16 %v1629
    %v1830 = vunpack.c.l.b16 %v1630
    %v1831 = vunpack.c.h.b16 %v1630
    %v1832 = vunpack.c.l.b16 %v1631
    %v1833 = vunpack.c.h.b16 %v1631
    %v1834 = vunpack.c.l.b16 %v1632
    %v1835 = vunpack.c.h.b16 %v1632
    %v1836 = vunpack.c.l.b16 %v1633
    %v1837 = vunpack.c.h.b16 %v1633
    %v1838 = vunpack.c.l.b16 %v1634
    %v1839 = vunpack.c.h.b16 %v1634
    %v1840 = vunpack.c.l.b16 %v1635
    %v1841 = vunpack.c.h.b16 %v1635
    %v1842 = vunpack.c.l.b16 %v1636
    %v1843 = vunpack.c.h.b16 %v1636
    %v1844 = vunpack.c.l.b16 %v1637
    %v1845 = vunpack.c.h.b16 %v1637
    %v1846 = vunpack.c.l.b16 %v1638
    %v1847 = vunpack.c.h.b16 %v1638
    %v1848 = vunpack.c.l.b16 %v1639
    %v1849 = vunpack.c.h.b16 %v1639
    %v1850 = vunpack.c.l.b16 %v1640
    %v1851 = vunpack.c.h.b16 %v1640
    %v1852 = vunpack.c.l.b16 %v1641
    %v1853 = vunpack.c.h.b16 %v1641
    %v1854 = vunpack.c.l.b16 %v1642
    %v1855 = vunpack.c.h.b16 %v1642
    %v1856 = vunpack.c.l.b16 %v1643
    %v1857 = vunpack.c.h.b16 %v1643
    %v1858 = vunpack.c.l.b16 %v1644
    %v1859 = vunpack.c.h.b16 %v1644
    %v1860 = vunpack.c.l.b16 %v1645
    %v1861 = vunpack.c.h.b16 %v1645
    %v1862 = vunpack.c.l.b16 %v1646
    %v1863 = vunpack.c.h.b16 %v1646
    %v1864 = vunpack.c.l.b16 %v1647
    %v1865 = vunpack.c.h.b16 %v1647
    %v1866 = vunpack.c.l.b16 %v1648
    %v1867 = vunpack.c.h.b16 %v1648
    %v1868 = vunpack.c.l.b16 %v1649
    %v1869 = vunpack.c.h.b16 %v1649
    %v1870 = vunpack.c.l.b16 %v1650
    %v1871 = vunpack.c.h.b16 %v1650
    %v1872 = vunpack.c.l.b16 %v1651
    %v1873 = vunpack.c.h.b16 %v1651
    %v1874 = vunpack.c.l.b16 %v1652
    %v1875 = vunpack.c.h.b16 %v1652
    %v1876 = vunpack.c.l.b16 %v1653
    %v1877 = vunpack.c.h.b16 %v1653
    %v1878 = vunpack.c.l.b16 %v1654
    %v1879 = vunpack.c.h.b16 %v1654
    %v1880 = vunpack.c.l.b16 %v1655
    %v1881 = vunpack.c.h.b16 %v1655
    %v1882 = vunpack.c.l.b16 %v1656
    %v1883 = vunpack.c.h.b16 %v1656
    %v1884 = vunpack.c.l.b16 %v1657
    %v1885 = vunpack.c.h.b16 %v1657
    %v1886 = vunpack.c.l.b16 %v1658
    %v1887 = vunpack.c.h.b16 %v1658
    %v1888 = vunpack.c.l.b16 %v1659
    %v1889 = vunpack.c.h.b16 %v1659
    %v1890 = vunpack.c.l.b16 %v1660
    %v1891 = vunpack.c.h.b16 %v1660
    %v1892 = vunpack.c.l.b16 %v1661
    %v1893 = vunpack.c.h.b16 %v1661
    %v1894 = vpack.c.b16 %v1770, %v1766
    %v1895 = vpack.c.b16 %v1771, %v1767
    %v1896 = vpack.c.b16 %v1772, %v1768
    %v1897 = vpack.c.b16 %v1773, %v1769
    %v1898 = vpack.c.b16 %v1778, %v1774
    %v1899 = vpack.c.b16 %v1779, %v1775
    %v1900 = vpack.c.b16 %v1780, %v1776
    %v1901 = vpack.c.b16 %v1781, %v1777
    %v1902 = vpack.c.b16 %v1786, %v1782
    %v1903 = vpack.c.b16 %v1787, %v1783
    %v1904 = vpack.c.b16 %v1788, %v1784
    %v1905 = vpack.c.b16 %v1789, %v1785
    %v1906 = vpack.c.b16 %v1794, %v1790
    %v1907 = vpack.c.b16 %v1795, %v1791
    %v1908 = vpack.c.b16 %v1796, %v1792
    %v1909 = vpack.c.b16 %v1797, %v1793
    %v1910 = vpack.c.b16 %v1802, %v1798
    %v1911 = vpack.c.b16 %v1803, %v1799
    %v1912 = vpack.c.b16 %v1804, %v1800
    %v1913 = vpack.c.b16 %v1805, %v1801
    %v1914 = vpack.c.b16 %v1810, %v1806
    %v1915 = vpack.c.b16 %v1811, %v1807
    %v1916 = vpack.c.b16 %v1812, %v1808
    %v1917 = vpack.c.b16 %v1813, %v1809
    %v1918 = vpack.c.b16 %v1818, %v1814
    %v1919 = vpack.c.b16 %v1819, %v1815
    %v1920 = vpack.c.b16 %v1820, %v1816
    %v1921 = vpack.c.b16 %v1821, %v1817
    %v1922 = vpack.c.b16 %v1826, %v1822
    %v1923 = vpack.c.b16 %v1827, %v1823
    %v1924 = vpack.c.b16 %v1828, %v1824
    %v1925 = vpack.c.b16 %v1829, %v1825
    %v1926 = vpack.c.b16 %v1834, %v1830
    %v1927 = vpack.c.b16 %v1835, %v1831
    %v1928 = vpack.c.b16 %v1836, %v1832
    %v1929 = vpack.c.b16 %v1837, %v1833
    %v1930 = vpack.c.b16 %v1842, %v1838
    %v1931 = vpack.c.b16 %v1843, %v1839
    %v1932 = vpack.c.b16 %v1844, %v1840
    %v1933 = vpack.c.b16 %v1845, %v1841
    %v1934 = vpack.c.b16 %v1850, %v1846
    %v1935 = vpack.c.b16 %v1851, %v1847
    %v1936 = vpack.c.b16 %v1852, %v1848
    %v1937 = vpack.c.b16 %v1853, %v1849
    %v1938 = vpack.c.b16 %v1858, %v1854
    %v1939 = vpack.c.b16 %v1859, %v1855
    %v1940 = vpack.c.b16 %v1860, %v1856
    %v1941 = vpack.c.b16 %v1861, %v1857
    %v1942 = vpack.c.b16 %v1866, %v1862
    %v1943 = vpack.c.b16 %v1867, %v1863
    %v1944 = vpack.c.b16 %v1868, %v1864
    %v1945 = vpack.c.b16 %v1869, %v1865
    %v1946 = vpack.c.b16 %v1874, %v1870
    %v1947 = vpack.c.b16 %v1875, %v1871
    %v1948 = vpack.c.b16 %v1876, %v1872
    %v1949 = vpack.c.b16 %v1877, %v1873
    %v1950 = vpack.c.b16 %v1882, %v1878
    %v1951 = vpack.c.b16 %v1883, %v1879
    %v1952 = vpack.c.b16 %v1884, %v1880
    %v1953 = vpack.c.b16 %v1885, %v1881
    %v1954 = vpack.c.b16 %v1890, %v1886
    %v1955 = vpack.c.b16 %v1891, %v1887
    %v1956 = vpack.c.b16 %v1892, %v1888
    %v1957 = vpack.c.b16 %v1893, %v1889
    %2022 = vmatprep.subr.bf16.mxu0 %v1895
    %2023 = vmatpush1.bf16.msra.mxu0 %v1894
    %2024 = vmatprep.subr.bf16.mxu0 %v1899
    %2025 = vmatpush1.bf16.msra.mxu0 %v1898
    %2026 = vmatprep.subr.bf16.mxu0 %v1903
    %2027 = vmatpush1.bf16.msra.mxu0 %v1902
    %2028 = vmatprep.subr.bf16.mxu0 %v1907
    %2029 = vmatpush1.bf16.msra.mxu0 %v1906
    %2030 = vmatprep.subr.bf16.mxu0 %v1911
    %2031 = vmatpush1.bf16.msra.mxu0 %v1910
    %2032 = vmatprep.subr.bf16.mxu0 %v1915
    %2033 = vmatpush1.bf16.msra.mxu0 %v1914
    %2034 = vmatprep.subr.bf16.mxu0 %v1919
    %2035 = vmatpush1.bf16.msra.mxu0 %v1918
    %2036 = vmatprep.subr.bf16.mxu0 %v1923
    %2037 = vmatpush1.bf16.msra.mxu0 %v1922
    %2038 = vmatprep.subr.bf16.mxu0 %v1927
    %2039 = vmatpush1.bf16.msra.mxu0 %v1926
    %2040 = vmatprep.subr.bf16.mxu0 %v1931
    %2041 = vmatpush1.bf16.msra.mxu0 %v1930
    %2042 = vmatprep.subr.bf16.mxu0 %v1935
    %2043 = vmatpush1.bf16.msra.mxu0 %v1934
    %2044 = vmatprep.subr.bf16.mxu0 %v1939
    %2045 = vmatpush1.bf16.msra.mxu0 %v1938
    %2046 = vmatprep.subr.bf16.mxu0 %v1943
    %2047 = vmatpush1.bf16.msra.mxu0 %v1942
    %2048 = vmatprep.subr.bf16.mxu0 %v1947
    %2049 = vmatpush1.bf16.msra.mxu0 %v1946
    %2050 = vmatprep.subr.bf16.mxu0 %v1951
    %2051 = vmatpush1.bf16.msra.mxu0 %v1950
    %2052 = vmatprep.subr.bf16.mxu0 %v1955
    %2053 = vmatpush1.bf16.msra.mxu0 %v1954
    %2054 = vmatprep.mubr.bf16.mxu0 %v1687
    %2055 = vmatmul.mubr.bf16.gmra.mrb[0].mxu0 %v1686
    %v2056 = vpop.f32.mrb[0].mxu0
    %v2057 = vadd.f32 0.0, %v2056
    %v2058 = vpop.f32.mrb[0].mxu0
    %v2059 = vadd.f32 0.0, %v2058
    %v2060 = vpop.f32.mrb[0].mxu0
    %v2061 = vadd.f32 0.0, %v2060
    %v2062 = vpop.f32.mrb[0].mxu0
    %v2063 = vadd.f32 0.0, %v2062
    %2064 = vmatprep.mubr.bf16.mxu0 %v1689
    %2065 = vmatmul.mubr.bf16.gmra.mrb[0].mxu0 %v1688
    %v2066 = vpop.f32.mrb[0].mxu0
    %v2067 = vadd.f32 0.0, %v2066
    %v2068 = vpop.f32.mrb[0].mxu0
    %v2069 = vadd.f32 0.0, %v2068
    %v2070 = vpop.f32.mrb[0].mxu0
    %v2071 = vadd.f32 0.0, %v2070
    %v2072 = vpop.f32.mrb[0].mxu0
    %v2073 = vadd.f32 0.0, %v2072
    %2074 = vmatprep.mubr.bf16.mxu0 %v1691
    %2075 = vmatmul.mubr.bf16.gmra.mrb[0].mxu0 %v1690
    %v2076 = vpop.f32.mrb[0].mxu0
    %v2077 = vadd.f32 0.0, %v2076
    %v2078 = vpop.f32.mrb[0].mxu0
    %v2079 = vadd.f32 0.0, %v2078
    %v2080 = vpop.f32.mrb[0].mxu0
    %v2081 = vadd.f32 0.0, %v2080
    %v2082 = vpop.f32.mrb[0].mxu0
    %v2083 = vadd.f32 0.0, %v2082
    %2084 = vmatprep.mubr.bf16.mxu0 %v1693
    %2085 = vmatmul.mubr.bf16.gmra.mrb[0].mxu0 %v1692
    %v2086 = vpop.f32.mrb[0].mxu0
    %v2087 = vadd.f32 0.0, %v2086
    %v2088 = vpop.f32.mrb[0].mxu0
    %v2089 = vadd.f32 0.0, %v2088
    %v2090 = vpop.f32.mrb[0].mxu0
    %v2091 = vadd.f32 0.0, %v2090
    %v2092 = vpop.f32.mrb[0].mxu0
    %v2093 = vadd.f32 0.0, %v2092
    %2094 = vdwg.mxu0
    %2095 = vmatprep.subr.bf16.mxu0 %v1897
    %2096 = vmatpush1.bf16.msra.mxu0 %v1896
    %2097 = vmatprep.subr.bf16.mxu0 %v1901
    %2098 = vmatpush1.bf16.msra.mxu0 %v1900
    %2099 = vmatprep.subr.bf16.mxu0 %v1905
    %2100 = vmatpush1.bf16.msra.mxu0 %v1904
    %2101 = vmatprep.subr.bf16.mxu0 %v1909
    %2102 = vmatpush1.bf16.msra.mxu0 %v1908
    %2103 = vmatprep.subr.bf16.mxu0 %v1913
    %2104 = vmatpush1.bf16.msra.mxu0 %v1912
    %2105 = vmatprep.subr.bf16.mxu0 %v1917
    %2106 = vmatpush1.bf16.msra.mxu0 %v1916
    %2107 = vmatprep.subr.bf16.mxu0 %v1921
    %2108 = vmatpush1.bf16.msra.mxu0 %v1920
    %2109 = vmatprep.subr.bf16.mxu0 %v1925
    %2110 = vmatpush1.bf16.msra.mxu0 %v1924
    %2111 = vmatprep.subr.bf16.mxu0 %v1929
    %2112 = vmatpush1.bf16.msra.mxu0 %v1928
    %2113 = vmatprep.subr.bf16.mxu0 %v1933
    %2114 = vmatpush1.bf16.msra.mxu0 %v1932
    %2115 = vmatprep.subr.bf16.mxu0 %v1937
    %2116 = vmatpush1.bf16.msra.mxu0 %v1936
    %2117 = vmatprep.subr.bf16.mxu0 %v1941
    %2118 = vmatpush1.bf16.msra.mxu0 %v1940
    %2119 = vmatprep.subr.bf16.mxu0 %v1945
    %2120 = vmatpush1.bf16.msra.mxu0 %v1944
    %2121 = vmatprep.subr.bf16.mxu0 %v1949
    %2122 = vmatpush1.bf16.msra.mxu0 %v1948
    %2123 = vmatprep.subr.bf16.mxu0 %v1953
    %2124 = vmatpush1.bf16.msra.mxu0 %v1952
    %2125 = vmatprep.subr.bf16.mxu0 %v1957
    %2126 = vmatpush1.bf16.msra.mxu0 %v1956
    %2127 = vmatprep.mubr.bf16.mxu0 %v1687
    %2128 = vmatmul.mubr.bf16.gmra.mrb[0].mxu0 %v1686
    %v2129 = vpop.f32.mrb[0].mxu0
    %v2130 = vadd.f32 0.0, %v2129
    %v2131 = vpop.f32.mrb[0].mxu0
    %v2132 = vadd.f32 0.0, %v2131
    %v2133 = vpop.f32.mrb[0].mxu0
    %v2134 = vadd.f32 0.0, %v2133
    %v2135 = vpop.f32.mrb[0].mxu0
    %v2136 = vadd.f32 0.0, %v2135
    %2137 = vmatprep.mubr.bf16.mxu0 %v1689
    %2138 = vmatmul.mubr.bf16.gmra.mrb[0].mxu0 %v1688
    %v2139 = vpop.f32.mrb[0].mxu0
    %v2140 = vadd.f32 0.0, %v2139
    %v2141 = vpop.f32.mrb[0].mxu0
    %v2142 = vadd.f32 0.0, %v2141
    %v2143 = vpop.f32.mrb[0].mxu0
    %v2144 = vadd.f32 0.0, %v2143
    %v2145 = vpop.f32.mrb[0].mxu0
    %v2146 = vadd.f32 0.0, %v2145
    %2147 = vmatprep.mubr.bf16.mxu0 %v1691
    %2148 = vmatmul.mubr.bf16.gmra.mrb[0].mxu0 %v1690
    %v2149 = vpop.f32.mrb[0].mxu0
    %v2150 = vadd.f32 0.0, %v2149
    %v2151 = vpop.f32.mrb[0].mxu0
    %v2152 = vadd.f32 0.0, %v2151
    %v2153 = vpop.f32.mrb[0].mxu0
    %v2154 = vadd.f32 0.0, %v2153
    %v2155 = vpop.f32.mrb[0].mxu0
    %v2156 = vadd.f32 0.0, %v2155
    %2157 = vmatprep.mubr.bf16.mxu0 %v1693
    %2158 = vmatmul.mubr.bf16.gmra.mrb[0].mxu0 %v1692
    %v2159 = vpop.f32.mrb[0].mxu0
    %v2160 = vadd.f32 0.0, %v2159
    %v2161 = vpop.f32.mrb[0].mxu0
    %v2162 = vadd.f32 0.0, %v2161
    %v2163 = vpop.f32.mrb[0].mxu0
    %v2164 = vadd.f32 0.0, %v2163
    %v2165 = vpop.f32.mrb[0].mxu0
    %v2166 = vadd.f32 0.0, %v2165
    %2167 = vdwg.mxu0
    %v2176 = vunpack.c.l.b16 %v1517
    %v2177 = vunpack.c.h.b16 %v1517
    %v2178 = vunpack.c.l.b16 %v1518
    %v2179 = vunpack.c.h.b16 %v1518
    %v2180 = vunpack.c.l.b16 %v1519
    %v2181 = vunpack.c.h.b16 %v1519
    %v2182 = vunpack.c.l.b16 %v1520
    %v2183 = vunpack.c.h.b16 %v1520
    %v2184 = vunpack.c.l.b16 %v1521
    %v2185 = vunpack.c.h.b16 %v1521
    %v2186 = vunpack.c.l.b16 %v1522
    %v2187 = vunpack.c.h.b16 %v1522
    %v2188 = vunpack.c.l.b16 %v1523
    %v2189 = vunpack.c.h.b16 %v1523
    %v2190 = vunpack.c.l.b16 %v1524
    %v2191 = vunpack.c.h.b16 %v1524
    %v2192 = vpack.c.b16 %v2178, %v2176
    %v2193 = vpack.c.b16 %v2179, %v2177
    %v2194 = vpack.c.b16 %v2182, %v2180
    %v2195 = vpack.c.b16 %v2183, %v2181
    %v2196 = vpack.c.b16 %v2186, %v2184
    %v2197 = vpack.c.b16 %v2187, %v2185
    %v2198 = vpack.c.b16 %v2190, %v2188
    %v2199 = vpack.c.b16 %v2191, %v2189
    %v2272 = vunpack.c.l.b16 %v1525
    %v2273 = vunpack.c.h.b16 %v1525
    %v2274 = vunpack.c.l.b16 %v1526
    %v2275 = vunpack.c.h.b16 %v1526
    %v2276 = vunpack.c.l.b16 %v1527
    %v2277 = vunpack.c.h.b16 %v1527
    %v2278 = vunpack.c.l.b16 %v1528
    %v2279 = vunpack.c.h.b16 %v1528
    %v2280 = vunpack.c.l.b16 %v1529
    %v2281 = vunpack.c.h.b16 %v1529
    %v2282 = vunpack.c.l.b16 %v1530
    %v2283 = vunpack.c.h.b16 %v1530
    %v2284 = vunpack.c.l.b16 %v1531
    %v2285 = vunpack.c.h.b16 %v1531
    %v2286 = vunpack.c.l.b16 %v1532
    %v2287 = vunpack.c.h.b16 %v1532
    %v2288 = vunpack.c.l.b16 %v1533
    %v2289 = vunpack.c.h.b16 %v1533
    %v2290 = vunpack.c.l.b16 %v1534
    %v2291 = vunpack.c.h.b16 %v1534
    %v2292 = vunpack.c.l.b16 %v1535
    %v2293 = vunpack.c.h.b16 %v1535
    %v2294 = vunpack.c.l.b16 %v1536
    %v2295 = vunpack.c.h.b16 %v1536
    %v2296 = vunpack.c.l.b16 %v1537
    %v2297 = vunpack.c.h.b16 %v1537
    %v2298 = vunpack.c.l.b16 %v1538
    %v2299 = vunpack.c.h.b16 %v1538
    %v2300 = vunpack.c.l.b16 %v1539
    %v2301 = vunpack.c.h.b16 %v1539
    %v2302 = vunpack.c.l.b16 %v1540
    %v2303 = vunpack.c.h.b16 %v1540
    %v2304 = vunpack.c.l.b16 %v1541
    %v2305 = vunpack.c.h.b16 %v1541
    %v2306 = vunpack.c.l.b16 %v1542
    %v2307 = vunpack.c.h.b16 %v1542
    %v2308 = vunpack.c.l.b16 %v1543
    %v2309 = vunpack.c.h.b16 %v1543
    %v2310 = vunpack.c.l.b16 %v1544
    %v2311 = vunpack.c.h.b16 %v1544
    %v2312 = vunpack.c.l.b16 %v1545
    %v2313 = vunpack.c.h.b16 %v1545
    %v2314 = vunpack.c.l.b16 %v1546
    %v2315 = vunpack.c.h.b16 %v1546
    %v2316 = vunpack.c.l.b16 %v1547
    %v2317 = vunpack.c.h.b16 %v1547
    %v2318 = vunpack.c.l.b16 %v1548
    %v2319 = vunpack.c.h.b16 %v1548
    %v2320 = vunpack.c.l.b16 %v1549
    %v2321 = vunpack.c.h.b16 %v1549
    %v2322 = vunpack.c.l.b16 %v1550
    %v2323 = vunpack.c.h.b16 %v1550
    %v2324 = vunpack.c.l.b16 %v1551
    %v2325 = vunpack.c.h.b16 %v1551
    %v2326 = vunpack.c.l.b16 %v1552
    %v2327 = vunpack.c.h.b16 %v1552
    %v2328 = vunpack.c.l.b16 %v1553
    %v2329 = vunpack.c.h.b16 %v1553
    %v2330 = vunpack.c.l.b16 %v1554
    %v2331 = vunpack.c.h.b16 %v1554
    %v2332 = vunpack.c.l.b16 %v1555
    %v2333 = vunpack.c.h.b16 %v1555
    %v2334 = vunpack.c.l.b16 %v1556
    %v2335 = vunpack.c.h.b16 %v1556
    %v2336 = vunpack.c.l.b16 %v1557
    %v2337 = vunpack.c.h.b16 %v1557
    %v2338 = vunpack.c.l.b16 %v1558
    %v2339 = vunpack.c.h.b16 %v1558
    %v2340 = vunpack.c.l.b16 %v1559
    %v2341 = vunpack.c.h.b16 %v1559
    %v2342 = vunpack.c.l.b16 %v1560
    %v2343 = vunpack.c.h.b16 %v1560
    %v2344 = vunpack.c.l.b16 %v1561
    %v2345 = vunpack.c.h.b16 %v1561
    %v2346 = vunpack.c.l.b16 %v1562
    %v2347 = vunpack.c.h.b16 %v1562
    %v2348 = vunpack.c.l.b16 %v1563
    %v2349 = vunpack.c.h.b16 %v1563
    %v2350 = vunpack.c.l.b16 %v1564
    %v2351 = vunpack.c.h.b16 %v1564
    %v2352 = vunpack.c.l.b16 %v1565
    %v2353 = vunpack.c.h.b16 %v1565
    %v2354 = vunpack.c.l.b16 %v1566
    %v2355 = vunpack.c.h.b16 %v1566
    %v2356 = vunpack.c.l.b16 %v1567
    %v2357 = vunpack.c.h.b16 %v1567
    %v2358 = vunpack.c.l.b16 %v1568
    %v2359 = vunpack.c.h.b16 %v1568
    %v2360 = vunpack.c.l.b16 %v1569
    %v2361 = vunpack.c.h.b16 %v1569
    %v2362 = vunpack.c.l.b16 %v1570
    %v2363 = vunpack.c.h.b16 %v1570
    %v2364 = vunpack.c.l.b16 %v1571
    %v2365 = vunpack.c.h.b16 %v1571
    %v2366 = vunpack.c.l.b16 %v1572
    %v2367 = vunpack.c.h.b16 %v1572
    %v2368 = vunpack.c.l.b16 %v1573
    %v2369 = vunpack.c.h.b16 %v1573
    %v2370 = vunpack.c.l.b16 %v1574
    %v2371 = vunpack.c.h.b16 %v1574
    %v2372 = vunpack.c.l.b16 %v1575
    %v2373 = vunpack.c.h.b16 %v1575
    %v2374 = vunpack.c.l.b16 %v1576
    %v2375 = vunpack.c.h.b16 %v1576
    %v2376 = vunpack.c.l.b16 %v1577
    %v2377 = vunpack.c.h.b16 %v1577
    %v2378 = vunpack.c.l.b16 %v1578
    %v2379 = vunpack.c.h.b16 %v1578
    %v2380 = vunpack.c.l.b16 %v1579
    %v2381 = vunpack.c.h.b16 %v1579
    %v2382 = vunpack.c.l.b16 %v1580
    %v2383 = vunpack.c.h.b16 %v1580
    %v2384 = vunpack.c.l.b16 %v1581
    %v2385 = vunpack.c.h.b16 %v1581
    %v2386 = vunpack.c.l.b16 %v1582
    %v2387 = vunpack.c.h.b16 %v1582
    %v2388 = vunpack.c.l.b16 %v1583
    %v2389 = vunpack.c.h.b16 %v1583
    %v2390 = vunpack.c.l.b16 %v1584
    %v2391 = vunpack.c.h.b16 %v1584
    %v2392 = vunpack.c.l.b16 %v1585
    %v2393 = vunpack.c.h.b16 %v1585
    %v2394 = vunpack.c.l.b16 %v1586
    %v2395 = vunpack.c.h.b16 %v1586
    %v2396 = vunpack.c.l.b16 %v1587
    %v2397 = vunpack.c.h.b16 %v1587
    %v2398 = vunpack.c.l.b16 %v1588
    %v2399 = vunpack.c.h.b16 %v1588
    %v2400 = vpack.c.b16 %v2276, %v2272
    %v2401 = vpack.c.b16 %v2277, %v2273
    %v2402 = vpack.c.b16 %v2278, %v2274
    %v2403 = vpack.c.b16 %v2279, %v2275
    %v2404 = vpack.c.b16 %v2284, %v2280
    %v2405 = vpack.c.b16 %v2285, %v2281
    %v2406 = vpack.c.b16 %v2286, %v2282
    %v2407 = vpack.c.b16 %v2287, %v2283
    %v2408 = vpack.c.b16 %v2292, %v2288
    %v2409 = vpack.c.b16 %v2293, %v2289
    %v2410 = vpack.c.b16 %v2294, %v2290
    %v2411 = vpack.c.b16 %v2295, %v2291
    %v2412 = vpack.c.b16 %v2300, %v2296
    %v2413 = vpack.c.b16 %v2301, %v2297
    %v2414 = vpack.c.b16 %v2302, %v2298
    %v2415 = vpack.c.b16 %v2303, %v2299
    %v2416 = vpack.c.b16 %v2308, %v2304
    %v2417 = vpack.c.b16 %v2309, %v2305
    %v2418 = vpack.c.b16 %v2310, %v2306
    %v2419 = vpack.c.b16 %v2311, %v2307
    %v2420 = vpack.c.b16 %v2316, %v2312
    %v2421 = vpack.c.b16 %v2317, %v2313
    %v2422 = vpack.c.b16 %v2318, %v2314
    %v2423 = vpack.c.b16 %v2319, %v2315
    %v2424 = vpack.c.b16 %v2324, %v2320
    %v2425 = vpack.c.b16 %v2325, %v2321
    %v2426 = vpack.c.b16 %v2326, %v2322
    %v2427 = vpack.c.b16 %v2327, %v2323
    %v2428 = vpack.c.b16 %v2332, %v2328
    %v2429 = vpack.c.b16 %v2333, %v2329
    %v2430 = vpack.c.b16 %v2334, %v2330
    %v2431 = vpack.c.b16 %v2335, %v2331
    %v2432 = vpack.c.b16 %v2340, %v2336
    %v2433 = vpack.c.b16 %v2341, %v2337
    %v2434 = vpack.c.b16 %v2342, %v2338
    %v2435 = vpack.c.b16 %v2343, %v2339
    %v2436 = vpack.c.b16 %v2348, %v2344
    %v2437 = vpack.c.b16 %v2349, %v2345
    %v2438 = vpack.c.b16 %v2350, %v2346
    %v2439 = vpack.c.b16 %v2351, %v2347
    %v2440 = vpack.c.b16 %v2356, %v2352
    %v2441 = vpack.c.b16 %v2357, %v2353
    %v2442 = vpack.c.b16 %v2358, %v2354
    %v2443 = vpack.c.b16 %v2359, %v2355
    %v2444 = vpack.c.b16 %v2364, %v2360
    %v2445 = vpack.c.b16 %v2365, %v2361
    %v2446 = vpack.c.b16 %v2366, %v2362
    %v2447 = vpack.c.b16 %v2367, %v2363
    %v2448 = vpack.c.b16 %v2372, %v2368
    %v2449 = vpack.c.b16 %v2373, %v2369
    %v2450 = vpack.c.b16 %v2374, %v2370
    %v2451 = vpack.c.b16 %v2375, %v2371
    %v2452 = vpack.c.b16 %v2380, %v2376
    %v2453 = vpack.c.b16 %v2381, %v2377
    %v2454 = vpack.c.b16 %v2382, %v2378
    %v2455 = vpack.c.b16 %v2383, %v2379
    %v2456 = vpack.c.b16 %v2388, %v2384
    %v2457 = vpack.c.b16 %v2389, %v2385
    %v2458 = vpack.c.b16 %v2390, %v2386
    %v2459 = vpack.c.b16 %v2391, %v2387
    %v2460 = vpack.c.b16 %v2396, %v2392
    %v2461 = vpack.c.b16 %v2397, %v2393
    %v2462 = vpack.c.b16 %v2398, %v2394
    %v2463 = vpack.c.b16 %v2399, %v2395
    %2528 = vmatprep.subr.bf16.mxu0 %v2401
    %2529 = vmatpush1.bf16.msra.mxu0 %v2400
    %2530 = vmatprep.subr.bf16.mxu0 %v2405
    %2531 = vmatpush1.bf16.msra.mxu0 %v2404
    %2532 = vmatprep.subr.bf16.mxu0 %v2409
    %2533 = vmatpush1.bf16.msra.mxu0 %v2408
    %2534 = vmatprep.subr.bf16.mxu0 %v2413
    %2535 = vmatpush1.bf16.msra.mxu0 %v2412
    %2536 = vmatprep.subr.bf16.mxu0 %v2417
    %2537 = vmatpush1.bf16.msra.mxu0 %v2416
    %2538 = vmatprep.subr.bf16.mxu0 %v2421
    %2539 = vmatpush1.bf16.msra.mxu0 %v2420
    %2540 = vmatprep.subr.bf16.mxu0 %v2425
    %2541 = vmatpush1.bf16.msra.mxu0 %v2424
    %2542 = vmatprep.subr.bf16.mxu0 %v2429
    %2543 = vmatpush1.bf16.msra.mxu0 %v2428
    %2544 = vmatprep.subr.bf16.mxu0 %v2433
    %2545 = vmatpush1.bf16.msra.mxu0 %v2432
    %2546 = vmatprep.subr.bf16.mxu0 %v2437
    %2547 = vmatpush1.bf16.msra.mxu0 %v2436
    %2548 = vmatprep.subr.bf16.mxu0 %v2441
    %2549 = vmatpush1.bf16.msra.mxu0 %v2440
    %2550 = vmatprep.subr.bf16.mxu0 %v2445
    %2551 = vmatpush1.bf16.msra.mxu0 %v2444
    %2552 = vmatprep.subr.bf16.mxu0 %v2449
    %2553 = vmatpush1.bf16.msra.mxu0 %v2448
    %2554 = vmatprep.subr.bf16.mxu0 %v2453
    %2555 = vmatpush1.bf16.msra.mxu0 %v2452
    %2556 = vmatprep.subr.bf16.mxu0 %v2457
    %2557 = vmatpush1.bf16.msra.mxu0 %v2456
    %2558 = vmatprep.subr.bf16.mxu0 %v2461
    %2559 = vmatpush1.bf16.msra.mxu0 %v2460
    %2560 = vmatprep.mubr.bf16.mxu0 %v2193
    %2561 = vmatmul.mubr.bf16.gmra.mrb[0].mxu0 %v2192
    %v2562 = vpop.f32.mrb[0].mxu0
    %v2563 = vadd.f32 %v2057, %v2562
    %v2564 = vpop.f32.mrb[0].mxu0
    %v2565 = vadd.f32 %v2059, %v2564
    %v2566 = vpop.f32.mrb[0].mxu0
    %v2567 = vadd.f32 %v2061, %v2566
    %v2568 = vpop.f32.mrb[0].mxu0
    %v2569 = vadd.f32 %v2063, %v2568
    %2570 = vmatprep.mubr.bf16.mxu0 %v2195
    %2571 = vmatmul.mubr.bf16.gmra.mrb[0].mxu0 %v2194
    %v2572 = vpop.f32.mrb[0].mxu0
    %v2573 = vadd.f32 %v2067, %v2572
    %v2574 = vpop.f32.mrb[0].mxu0
    %v2575 = vadd.f32 %v2069, %v2574
    %v2576 = vpop.f32.mrb[0].mxu0
    %v2577 = vadd.f32 %v2071, %v2576
    %v2578 = vpop.f32.mrb[0].mxu0
    %v2579 = vadd.f32 %v2073, %v2578
    %2580 = vmatprep.mubr.bf16.mxu0 %v2197
    %2581 = vmatmul.mubr.bf16.gmra.mrb[0].mxu0 %v2196
    %v2582 = vpop.f32.mrb[0].mxu0
    %v2583 = vadd.f32 %v2077, %v2582
    %v2584 = vpop.f32.mrb[0].mxu0
    %v2585 = vadd.f32 %v2079, %v2584
    %v2586 = vpop.f32.mrb[0].mxu0
    %v2587 = vadd.f32 %v2081, %v2586
    %v2588 = vpop.f32.mrb[0].mxu0
    %v2589 = vadd.f32 %v2083, %v2588
    %2590 = vmatprep.mubr.bf16.mxu0 %v2199
    %2591 = vmatmul.mubr.bf16.gmra.mrb[0].mxu0 %v2198
    %v2592 = vpop.f32.mrb[0].mxu0
    %v2593 = vadd.f32 %v2087, %v2592
    %v2594 = vpop.f32.mrb[0].mxu0
    %v2595 = vadd.f32 %v2089, %v2594
    %v2596 = vpop.f32.mrb[0].mxu0
    %v2597 = vadd.f32 %v2091, %v2596
    %v2598 = vpop.f32.mrb[0].mxu0
    %v2599 = vadd.f32 %v2093, %v2598
    %2600 = vdwg.mxu0
    %2601 = vmatprep.subr.bf16.mxu0 %v2403
    %2602 = vmatpush1.bf16.msra.mxu0 %v2402
    %2603 = vmatprep.subr.bf16.mxu0 %v2407
    %2604 = vmatpush1.bf16.msra.mxu0 %v2406
    %2605 = vmatprep.subr.bf16.mxu0 %v2411
    %2606 = vmatpush1.bf16.msra.mxu0 %v2410
    %2607 = vmatprep.subr.bf16.mxu0 %v2415
    %2608 = vmatpush1.bf16.msra.mxu0 %v2414
    %2609 = vmatprep.subr.bf16.mxu0 %v2419
    %2610 = vmatpush1.bf16.msra.mxu0 %v2418
    %2611 = vmatprep.subr.bf16.mxu0 %v2423
    %2612 = vmatpush1.bf16.msra.mxu0 %v2422
    %2613 = vmatprep.subr.bf16.mxu0 %v2427
    %2614 = vmatpush1.bf16.msra.mxu0 %v2426
    %2615 = vmatprep.subr.bf16.mxu0 %v2431
    %2616 = vmatpush1.bf16.msra.mxu0 %v2430
    %2617 = vmatprep.subr.bf16.mxu0 %v2435
    %2618 = vmatpush1.bf16.msra.mxu0 %v2434
    %2619 = vmatprep.subr.bf16.mxu0 %v2439
    %2620 = vmatpush1.bf16.msra.mxu0 %v2438
    %2621 = vmatprep.subr.bf16.mxu0 %v2443
    %2622 = vmatpush1.bf16.msra.mxu0 %v2442
    %2623 = vmatprep.subr.bf16.mxu0 %v2447
    %2624 = vmatpush1.bf16.msra.mxu0 %v2446
    %2625 = vmatprep.subr.bf16.mxu0 %v2451
    %2626 = vmatpush1.bf16.msra.mxu0 %v2450
    %2627 = vmatprep.subr.bf16.mxu0 %v2455
    %2628 = vmatpush1.bf16.msra.mxu0 %v2454
    %2629 = vmatprep.subr.bf16.mxu0 %v2459
    %2630 = vmatpush1.bf16.msra.mxu0 %v2458
    %2631 = vmatprep.subr.bf16.mxu0 %v2463
    %2632 = vmatpush1.bf16.msra.mxu0 %v2462
    %2633 = vmatprep.mubr.bf16.mxu0 %v2193
    %2634 = vmatmul.mubr.bf16.gmra.mrb[0].mxu0 %v2192
    %v2635 = vpop.f32.mrb[0].mxu0
    %v2636 = vadd.f32 %v2130, %v2635
    %v2637 = vpop.f32.mrb[0].mxu0
    %v2638 = vadd.f32 %v2132, %v2637
    %v2639 = vpop.f32.mrb[0].mxu0
    %v2640 = vadd.f32 %v2134, %v2639
    %v2641 = vpop.f32.mrb[0].mxu0
    %v2642 = vadd.f32 %v2136, %v2641
    %2643 = vmatprep.mubr.bf16.mxu0 %v2195
    %2644 = vmatmul.mubr.bf16.gmra.mrb[0].mxu0 %v2194
    %v2645 = vpop.f32.mrb[0].mxu0
    %v2646 = vadd.f32 %v2140, %v2645
    %v2647 = vpop.f32.mrb[0].mxu0
    %v2648 = vadd.f32 %v2142, %v2647
    %v2649 = vpop.f32.mrb[0].mxu0
    %v2650 = vadd.f32 %v2144, %v2649
    %v2651 = vpop.f32.mrb[0].mxu0
    %v2652 = vadd.f32 %v2146, %v2651
    %2653 = vmatprep.mubr.bf16.mxu0 %v2197
    %2654 = vmatmul.mubr.bf16.gmra.mrb[0].mxu0 %v2196
    %v2655 = vpop.f32.mrb[0].mxu0
    %v2656 = vadd.f32 %v2150, %v2655
    %v2657 = vpop.f32.mrb[0].mxu0
    %v2658 = vadd.f32 %v2152, %v2657
    %v2659 = vpop.f32.mrb[0].mxu0
    %v2660 = vadd.f32 %v2154, %v2659
    %v2661 = vpop.f32.mrb[0].mxu0
    %v2662 = vadd.f32 %v2156, %v2661
    %2663 = vmatprep.mubr.bf16.mxu0 %v2199
    %2664 = vmatmul.mubr.bf16.gmra.mrb[0].mxu0 %v2198
    %v2665 = vpop.f32.mrb[0].mxu0
    %v2666 = vadd.f32 %v2160, %v2665
    %v2667 = vpop.f32.mrb[0].mxu0
    %v2668 = vadd.f32 %v2162, %v2667
    %v2669 = vpop.f32.mrb[0].mxu0
    %v2670 = vadd.f32 %v2164, %v2669
    %v2671 = vpop.f32.mrb[0].mxu0
    %v2672 = vadd.f32 %v2166, %v2671
    %2673 = vdwg.mxu0
    %s2674 = scalar_lea.vmem [#allocation3], 16
    %v2675 = vld [vmem:[%s2674] sm:$0xff]
    %v2676 = vld [vmem:[%s2674 + $0x8] sm:$0xff]
    %v2677 = vld [vmem:[%s2674 + $0x10] sm:$0xff]
    %v2678 = vld [vmem:[%s2674 + $0x18] sm:$0xff]
    %v2679 = vld [vmem:[%s2674 + $0x20] sm:$0xff]
    %v2680 = vld [vmem:[%s2674 + $0x28] sm:$0xff]
    %v2681 = vld [vmem:[%s2674 + $0x30] sm:$0xff]
    %v2682 = vld [vmem:[%s2674 + $0x38] sm:$0xff]
    %s2683 = scalar_lea.vmem [#allocation5], 1024
    %v2684 = vld [vmem:[%s2683] sm:$0xff]
    %v2685 = vld [vmem:[%s2683 + $0x8] sm:$0xff]
    %v2686 = vld [vmem:[%s2683 + $0x10] sm:$0xff]
    %v2687 = vld [vmem:[%s2683 + $0x18] sm:$0xff]
    %v2688 = vld [vmem:[%s2683 + $0x20] sm:$0xff]
    %v2689 = vld [vmem:[%s2683 + $0x28] sm:$0xff]
    %v2690 = vld [vmem:[%s2683 + $0x30] sm:$0xff]
    %v2691 = vld [vmem:[%s2683 + $0x38] sm:$0xff]
    %v2692 = vld [vmem:[%s2683 + $0x40] sm:$0xff]
    %v2693 = vld [vmem:[%s2683 + $0x48] sm:$0xff]
    %v2694 = vld [vmem:[%s2683 + $0x50] sm:$0xff]
    %v2695 = vld [vmem:[%s2683 + $0x58] sm:$0xff]
    %v2696 = vld [vmem:[%s2683 + $0x60] sm:$0xff]
    %v2697 = vld [vmem:[%s2683 + $0x68] sm:$0xff]
    %v2698 = vld [vmem:[%s2683 + $0x70] sm:$0xff]
    %v2699 = vld [vmem:[%s2683 + $0x78] sm:$0xff]
    %v2700 = vld [vmem:[%s2683 + $0x80] sm:$0xff]
    %v2701 = vld [vmem:[%s2683 + $0x88] sm:$0xff]
    %v2702 = vld [vmem:[%s2683 + $0x90] sm:$0xff]
    %v2703 = vld [vmem:[%s2683 + $0x98] sm:$0xff]
    %v2704 = vld [vmem:[%s2683 + $0xa0] sm:$0xff]
    %v2705 = vld [vmem:[%s2683 + $0xa8] sm:$0xff]
    %v2706 = vld [vmem:[%s2683 + $0xb0] sm:$0xff]
    %v2707 = vld [vmem:[%s2683 + $0xb8] sm:$0xff]
    %v2708 = vld [vmem:[%s2683 + $0xc0] sm:$0xff]
    %v2709 = vld [vmem:[%s2683 + $0xc8] sm:$0xff]
    %v2710 = vld [vmem:[%s2683 + $0xd0] sm:$0xff]
    %v2711 = vld [vmem:[%s2683 + $0xd8] sm:$0xff]
    %v2712 = vld [vmem:[%s2683 + $0xe0] sm:$0xff]
    %v2713 = vld [vmem:[%s2683 + $0xe8] sm:$0xff]
    %v2714 = vld [vmem:[%s2683 + $0xf0] sm:$0xff]
    %v2715 = vld [vmem:[%s2683 + $0xf8] sm:$0xff]
    %v2716 = vld [vmem:[%s2683 + $0x100] sm:$0xff]
    %v2717 = vld [vmem:[%s2683 + $0x108] sm:$0xff]
    %v2718 = vld [vmem:[%s2683 + $0x110] sm:$0xff]
    %v2719 = vld [vmem:[%s2683 + $0x118] sm:$0xff]
    %v2720 = vld [vmem:[%s2683 + $0x120] sm:$0xff]
    %v2721 = vld [vmem:[%s2683 + $0x128] sm:$0xff]
    %v2722 = vld [vmem:[%s2683 + $0x130] sm:$0xff]
    %v2723 = vld [vmem:[%s2683 + $0x138] sm:$0xff]
    %v2724 = vld [vmem:[%s2683 + $0x140] sm:$0xff]
    %v2725 = vld [vmem:[%s2683 + $0x148] sm:$0xff]
    %v2726 = vld [vmem:[%s2683 + $0x150] sm:$0xff]
    %v2727 = vld [vmem:[%s2683 + $0x158] sm:$0xff]
    %v2728 = vld [vmem:[%s2683 + $0x160] sm:$0xff]
    %v2729 = vld [vmem:[%s2683 + $0x168] sm:$0xff]
    %v2730 = vld [vmem:[%s2683 + $0x170] sm:$0xff]
    %v2731 = vld [vmem:[%s2683 + $0x178] sm:$0xff]
    %v2732 = vld [vmem:[%s2683 + $0x180] sm:$0xff]
    %v2733 = vld [vmem:[%s2683 + $0x188] sm:$0xff]
    %v2734 = vld [vmem:[%s2683 + $0x190] sm:$0xff]
    %v2735 = vld [vmem:[%s2683 + $0x198] sm:$0xff]
    %v2736 = vld [vmem:[%s2683 + $0x1a0] sm:$0xff]
    %v2737 = vld [vmem:[%s2683 + $0x1a8] sm:$0xff]
    %v2738 = vld [vmem:[%s2683 + $0x1b0] sm:$0xff]
    %v2739 = vld [vmem:[%s2683 + $0x1b8] sm:$0xff]
    %v2740 = vld [vmem:[%s2683 + $0x1c0] sm:$0xff]
    %v2741 = vld [vmem:[%s2683 + $0x1c8] sm:$0xff]
    %v2742 = vld [vmem:[%s2683 + $0x1d0] sm:$0xff]
    %v2743 = vld [vmem:[%s2683 + $0x1d8] sm:$0xff]
    %v2744 = vld [vmem:[%s2683 + $0x1e0] sm:$0xff]
    %v2745 = vld [vmem:[%s2683 + $0x1e8] sm:$0xff]
    %v2746 = vld [vmem:[%s2683 + $0x1f0] sm:$0xff]
    %v2747 = vld [vmem:[%s2683 + $0x1f8] sm:$0xff]
    %v2756 = vunpack.c.l.b16 %v2675
    %v2757 = vunpack.c.h.b16 %v2675
    %v2758 = vunpack.c.l.b16 %v2676
    %v2759 = vunpack.c.h.b16 %v2676
    %v2760 = vunpack.c.l.b16 %v2677
    %v2761 = vunpack.c.h.b16 %v2677
    %v2762 = vunpack.c.l.b16 %v2678
    %v2763 = vunpack.c.h.b16 %v2678
    %v2764 = vunpack.c.l.b16 %v2679
    %v2765 = vunpack.c.h.b16 %v2679
    %v2766 = vunpack.c.l.b16 %v2680
    %v2767 = vunpack.c.h.b16 %v2680
    %v2768 = vunpack.c.l.b16 %v2681
    %v2769 = vunpack.c.h.b16 %v2681
    %v2770 = vunpack.c.l.b16 %v2682
    %v2771 = vunpack.c.h.b16 %v2682
    %v2772 = vpack.c.b16 %v2758, %v2756
    %v2773 = vpack.c.b16 %v2759, %v2757
    %v2774 = vpack.c.b16 %v2762, %v2760
    %v2775 = vpack.c.b16 %v2763, %v2761
    %v2776 = vpack.c.b16 %v2766, %v2764
    %v2777 = vpack.c.b16 %v2767, %v2765
    %v2778 = vpack.c.b16 %v2770, %v2768
    %v2779 = vpack.c.b16 %v2771, %v2769
    %v2852 = vunpack.c.l.b16 %v2684
    %v2853 = vunpack.c.h.b16 %v2684
    %v2854 = vunpack.c.l.b16 %v2685
    %v2855 = vunpack.c.h.b16 %v2685
    %v2856 = vunpack.c.l.b16 %v2686
    %v2857 = vunpack.c.h.b16 %v2686
    %v2858 = vunpack.c.l.b16 %v2687
    %v2859 = vunpack.c.h.b16 %v2687
    %v2860 = vunpack.c.l.b16 %v2688
    %v2861 = vunpack.c.h.b16 %v2688
    %v2862 = vunpack.c.l.b16 %v2689
    %v2863 = vunpack.c.h.b16 %v2689
    %v2864 = vunpack.c.l.b16 %v2690
    %v2865 = vunpack.c.h.b16 %v2690
    %v2866 = vunpack.c.l.b16 %v2691
    %v2867 = vunpack.c.h.b16 %v2691
    %v2868 = vunpack.c.l.b16 %v2692
    %v2869 = vunpack.c.h.b16 %v2692
    %v2870 = vunpack.c.l.b16 %v2693
    %v2871 = vunpack.c.h.b16 %v2693
    %v2872 = vunpack.c.l.b16 %v2694
    %v2873 = vunpack.c.h.b16 %v2694
    %v2874 = vunpack.c.l.b16 %v2695
    %v2875 = vunpack.c.h.b16 %v2695
    %v2876 = vunpack.c.l.b16 %v2696
    %v2877 = vunpack.c.h.b16 %v2696
    %v2878 = vunpack.c.l.b16 %v2697
    %v2879 = vunpack.c.h.b16 %v2697
    %v2880 = vunpack.c.l.b16 %v2698
    %v2881 = vunpack.c.h.b16 %v2698
    %v2882 = vunpack.c.l.b16 %v2699
    %v2883 = vunpack.c.h.b16 %v2699
    %v2884 = vunpack.c.l.b16 %v2700
    %v2885 = vunpack.c.h.b16 %v2700
    %v2886 = vunpack.c.l.b16 %v2701
    %v2887 = vunpack.c.h.b16 %v2701
    %v2888 = vunpack.c.l.b16 %v2702
    %v2889 = vunpack.c.h.b16 %v2702
    %v2890 = vunpack.c.l.b16 %v2703
    %v2891 = vunpack.c.h.b16 %v2703
    %v2892 = vunpack.c.l.b16 %v2704
    %v2893 = vunpack.c.h.b16 %v2704
    %v2894 = vunpack.c.l.b16 %v2705
    %v2895 = vunpack.c.h.b16 %v2705
    %v2896 = vunpack.c.l.b16 %v2706
    %v2897 = vunpack.c.h.b16 %v2706
    %v2898 = vunpack.c.l.b16 %v2707
    %v2899 = vunpack.c.h.b16 %v2707
    %v2900 = vunpack.c.l.b16 %v2708
    %v2901 = vunpack.c.h.b16 %v2708
    %v2902 = vunpack.c.l.b16 %v2709
    %v2903 = vunpack.c.h.b16 %v2709
    %v2904 = vunpack.c.l.b16 %v2710
    %v2905 = vunpack.c.h.b16 %v2710
    %v2906 = vunpack.c.l.b16 %v2711
    %v2907 = vunpack.c.h.b16 %v2711
    %v2908 = vunpack.c.l.b16 %v2712
    %v2909 = vunpack.c.h.b16 %v2712
    %v2910 = vunpack.c.l.b16 %v2713
    %v2911 = vunpack.c.h.b16 %v2713
    %v2912 = vunpack.c.l.b16 %v2714
    %v2913 = vunpack.c.h.b16 %v2714
    %v2914 = vunpack.c.l.b16 %v2715
    %v2915 = vunpack.c.h.b16 %v2715
    %v2916 = vunpack.c.l.b16 %v2716
    %v2917 = vunpack.c.h.b16 %v2716
    %v2918 = vunpack.c.l.b16 %v2717
    %v2919 = vunpack.c.h.b16 %v2717
    %v2920 = vunpack.c.l.b16 %v2718
    %v2921 = vunpack.c.h.b16 %v2718
    %v2922 = vunpack.c.l.b16 %v2719
    %v2923 = vunpack.c.h.b16 %v2719
    %v2924 = vunpack.c.l.b16 %v2720
    %v2925 = vunpack.c.h.b16 %v2720
    %v2926 = vunpack.c.l.b16 %v2721
    %v2927 = vunpack.c.h.b16 %v2721
    %v2928 = vunpack.c.l.b16 %v2722
    %v2929 = vunpack.c.h.b16 %v2722
    %v2930 = vunpack.c.l.b16 %v2723
    %v2931 = vunpack.c.h.b16 %v2723
    %v2932 = vunpack.c.l.b16 %v2724
    %v2933 = vunpack.c.h.b16 %v2724
    %v2934 = vunpack.c.l.b16 %v2725
    %v2935 = vunpack.c.h.b16 %v2725
    %v2936 = vunpack.c.l.b16 %v2726
    %v2937 = vunpack.c.h.b16 %v2726
    %v2938 = vunpack.c.l.b16 %v2727
    %v2939 = vunpack.c.h.b16 %v2727
    %v2940 = vunpack.c.l.b16 %v2728
    %v2941 = vunpack.c.h.b16 %v2728
    %v2942 = vunpack.c.l.b16 %v2729
    %v2943 = vunpack.c.h.b16 %v2729
    %v2944 = vunpack.c.l.b16 %v2730
    %v2945 = vunpack.c.h.b16 %v2730
    %v2946 = vunpack.c.l.b16 %v2731
    %v2947 = vunpack.c.h.b16 %v2731
    %v2948 = vunpack.c.l.b16 %v2732
    %v2949 = vunpack.c.h.b16 %v2732
    %v2950 = vunpack.c.l.b16 %v2733
    %v2951 = vunpack.c.h.b16 %v2733
    %v2952 = vunpack.c.l.b16 %v2734
    %v2953 = vunpack.c.h.b16 %v2734
    %v2954 = vunpack.c.l.b16 %v2735
    %v2955 = vunpack.c.h.b16 %v2735
    %v2956 = vunpack.c.l.b16 %v2736
    %v2957 = vunpack.c.h.b16 %v2736
    %v2958 = vunpack.c.l.b16 %v2737
    %v2959 = vunpack.c.h.b16 %v2737
    %v2960 = vunpack.c.l.b16 %v2738
    %v2961 = vunpack.c.h.b16 %v2738
    %v2962 = vunpack.c.l.b16 %v2739
    %v2963 = vunpack.c.h.b16 %v2739
    %v2964 = vunpack.c.l.b16 %v2740
    %v2965 = vunpack.c.h.b16 %v2740
    %v2966 = vunpack.c.l.b16 %v2741
    %v2967 = vunpack.c.h.b16 %v2741
    %v2968 = vunpack.c.l.b16 %v2742
    %v2969 = vunpack.c.h.b16 %v2742
    %v2970 = vunpack.c.l.b16 %v2743
    %v2971 = vunpack.c.h.b16 %v2743
    %v2972 = vunpack.c.l.b16 %v2744
    %v2973 = vunpack.c.h.b16 %v2744
    %v2974 = vunpack.c.l.b16 %v2745
    %v2975 = vunpack.c.h.b16 %v2745
    %v2976 = vunpack.c.l.b16 %v2746
    %v2977 = vunpack.c.h.b16 %v2746
    %v2978 = vunpack.c.l.b16 %v2747
    %v2979 = vunpack.c.h.b16 %v2747
    %v2980 = vpack.c.b16 %v2856, %v2852
    %v2981 = vpack.c.b16 %v2857, %v2853
    %v2982 = vpack.c.b16 %v2858, %v2854
    %v2983 = vpack.c.b16 %v2859, %v2855
    %v2984 = vpack.c.b16 %v2864, %v2860
    %v2985 = vpack.c.b16 %v2865, %v2861
    %v2986 = vpack.c.b16 %v2866, %v2862
    %v2987 = vpack.c.b16 %v2867, %v2863
    %v2988 = vpack.c.b16 %v2872, %v2868
    %v2989 = vpack.c.b16 %v2873, %v2869
    %v2990 = vpack.c.b16 %v2874, %v2870
    %v2991 = vpack.c.b16 %v2875, %v2871
    %v2992 = vpack.c.b16 %v2880, %v2876
    %v2993 = vpack.c.b16 %v2881, %v2877
    %v2994 = vpack.c.b16 %v2882, %v2878
    %v2995 = vpack.c.b16 %v2883, %v2879
    %v2996 = vpack.c.b16 %v2888, %v2884
    %v2997 = vpack.c.b16 %v2889, %v2885
    %v2998 = vpack.c.b16 %v2890, %v2886
    %v2999 = vpack.c.b16 %v2891, %v2887
    %v3000 = vpack.c.b16 %v2896, %v2892
    %v3001 = vpack.c.b16 %v2897, %v2893
    %v3002 = vpack.c.b16 %v2898, %v2894
    %v3003 = vpack.c.b16 %v2899, %v2895
    %v3004 = vpack.c.b16 %v2904, %v2900
    %v3005 = vpack.c.b16 %v2905, %v2901
    %v3006 = vpack.c.b16 %v2906, %v2902
    %v3007 = vpack.c.b16 %v2907, %v2903
    %v3008 = vpack.c.b16 %v2912, %v2908
    %v3009 = vpack.c.b16 %v2913, %v2909
    %v3010 = vpack.c.b16 %v2914, %v2910
    %v3011 = vpack.c.b16 %v2915, %v2911
    %v3012 = vpack.c.b16 %v2920, %v2916
    %v3013 = vpack.c.b16 %v2921, %v2917
    %v3014 = vpack.c.b16 %v2922, %v2918
    %v3015 = vpack.c.b16 %v2923, %v2919
    %v3016 = vpack.c.b16 %v2928, %v2924
    %v3017 = vpack.c.b16 %v2929, %v2925
    %v3018 = vpack.c.b16 %v2930, %v2926
    %v3019 = vpack.c.b16 %v2931, %v2927
    %v3020 = vpack.c.b16 %v2936, %v2932
    %v3021 = vpack.c.b16 %v2937, %v2933
    %v3022 = vpack.c.b16 %v2938, %v2934
    %v3023 = vpack.c.b16 %v2939, %v2935
    %v3024 = vpack.c.b16 %v2944, %v2940
    %v3025 = vpack.c.b16 %v2945, %v2941
    %v3026 = vpack.c.b16 %v2946, %v2942
    %v3027 = vpack.c.b16 %v2947, %v2943
    %v3028 = vpack.c.b16 %v2952, %v2948
    %v3029 = vpack.c.b16 %v2953, %v2949
    %v3030 = vpack.c.b16 %v2954, %v2950
    %v3031 = vpack.c.b16 %v2955, %v2951
    %v3032 = vpack.c.b16 %v2960, %v2956
    %v3033 = vpack.c.b16 %v2961, %v2957
    %v3034 = vpack.c.b16 %v2962, %v2958
    %v3035 = vpack.c.b16 %v2963, %v2959
    %v3036 = vpack.c.b16 %v2968, %v2964
    %v3037 = vpack.c.b16 %v2969, %v2965
    %v3038 = vpack.c.b16 %v2970, %v2966
    %v3039 = vpack.c.b16 %v2971, %v2967
    %v3040 = vpack.c.b16 %v2976, %v2972
    %v3041 = vpack.c.b16 %v2977, %v2973
    %v3042 = vpack.c.b16 %v2978, %v2974
    %v3043 = vpack.c.b16 %v2979, %v2975
    %3108 = vmatprep.subr.bf16.mxu0 %v2981
    %3109 = vmatpush1.bf16.msra.mxu0 %v2980
    %3110 = vmatprep.subr.bf16.mxu0 %v2985
    %3111 = vmatpush1.bf16.msra.mxu0 %v2984
    %3112 = vmatprep.subr.bf16.mxu0 %v2989
    %3113 = vmatpush1.bf16.msra.mxu0 %v2988
    %3114 = vmatprep.subr.bf16.mxu0 %v2993
    %3115 = vmatpush1.bf16.msra.mxu0 %v2992
    %3116 = vmatprep.subr.bf16.mxu0 %v2997
    %3117 = vmatpush1.bf16.msra.mxu0 %v2996
    %3118 = vmatprep.subr.bf16.mxu0 %v3001
    %3119 = vmatpush1.bf16.msra.mxu0 %v3000
    %3120 = vmatprep.subr.bf16.mxu0 %v3005
    %3121 = vmatpush1.bf16.msra.mxu0 %v3004
    %3122 = vmatprep.subr.bf16.mxu0 %v3009
    %3123 = vmatpush1.bf16.msra.mxu0 %v3008
    %3124 = vmatprep.subr.bf16.mxu0 %v3013
    %3125 = vmatpush1.bf16.msra.mxu0 %v3012
    %3126 = vmatprep.subr.bf16.mxu0 %v3017
    %3127 = vmatpush1.bf16.msra.mxu0 %v3016
    %3128 = vmatprep.subr.bf16.mxu0 %v3021
    %3129 = vmatpush1.bf16.msra.mxu0 %v3020
    %3130 = vmatprep.subr.bf16.mxu0 %v3025
    %3131 = vmatpush1.bf16.msra.mxu0 %v3024
    %3132 = vmatprep.subr.bf16.mxu0 %v3029
    %3133 = vmatpush1.bf16.msra.mxu0 %v3028
    %3134 = vmatprep.subr.bf16.mxu0 %v3033
    %3135 = vmatpush1.bf16.msra.mxu0 %v3032
    %3136 = vmatprep.subr.bf16.mxu0 %v3037
    %3137 = vmatpush1.bf16.msra.mxu0 %v3036
    %3138 = vmatprep.subr.bf16.mxu0 %v3041
    %3139 = vmatpush1.bf16.msra.mxu0 %v3040
    %3140 = vmatprep.mubr.bf16.mxu0 %v2773
    %3141 = vmatmul.mubr.bf16.gmra.mrb[0].mxu0 %v2772
    %v3142 = vpop.f32.mrb[0].mxu0
    %v3143 = vadd.f32 0.0, %v3142
    %v3144 = vpop.f32.mrb[0].mxu0
    %v3145 = vadd.f32 0.0, %v3144
    %v3146 = vpop.f32.mrb[0].mxu0
    %v3147 = vadd.f32 0.0, %v3146
    %v3148 = vpop.f32.mrb[0].mxu0
    %v3149 = vadd.f32 0.0, %v3148
    %3150 = vmatprep.mubr.bf16.mxu0 %v2775
    %3151 = vmatmul.mubr.bf16.gmra.mrb[0].mxu0 %v2774
    %v3152 = vpop.f32.mrb[0].mxu0
    %v3153 = vadd.f32 0.0, %v3152
    %v3154 = vpop.f32.mrb[0].mxu0
    %v3155 = vadd.f32 0.0, %v3154
    %v3156 = vpop.f32.mrb[0].mxu0
    %v3157 = vadd.f32 0.0, %v3156
    %v3158 = vpop.f32.mrb[0].mxu0
    %v3159 = vadd.f32 0.0, %v3158
    %3160 = vmatprep.mubr.bf16.mxu0 %v2777
    %3161 = vmatmul.mubr.bf16.gmra.mrb[0].mxu0 %v2776
    %v3162 = vpop.f32.mrb[0].mxu0
    %v3163 = vadd.f32 0.0, %v3162
    %v3164 = vpop.f32.mrb[0].mxu0
    %v3165 = vadd.f32 0.0, %v3164
    %v3166 = vpop.f32.mrb[0].mxu0
    %v3167 = vadd.f32 0.0, %v3166
    %v3168 = vpop.f32.mrb[0].mxu0
    %v3169 = vadd.f32 0.0, %v3168
    %3170 = vmatprep.mubr.bf16.mxu0 %v2779
    %3171 = vmatmul.mubr.bf16.gmra.mrb[0].mxu0 %v2778
    %v3172 = vpop.f32.mrb[0].mxu0
    %v3173 = vadd.f32 0.0, %v3172
    %v3174 = vpop.f32.mrb[0].mxu0
    %v3175 = vadd.f32 0.0, %v3174
    %v3176 = vpop.f32.mrb[0].mxu0
    %v3177 = vadd.f32 0.0, %v3176
    %v3178 = vpop.f32.mrb[0].mxu0
    %v3179 = vadd.f32 0.0, %v3178
    %3180 = vdwg.mxu0
    %3181 = vmatprep.subr.bf16.mxu0 %v2983
    %3182 = vmatpush1.bf16.msra.mxu0 %v2982
    %3183 = vmatprep.subr.bf16.mxu0 %v2987
    %3184 = vmatpush1.bf16.msra.mxu0 %v2986
    %3185 = vmatprep.subr.bf16.mxu0 %v2991
    %3186 = vmatpush1.bf16.msra.mxu0 %v2990
    %3187 = vmatprep.subr.bf16.mxu0 %v2995
    %3188 = vmatpush1.bf16.msra.mxu0 %v2994
    %3189 = vmatprep.subr.bf16.mxu0 %v2999
    %3190 = vmatpush1.bf16.msra.mxu0 %v2998
    %3191 = vmatprep.subr.bf16.mxu0 %v3003
    %3192 = vmatpush1.bf16.msra.mxu0 %v3002
    %3193 = vmatprep.subr.bf16.mxu0 %v3007
    %3194 = vmatpush1.bf16.msra.mxu0 %v3006
    %3195 = vmatprep.subr.bf16.mxu0 %v3011
    %3196 = vmatpush1.bf16.msra.mxu0 %v3010
    %3197 = vmatprep.subr.bf16.mxu0 %v3015
    %3198 = vmatpush1.bf16.msra.mxu0 %v3014
    %3199 = vmatprep.subr.bf16.mxu0 %v3019
    %3200 = vmatpush1.bf16.msra.mxu0 %v3018
    %3201 = vmatprep.subr.bf16.mxu0 %v3023
    %3202 = vmatpush1.bf16.msra.mxu0 %v3022
    %3203 = vmatprep.subr.bf16.mxu0 %v3027
    %3204 = vmatpush1.bf16.msra.mxu0 %v3026
    %3205 = vmatprep.subr.bf16.mxu0 %v3031
    %3206 = vmatpush1.bf16.msra.mxu0 %v3030
    %3207 = vmatprep.subr.bf16.mxu0 %v3035
    %3208 = vmatpush1.bf16.msra.mxu0 %v3034
    %3209 = vmatprep.subr.bf16.mxu0 %v3039
    %3210 = vmatpush1.bf16.msra.mxu0 %v3038
    %3211 = vmatprep.subr.bf16.mxu0 %v3043
    %3212 = vmatpush1.bf16.msra.mxu0 %v3042
    %3213 = vmatprep.mubr.bf16.mxu0 %v2773
    %3214 = vmatmul.mubr.bf16.gmra.mrb[0].mxu0 %v2772
    %v3215 = vpop.f32.mrb[0].mxu0
    %v3216 = vadd.f32 0.0, %v3215
    %v3217 = vpop.f32.mrb[0].mxu0
    %v3218 = vadd.f32 0.0, %v3217
    %v3219 = vpop.f32.mrb[0].mxu0
    %v3220 = vadd.f32 0.0, %v3219
    %v3221 = vpop.f32.mrb[0].mxu0
    %v3222 = vadd.f32 0.0, %v3221
    %3223 = vmatprep.mubr.bf16.mxu0 %v2775
    %3224 = vmatmul.mubr.bf16.gmra.mrb[0].mxu0 %v2774
    %v3225 = vpop.f32.mrb[0].mxu0
    %v3226 = vadd.f32 0.0, %v3225
    %v3227 = vpop.f32.mrb[0].mxu0
    %v3228 = vadd.f32 0.0, %v3227
    %v3229 = vpop.f32.mrb[0].mxu0
    %v3230 = vadd.f32 0.0, %v3229
    %v3231 = vpop.f32.mrb[0].mxu0
    %v3232 = vadd.f32 0.0, %v3231
    %3233 = vmatprep.mubr.bf16.mxu0 %v2777
    %3234 = vmatmul.mubr.bf16.gmra.mrb[0].mxu0 %v2776
    %v3235 = vpop.f32.mrb[0].mxu0
    %v3236 = vadd.f32 0.0, %v3235
    %v3237 = vpop.f32.mrb[0].mxu0
    %v3238 = vadd.f32 0.0, %v3237
    %v3239 = vpop.f32.mrb[0].mxu0
    %v3240 = vadd.f32 0.0, %v3239
    %v3241 = vpop.f32.mrb[0].mxu0
    %v3242 = vadd.f32 0.0, %v3241
    %3243 = vmatprep.mubr.bf16.mxu0 %v2779
    %3244 = vmatmul.mubr.bf16.gmra.mrb[0].mxu0 %v2778
    %v3245 = vpop.f32.mrb[0].mxu0
    %v3246 = vadd.f32 0.0, %v3245
    %v3247 = vpop.f32.mrb[0].mxu0
    %v3248 = vadd.f32 0.0, %v3247
    %v3249 = vpop.f32.mrb[0].mxu0
    %v3250 = vadd.f32 0.0, %v3249
    %v3251 = vpop.f32.mrb[0].mxu0
    %v3252 = vadd.f32 0.0, %v3251
    %3253 = vdwg.mxu0
    %v3254 = vadd.f32 %v2563, %v3143
    %v3255 = vadd.f32 %v2565, %v3145
    %v3256 = vadd.f32 %v2636, %v3216
    %v3257 = vadd.f32 %v2638, %v3218
    %v3258 = vadd.f32 %v2567, %v3147
    %v3259 = vadd.f32 %v2569, %v3149
    %v3260 = vadd.f32 %v2640, %v3220
    %v3261 = vadd.f32 %v2642, %v3222
    %v3262 = vadd.f32 %v2573, %v3153
    %v3263 = vadd.f32 %v2575, %v3155
    %v3264 = vadd.f32 %v2646, %v3226
    %v3265 = vadd.f32 %v2648, %v3228
    %v3266 = vadd.f32 %v2577, %v3157
    %v3267 = vadd.f32 %v2579, %v3159
    %v3268 = vadd.f32 %v2650, %v3230
    %v3269 = vadd.f32 %v2652, %v3232
    %v3270 = vadd.f32 %v2583, %v3163
    %v3271 = vadd.f32 %v2585, %v3165
    %v3272 = vadd.f32 %v2656, %v3236
    %v3273 = vadd.f32 %v2658, %v3238
    %v3274 = vadd.f32 %v2587, %v3167
    %v3275 = vadd.f32 %v2589, %v3169
    %v3276 = vadd.f32 %v2660, %v3240
    %v3277 = vadd.f32 %v2662, %v3242
    %v3278 = vadd.f32 %v2593, %v3173
    %v3279 = vadd.f32 %v2595, %v3175
    %v3280 = vadd.f32 %v2666, %v3246
    %v3281 = vadd.f32 %v2668, %v3248
    %v3282 = vadd.f32 %v2597, %v3177
    %v3283 = vadd.f32 %v2599, %v3179
    %v3284 = vadd.f32 %v2670, %v3250
    %v3285 = vadd.f32 %v2672, %v3252
    %v3286 = vmax.f32 %v3254, %v3256
    %v3287 = vmax.f32 %v3255, %v3257
    %v3288 = vmax.f32 %v3258, %v3260
    %v3289 = vmax.f32 %v3259, %v3261
    %v3290 = vmax.f32 %v3262, %v3264
    %v3291 = vmax.f32 %v3263, %v3265
    %v3292 = vmax.f32 %v3266, %v3268
    %v3293 = vmax.f32 %v3267, %v3269
    %v3294 = vmax.f32 %v3270, %v3272
    %v3295 = vmax.f32 %v3271, %v3273
    %v3296 = vmax.f32 %v3274, %v3276
    %v3297 = vmax.f32 %v3275, %v3277
    %v3298 = vmax.f32 %v3278, %v3280
    %v3299 = vmax.f32 %v3279, %v3281
    %v3300 = vmax.f32 %v3282, %v3284
    %v3301 = vmax.f32 %v3283, %v3285
    %v3302 = vmax.f32 %v3286, %v3288
    %v3303 = vmax.f32 %v3287, %v3289
    %v3304 = vmax.f32 %v3290, %v3292
    %v3305 = vmax.f32 %v3291, %v3293
    %v3306 = vmax.f32 %v3294, %v3296
    %v3307 = vmax.f32 %v3295, %v3297
    %v3308 = vmax.f32 %v3298, %v3300
    %v3309 = vmax.f32 %v3299, %v3301
    %v3310 = vld [vmem:[%s4] sm:$0x3]
    %v3312 = vlaneseq
    %v3313 = vshrl.u32 %v3312, 7
    %v3314 = vsub.s32 0, %v3313
    %v3315 = vrot.slane %v3310, %v3314
    %v3316 = vlaneseq
    %v3317 = vshrl.u32 %v3316, 7
    %v3318 = vsub.s32 1, %v3317
    %v3319 = vrot.slane %v3310, %v3318
    %v3322 = vadd.f32 %v3302, %v3315
    %v3323 = vadd.f32 %v3303, %v3319
    %v3324 = vadd.f32 %v3304, %v3315
    %v3325 = vadd.f32 %v3305, %v3319
    %v3326 = vadd.f32 %v3306, %v3315
    %v3327 = vadd.f32 %v3307, %v3319
    %v3328 = vadd.f32 %v3308, %v3315
    %v3329 = vadd.f32 %v3309, %v3319
    %v3330 = vmax.f32 %v3322, 0.0
    %v3331 = vmax.f32 %v3323, 0.0
    %v3332 = vmax.f32 %v3324, 0.0
    %v3333 = vmax.f32 %v3325, 0.0
    %v3334 = vmax.f32 %v3326, 0.0
    %v3335 = vmax.f32 %v3327, 0.0
    %v3336 = vmax.f32 %v3328, 0.0
    %v3337 = vmax.f32 %v3329, 0.0
    %v3338 = vpack.c.bf16 %v3330, %v3330
    %v3339 = vpack.c.bf16 %v3331, %v3331
    %v3340 = vpack.c.bf16 %v3332, %v3332
    %v3341 = vpack.c.bf16 %v3333, %v3333
    %v3342 = vpack.c.bf16 %v3334, %v3334
    %v3343 = vpack.c.bf16 %v3335, %v3335
    %v3344 = vpack.c.bf16 %v3336, %v3336
    %v3345 = vpack.c.bf16 %v3337, %v3337
    %3346 = vst [vmem:[#allocation4] sm:$0xff] 0
    %s3347 = scalar_lea.vmem [#allocation4], 40
    %3348 = vst [vmem:[%s3347] sm:$0xff] 0
    %v3357 = vunpack.c.l.b16 %v3338
    %v3358 = vunpack.c.l.b16 %v3339
    %v3359 = vunpack.c.l.b16 %v3340
    %v3360 = vunpack.c.l.b16 %v3341
    %v3361 = vunpack.c.l.b16 %v3342
    %v3362 = vunpack.c.l.b16 %v3343
    %v3363 = vunpack.c.l.b16 %v3344
    %v3364 = vunpack.c.l.b16 %v3345
    %v3365 = vpack.c.b16 %v3358, %v3357
    %v3366 = vpack.c.b16 %v3360, %v3359
    %v3367 = vpack.c.b16 %v3362, %v3361
    %v3368 = vpack.c.b16 %v3364, %v3363
    %s3373 = scalar_lea.vmem [#allocation4], 8
    %3374 = vst [vmem:[%s3373] sm:$0xff] %v3365
    %3375 = vst [vmem:[%s3373 + $0x8] sm:$0xff] %v3366
    %3376 = vst [vmem:[%s3373 + $0x10] sm:$0xff] %v3367
    %3377 = vst [vmem:[%s3373 + $0x18] sm:$0xff] %v3368
    %v3378 = vld [vmem:[#allocation4] sm:$0xff]
    %v3379 = vld [vmem:[#allocation4 + $0x8] sm:$0xff]
    %v3380 = vld [vmem:[#allocation4 + $0x10] sm:$0xff]
    %v3381 = vld [vmem:[#allocation4 + $0x18] sm:$0xff]
    %v3382 = vld [vmem:[#allocation7] sm:$0xff]
    %v3383 = vld [vmem:[#allocation7 + $0x8] sm:$0xff]
    %v3384 = vld [vmem:[#allocation7 + $0x10] sm:$0xff]
    %v3385 = vld [vmem:[#allocation7 + $0x18] sm:$0xff]
    %v3386 = vld [vmem:[#allocation7 + $0x20] sm:$0xff]
    %v3387 = vld [vmem:[#allocation7 + $0x28] sm:$0xff]
    %v3388 = vld [vmem:[#allocation7 + $0x30] sm:$0xff]
    %v3389 = vld [vmem:[#allocation7 + $0x38] sm:$0xff]
    %v3390 = vld [vmem:[#allocation7 + $0x40] sm:$0xff]
    %v3391 = vld [vmem:[#allocation7 + $0x48] sm:$0xff]
    %v3392 = vld [vmem:[#allocation7 + $0x50] sm:$0xff]
    %v3393 = vld [vmem:[#allocation7 + $0x58] sm:$0xff]
    %v3394 = vld [vmem:[#allocation7 + $0x60] sm:$0xff]
    %v3395 = vld [vmem:[#allocation7 + $0x68] sm:$0xff]
    %v3396 = vld [vmem:[#allocation7 + $0x70] sm:$0xff]
    %v3397 = vld [vmem:[#allocation7 + $0x78] sm:$0xff]
    %v3398 = vld [vmem:[#allocation7 + $0x80] sm:$0xff]
    %v3399 = vld [vmem:[#allocation7 + $0x88] sm:$0xff]
    %v3400 = vld [vmem:[#allocation7 + $0x90] sm:$0xff]
    %v3401 = vld [vmem:[#allocation7 + $0x98] sm:$0xff]
    %v3402 = vld [vmem:[#allocation7 + $0xa0] sm:$0xff]
    %v3403 = vld [vmem:[#allocation7 + $0xa8] sm:$0xff]
    %v3404 = vld [vmem:[#allocation7 + $0xb0] sm:$0xff]
    %v3405 = vld [vmem:[#allocation7 + $0xb8] sm:$0xff]
    %v3406 = vld [vmem:[#allocation7 + $0xc0] sm:$0xff]
    %v3407 = vld [vmem:[#allocation7 + $0xc8] sm:$0xff]
    %v3408 = vld [vmem:[#allocation7 + $0xd0] sm:$0xff]
    %v3409 = vld [vmem:[#allocation7 + $0xd8] sm:$0xff]
    %v3410 = vld [vmem:[#allocation7 + $0xe0] sm:$0xff]
    %v3411 = vld [vmem:[#allocation7 + $0xe8] sm:$0xff]
    %v3412 = vld [vmem:[#allocation7 + $0xf0] sm:$0xff]
    %v3413 = vld [vmem:[#allocation7 + $0xf8] sm:$0xff]
    %v3414 = vld [vmem:[#allocation7 + $0x100] sm:$0xff]
    %v3415 = vld [vmem:[#allocation7 + $0x108] sm:$0xff]
    %v3416 = vld [vmem:[#allocation7 + $0x110] sm:$0xff]
    %v3417 = vld [vmem:[#allocation7 + $0x118] sm:$0xff]
    %v3418 = vld [vmem:[#allocation7 + $0x120] sm:$0xff]
    %v3419 = vld [vmem:[#allocation7 + $0x128] sm:$0xff]
    %v3420 = vld [vmem:[#allocation7 + $0x130] sm:$0xff]
    %v3421 = vld [vmem:[#allocation7 + $0x138] sm:$0xff]
    %v3422 = vld [vmem:[#allocation7 + $0x140] sm:$0xff]
    %v3423 = vld [vmem:[#allocation7 + $0x148] sm:$0xff]
    %v3424 = vld [vmem:[#allocation7 + $0x150] sm:$0xff]
    %v3425 = vld [vmem:[#allocation7 + $0x158] sm:$0xff]
    %v3426 = vld [vmem:[#allocation7 + $0x160] sm:$0xff]
    %v3427 = vld [vmem:[#allocation7 + $0x168] sm:$0xff]
    %v3428 = vld [vmem:[#allocation7 + $0x170] sm:$0xff]
    %v3429 = vld [vmem:[#allocation7 + $0x178] sm:$0xff]
    %v3430 = vld [vmem:[#allocation7 + $0x180] sm:$0xff]
    %v3431 = vld [vmem:[#allocation7 + $0x188] sm:$0xff]
    %v3432 = vld [vmem:[#allocation7 + $0x190] sm:$0xff]
    %v3433 = vld [vmem:[#allocation7 + $0x198] sm:$0xff]
    %v3434 = vld [vmem:[#allocation7 + $0x1a0] sm:$0xff]
    %v3435 = vld [vmem:[#allocation7 + $0x1a8] sm:$0xff]
    %v3436 = vld [vmem:[#allocation7 + $0x1b0] sm:$0xff]
    %v3437 = vld [vmem:[#allocation7 + $0x1b8] sm:$0xff]
    %v3438 = vld [vmem:[#allocation7 + $0x1c0] sm:$0xff]
    %v3439 = vld [vmem:[#allocation7 + $0x1c8] sm:$0xff]
    %v3440 = vld [vmem:[#allocation7 + $0x1d0] sm:$0xff]
    %v3441 = vld [vmem:[#allocation7 + $0x1d8] sm:$0xff]
    %v3442 = vld [vmem:[#allocation7 + $0x1e0] sm:$0xff]
    %v3443 = vld [vmem:[#allocation7 + $0x1e8] sm:$0xff]
    %v3444 = vld [vmem:[#allocation7 + $0x1f0] sm:$0xff]
    %v3445 = vld [vmem:[#allocation7 + $0x1f8] sm:$0xff]
    %v3446 = vld [vmem:[%s3373] sm:$0xff]
    %v3447 = vld [vmem:[%s3373 + $0x8] sm:$0xff]
    %v3448 = vld [vmem:[%s3373 + $0x10] sm:$0xff]
    %v3449 = vld [vmem:[%s3373 + $0x18] sm:$0xff]
    %s3450 = scalar_lea.vmem [#allocation7], 512
    %v3451 = vld [vmem:[%s3450] sm:$0xff]
    %v3452 = vld [vmem:[%s3450 + $0x8] sm:$0xff]
    %v3453 = vld [vmem:[%s3450 + $0x10] sm:$0xff]
    %v3454 = vld [vmem:[%s3450 + $0x18] sm:$0xff]
    %v3455 = vld [vmem:[%s3450 + $0x20] sm:$0xff]
    %v3456 = vld [vmem:[%s3450 + $0x28] sm:$0xff]
    %v3457 = vld [vmem:[%s3450 + $0x30] sm:$0xff]
    %v3458 = vld [vmem:[%s3450 + $0x38] sm:$0xff]
    %v3459 = vld [vmem:[%s3450 + $0x40] sm:$0xff]
    %v3460 = vld [vmem:[%s3450 + $0x48] sm:$0xff]
    %v3461 = vld [vmem:[%s3450 + $0x50] sm:$0xff]
    %v3462 = vld [vmem:[%s3450 + $0x58] sm:$0xff]
    %v3463 = vld [vmem:[%s3450 + $0x60] sm:$0xff]
    %v3464 = vld [vmem:[%s3450 + $0x68] sm:$0xff]
    %v3465 = vld [vmem:[%s3450 + $0x70] sm:$0xff]
    %v3466 = vld [vmem:[%s3450 + $0x78] sm:$0xff]
    %v3467 = vld [vmem:[%s3450 + $0x80] sm:$0xff]
    %v3468 = vld [vmem:[%s3450 + $0x88] sm:$0xff]
    %v3469 = vld [vmem:[%s3450 + $0x90] sm:$0xff]
    %v3470 = vld [vmem:[%s3450 + $0x98] sm:$0xff]
    %v3471 = vld [vmem:[%s3450 + $0xa0] sm:$0xff]
    %v3472 = vld [vmem:[%s3450 + $0xa8] sm:$0xff]
    %v3473 = vld [vmem:[%s3450 + $0xb0] sm:$0xff]
    %v3474 = vld [vmem:[%s3450 + $0xb8] sm:$0xff]
    %v3475 = vld [vmem:[%s3450 + $0xc0] sm:$0xff]
    %v3476 = vld [vmem:[%s3450 + $0xc8] sm:$0xff]
    %v3477 = vld [vmem:[%s3450 + $0xd0] sm:$0xff]
    %v3478 = vld [vmem:[%s3450 + $0xd8] sm:$0xff]
    %v3479 = vld [vmem:[%s3450 + $0xe0] sm:$0xff]
    %v3480 = vld [vmem:[%s3450 + $0xe8] sm:$0xff]
    %v3481 = vld [vmem:[%s3450 + $0xf0] sm:$0xff]
    %v3482 = vld [vmem:[%s3450 + $0xf8] sm:$0xff]
    %v3483 = vld [vmem:[%s3450 + $0x100] sm:$0xff]
    %v3484 = vld [vmem:[%s3450 + $0x108] sm:$0xff]
    %v3485 = vld [vmem:[%s3450 + $0x110] sm:$0xff]
    %v3486 = vld [vmem:[%s3450 + $0x118] sm:$0xff]
    %v3487 = vld [vmem:[%s3450 + $0x120] sm:$0xff]
    %v3488 = vld [vmem:[%s3450 + $0x128] sm:$0xff]
    %v3489 = vld [vmem:[%s3450 + $0x130] sm:$0xff]
    %v3490 = vld [vmem:[%s3450 + $0x138] sm:$0xff]
    %v3491 = vld [vmem:[%s3450 + $0x140] sm:$0xff]
    %v3492 = vld [vmem:[%s3450 + $0x148] sm:$0xff]
    %v3493 = vld [vmem:[%s3450 + $0x150] sm:$0xff]
    %v3494 = vld [vmem:[%s3450 + $0x158] sm:$0xff]
    %v3495 = vld [vmem:[%s3450 + $0x160] sm:$0xff]
    %v3496 = vld [vmem:[%s3450 + $0x168] sm:$0xff]
    %v3497 = vld [vmem:[%s3450 + $0x170] sm:$0xff]
    %v3498 = vld [vmem:[%s3450 + $0x178] sm:$0xff]
    %v3499 = vld [vmem:[%s3450 + $0x180] sm:$0xff]
    %v3500 = vld [vmem:[%s3450 + $0x188] sm:$0xff]
    %v3501 = vld [vmem:[%s3450 + $0x190] sm:$0xff]
    %v3502 = vld [vmem:[%s3450 + $0x198] sm:$0xff]
    %v3503 = vld [vmem:[%s3450 + $0x1a0] sm:$0xff]
    %v3504 = vld [vmem:[%s3450 + $0x1a8] sm:$0xff]
    %v3505 = vld [vmem:[%s3450 + $0x1b0] sm:$0xff]
    %v3506 = vld [vmem:[%s3450 + $0x1b8] sm:$0xff]
    %v3507 = vld [vmem:[%s3450 + $0x1c0] sm:$0xff]
    %v3508 = vld [vmem:[%s3450 + $0x1c8] sm:$0xff]
    %v3509 = vld [vmem:[%s3450 + $0x1d0] sm:$0xff]
    %v3510 = vld [vmem:[%s3450 + $0x1d8] sm:$0xff]
    %v3511 = vld [vmem:[%s3450 + $0x1e0] sm:$0xff]
    %v3512 = vld [vmem:[%s3450 + $0x1e8] sm:$0xff]
    %v3513 = vld [vmem:[%s3450 + $0x1f0] sm:$0xff]
    %v3514 = vld [vmem:[%s3450 + $0x1f8] sm:$0xff]
    %v3519 = vunpack.c.l.b16 %v3446
    %v3520 = vunpack.c.h.b16 %v3446
    %v3521 = vunpack.c.l.b16 %v3447
    %v3522 = vunpack.c.h.b16 %v3447
    %v3523 = vunpack.c.l.b16 %v3448
    %v3524 = vunpack.c.h.b16 %v3448
    %v3525 = vunpack.c.l.b16 %v3449
    %v3526 = vunpack.c.h.b16 %v3449
    %v3527 = vpack.c.b16 %v3521, %v3519
    %v3528 = vpack.c.b16 %v3522, %v3520
    %v3529 = vpack.c.b16 %v3525, %v3523
    %v3530 = vpack.c.b16 %v3526, %v3524
    %v3599 = vunpack.c.l.b16 %v3451
    %v3600 = vunpack.c.h.b16 %v3451
    %v3601 = vunpack.c.l.b16 %v3452
    %v3602 = vunpack.c.h.b16 %v3452
    %v3603 = vunpack.c.l.b16 %v3453
    %v3604 = vunpack.c.h.b16 %v3453
    %v3605 = vunpack.c.l.b16 %v3454
    %v3606 = vunpack.c.h.b16 %v3454
    %v3607 = vunpack.c.l.b16 %v3455
    %v3608 = vunpack.c.h.b16 %v3455
    %v3609 = vunpack.c.l.b16 %v3456
    %v3610 = vunpack.c.h.b16 %v3456
    %v3611 = vunpack.c.l.b16 %v3457
    %v3612 = vunpack.c.h.b16 %v3457
    %v3613 = vunpack.c.l.b16 %v3458
    %v3614 = vunpack.c.h.b16 %v3458
    %v3615 = vunpack.c.l.b16 %v3459
    %v3616 = vunpack.c.h.b16 %v3459
    %v3617 = vunpack.c.l.b16 %v3460
    %v3618 = vunpack.c.h.b16 %v3460
    %v3619 = vunpack.c.l.b16 %v3461
    %v3620 = vunpack.c.h.b16 %v3461
    %v3621 = vunpack.c.l.b16 %v3462
    %v3622 = vunpack.c.h.b16 %v3462
    %v3623 = vunpack.c.l.b16 %v3463
    %v3624 = vunpack.c.h.b16 %v3463
    %v3625 = vunpack.c.l.b16 %v3464
    %v3626 = vunpack.c.h.b16 %v3464
    %v3627 = vunpack.c.l.b16 %v3465
    %v3628 = vunpack.c.h.b16 %v3465
    %v3629 = vunpack.c.l.b16 %v3466
    %v3630 = vunpack.c.h.b16 %v3466
    %v3631 = vunpack.c.l.b16 %v3467
    %v3632 = vunpack.c.h.b16 %v3467
    %v3633 = vunpack.c.l.b16 %v3468
    %v3634 = vunpack.c.h.b16 %v3468
    %v3635 = vunpack.c.l.b16 %v3469
    %v3636 = vunpack.c.h.b16 %v3469
    %v3637 = vunpack.c.l.b16 %v3470
    %v3638 = vunpack.c.h.b16 %v3470
    %v3639 = vunpack.c.l.b16 %v3471
    %v3640 = vunpack.c.h.b16 %v3471
    %v3641 = vunpack.c.l.b16 %v3472
    %v3642 = vunpack.c.h.b16 %v3472
    %v3643 = vunpack.c.l.b16 %v3473
    %v3644 = vunpack.c.h.b16 %v3473
    %v3645 = vunpack.c.l.b16 %v3474
    %v3646 = vunpack.c.h.b16 %v3474
    %v3647 = vunpack.c.l.b16 %v3475
    %v3648 = vunpack.c.h.b16 %v3475
    %v3649 = vunpack.c.l.b16 %v3476
    %v3650 = vunpack.c.h.b16 %v3476
    %v3651 = vunpack.c.l.b16 %v3477
    %v3652 = vunpack.c.h.b16 %v3477
    %v3653 = vunpack.c.l.b16 %v3478
    %v3654 = vunpack.c.h.b16 %v3478
    %v3655 = vunpack.c.l.b16 %v3479
    %v3656 = vunpack.c.h.b16 %v3479
    %v3657 = vunpack.c.l.b16 %v3480
    %v3658 = vunpack.c.h.b16 %v3480
    %v3659 = vunpack.c.l.b16 %v3481
    %v3660 = vunpack.c.h.b16 %v3481
    %v3661 = vunpack.c.l.b16 %v3482
    %v3662 = vunpack.c.h.b16 %v3482
    %v3663 = vunpack.c.l.b16 %v3483
    %v3664 = vunpack.c.h.b16 %v3483
    %v3665 = vunpack.c.l.b16 %v3484
    %v3666 = vunpack.c.h.b16 %v3484
    %v3667 = vunpack.c.l.b16 %v3485
    %v3668 = vunpack.c.h.b16 %v3485
    %v3669 = vunpack.c.l.b16 %v3486
    %v3670 = vunpack.c.h.b16 %v3486
    %v3671 = vunpack.c.l.b16 %v3487
    %v3672 = vunpack.c.h.b16 %v3487
    %v3673 = vunpack.c.l.b16 %v3488
    %v3674 = vunpack.c.h.b16 %v3488
    %v3675 = vunpack.c.l.b16 %v3489
    %v3676 = vunpack.c.h.b16 %v3489
    %v3677 = vunpack.c.l.b16 %v3490
    %v3678 = vunpack.c.h.b16 %v3490
    %v3679 = vunpack.c.l.b16 %v3491
    %v3680 = vunpack.c.h.b16 %v3491
    %v3681 = vunpack.c.l.b16 %v3492
    %v3682 = vunpack.c.h.b16 %v3492
    %v3683 = vunpack.c.l.b16 %v3493
    %v3684 = vunpack.c.h.b16 %v3493
    %v3685 = vunpack.c.l.b16 %v3494
    %v3686 = vunpack.c.h.b16 %v3494
    %v3687 = vunpack.c.l.b16 %v3495
    %v3688 = vunpack.c.h.b16 %v3495
    %v3689 = vunpack.c.l.b16 %v3496
    %v3690 = vunpack.c.h.b16 %v3496
    %v3691 = vunpack.c.l.b16 %v3497
    %v3692 = vunpack.c.h.b16 %v3497
    %v3693 = vunpack.c.l.b16 %v3498
    %v3694 = vunpack.c.h.b16 %v3498
    %v3695 = vunpack.c.l.b16 %v3499
    %v3696 = vunpack.c.h.b16 %v3499
    %v3697 = vunpack.c.l.b16 %v3500
    %v3698 = vunpack.c.h.b16 %v3500
    %v3699 = vunpack.c.l.b16 %v3501
    %v3700 = vunpack.c.h.b16 %v3501
    %v3701 = vunpack.c.l.b16 %v3502
    %v3702 = vunpack.c.h.b16 %v3502
    %v3703 = vunpack.c.l.b16 %v3503
    %v3704 = vunpack.c.h.b16 %v3503
    %v3705 = vunpack.c.l.b16 %v3504
    %v3706 = vunpack.c.h.b16 %v3504
    %v3707 = vunpack.c.l.b16 %v3505
    %v3708 = vunpack.c.h.b16 %v3505
    %v3709 = vunpack.c.l.b16 %v3506
    %v3710 = vunpack.c.h.b16 %v3506
    %v3711 = vunpack.c.l.b16 %v3507
    %v3712 = vunpack.c.h.b16 %v3507
    %v3713 = vunpack.c.l.b16 %v3508
    %v3714 = vunpack.c.h.b16 %v3508
    %v3715 = vunpack.c.l.b16 %v3509
    %v3716 = vunpack.c.h.b16 %v3509
    %v3717 = vunpack.c.l.b16 %v3510
    %v3718 = vunpack.c.h.b16 %v3510
    %v3719 = vunpack.c.l.b16 %v3511
    %v3720 = vunpack.c.h.b16 %v3511
    %v3721 = vunpack.c.l.b16 %v3512
    %v3722 = vunpack.c.h.b16 %v3512
    %v3723 = vunpack.c.l.b16 %v3513
    %v3724 = vunpack.c.h.b16 %v3513
    %v3725 = vunpack.c.l.b16 %v3514
    %v3726 = vunpack.c.h.b16 %v3514
    %v3727 = vpack.c.b16 %v3603, %v3599
    %v3728 = vpack.c.b16 %v3604, %v3600
    %v3729 = vpack.c.b16 %v3605, %v3601
    %v3730 = vpack.c.b16 %v3606, %v3602
    %v3731 = vpack.c.b16 %v3611, %v3607
    %v3732 = vpack.c.b16 %v3612, %v3608
    %v3733 = vpack.c.b16 %v3613, %v3609
    %v3734 = vpack.c.b16 %v3614, %v3610
    %v3735 = vpack.c.b16 %v3619, %v3615
    %v3736 = vpack.c.b16 %v3620, %v3616
    %v3737 = vpack.c.b16 %v3621, %v3617
    %v3738 = vpack.c.b16 %v3622, %v3618
    %v3739 = vpack.c.b16 %v3627, %v3623
    %v3740 = vpack.c.b16 %v3628, %v3624
    %v3741 = vpack.c.b16 %v3629, %v3625
    %v3742 = vpack.c.b16 %v3630, %v3626
    %v3743 = vpack.c.b16 %v3635, %v3631
    %v3744 = vpack.c.b16 %v3636, %v3632
    %v3745 = vpack.c.b16 %v3637, %v3633
    %v3746 = vpack.c.b16 %v3638, %v3634
    %v3747 = vpack.c.b16 %v3643, %v3639
    %v3748 = vpack.c.b16 %v3644, %v3640
    %v3749 = vpack.c.b16 %v3645, %v3641
    %v3750 = vpack.c.b16 %v3646, %v3642
    %v3751 = vpack.c.b16 %v3651, %v3647
    %v3752 = vpack.c.b16 %v3652, %v3648
    %v3753 = vpack.c.b16 %v3653, %v3649
    %v3754 = vpack.c.b16 %v3654, %v3650
    %v3755 = vpack.c.b16 %v3659, %v3655
    %v3756 = vpack.c.b16 %v3660, %v3656
    %v3757 = vpack.c.b16 %v3661, %v3657
    %v3758 = vpack.c.b16 %v3662, %v3658
    %v3759 = vpack.c.b16 %v3667, %v3663
    %v3760 = vpack.c.b16 %v3668, %v3664
    %v3761 = vpack.c.b16 %v3669, %v3665
    %v3762 = vpack.c.b16 %v3670, %v3666
    %v3763 = vpack.c.b16 %v3675, %v3671
    %v3764 = vpack.c.b16 %v3676, %v3672
    %v3765 = vpack.c.b16 %v3677, %v3673
    %v3766 = vpack.c.b16 %v3678, %v3674
    %v3767 = vpack.c.b16 %v3683, %v3679
    %v3768 = vpack.c.b16 %v3684, %v3680
    %v3769 = vpack.c.b16 %v3685, %v3681
    %v3770 = vpack.c.b16 %v3686, %v3682
    %v3771 = vpack.c.b16 %v3691, %v3687
    %v3772 = vpack.c.b16 %v3692, %v3688
    %v3773 = vpack.c.b16 %v3693, %v3689
    %v3774 = vpack.c.b16 %v3694, %v3690
    %v3775 = vpack.c.b16 %v3699, %v3695
    %v3776 = vpack.c.b16 %v3700, %v3696
    %v3777 = vpack.c.b16 %v3701, %v3697
    %v3778 = vpack.c.b16 %v3702, %v3698
    %v3779 = vpack.c.b16 %v3707, %v3703
    %v3780 = vpack.c.b16 %v3708, %v3704
    %v3781 = vpack.c.b16 %v3709, %v3705
    %v3782 = vpack.c.b16 %v3710, %v3706
    %v3783 = vpack.c.b16 %v3715, %v3711
    %v3784 = vpack.c.b16 %v3716, %v3712
    %v3785 = vpack.c.b16 %v3717, %v3713
    %v3786 = vpack.c.b16 %v3718, %v3714
    %v3787 = vpack.c.b16 %v3723, %v3719
    %v3788 = vpack.c.b16 %v3724, %v3720
    %v3789 = vpack.c.b16 %v3725, %v3721
    %v3790 = vpack.c.b16 %v3726, %v3722
    %3855 = vmatprep.subr.bf16.mxu0 %v3728
    %3856 = vmatpush1.bf16.msra.mxu0 %v3727
    %3857 = vmatprep.subr.bf16.mxu0 %v3732
    %3858 = vmatpush1.bf16.msra.mxu0 %v3731
    %3859 = vmatprep.subr.bf16.mxu0 %v3736
    %3860 = vmatpush1.bf16.msra.mxu0 %v3735
    %3861 = vmatprep.subr.bf16.mxu0 %v3740
    %3862 = vmatpush1.bf16.msra.mxu0 %v3739
    %3863 = vmatprep.subr.bf16.mxu0 %v3744
    %3864 = vmatpush1.bf16.msra.mxu0 %v3743
    %3865 = vmatprep.subr.bf16.mxu0 %v3748
    %3866 = vmatpush1.bf16.msra.mxu0 %v3747
    %3867 = vmatprep.subr.bf16.mxu0 %v3752
    %3868 = vmatpush1.bf16.msra.mxu0 %v3751
    %3869 = vmatprep.subr.bf16.mxu0 %v3756
    %3870 = vmatpush1.bf16.msra.mxu0 %v3755
    %3871 = vmatprep.subr.bf16.mxu0 %v3760
    %3872 = vmatpush1.bf16.msra.mxu0 %v3759
    %3873 = vmatprep.subr.bf16.mxu0 %v3764
    %3874 = vmatpush1.bf16.msra.mxu0 %v3763
    %3875 = vmatprep.subr.bf16.mxu0 %v3768
    %3876 = vmatpush1.bf16.msra.mxu0 %v3767
    %3877 = vmatprep.subr.bf16.mxu0 %v3772
    %3878 = vmatpush1.bf16.msra.mxu0 %v3771
    %3879 = vmatprep.subr.bf16.mxu0 %v3776
    %3880 = vmatpush1.bf16.msra.mxu0 %v3775
    %3881 = vmatprep.subr.bf16.mxu0 %v3780
    %3882 = vmatpush1.bf16.msra.mxu0 %v3779
    %3883 = vmatprep.subr.bf16.mxu0 %v3784
    %3884 = vmatpush1.bf16.msra.mxu0 %v3783
    %3885 = vmatprep.subr.bf16.mxu0 %v3788
    %3886 = vmatpush1.bf16.msra.mxu0 %v3787
    %3887 = vmatprep.mubr.bf16.mxu0 %v3528
    %3888 = vmatmul.mubr.bf16.gmra.mrb[0].mxu0 %v3527
    %v3889 = vpop.f32.mrb[0].mxu0
    %v3890 = vadd.f32 0.0, %v3889
    %v3891 = vpop.f32.mrb[0].mxu0
    %v3892 = vadd.f32 0.0, %v3891
    %v3893 = vpop.f32.mrb[0].mxu0
    %v3894 = vadd.f32 0.0, %v3893
    %v3895 = vpop.f32.mrb[0].mxu0
    %v3896 = vadd.f32 0.0, %v3895
    %3897 = vmatprep.mubr.bf16.mxu0 %v3530
    %3898 = vmatmul.mubr.bf16.gmra.mrb[0].mxu0 %v3529
    %v3899 = vpop.f32.mrb[0].mxu0
    %v3900 = vadd.f32 0.0, %v3899
    %v3901 = vpop.f32.mrb[0].mxu0
    %v3902 = vadd.f32 0.0, %v3901
    %v3903 = vpop.f32.mrb[0].mxu0
    %v3904 = vadd.f32 0.0, %v3903
    %v3905 = vpop.f32.mrb[0].mxu0
    %v3906 = vadd.f32 0.0, %v3905
    %3907 = vdwg.mxu0
    %3908 = vmatprep.subr.bf16.mxu0 %v3730
    %3909 = vmatpush1.bf16.msra.mxu0 %v3729
    %3910 = vmatprep.subr.bf16.mxu0 %v3734
    %3911 = vmatpush1.bf16.msra.mxu0 %v3733
    %3912 = vmatprep.subr.bf16.mxu0 %v3738
    %3913 = vmatpush1.bf16.msra.mxu0 %v3737
    %3914 = vmatprep.subr.bf16.mxu0 %v3742
    %3915 = vmatpush1.bf16.msra.mxu0 %v3741
    %3916 = vmatprep.subr.bf16.mxu0 %v3746
    %3917 = vmatpush1.bf16.msra.mxu0 %v3745
    %3918 = vmatprep.subr.bf16.mxu0 %v3750
    %3919 = vmatpush1.bf16.msra.mxu0 %v3749
    %3920 = vmatprep.subr.bf16.mxu0 %v3754
    %3921 = vmatpush1.bf16.msra.mxu0 %v3753
    %3922 = vmatprep.subr.bf16.mxu0 %v3758
    %3923 = vmatpush1.bf16.msra.mxu0 %v3757
    %3924 = vmatprep.subr.bf16.mxu0 %v3762
    %3925 = vmatpush1.bf16.msra.mxu0 %v3761
    %3926 = vmatprep.subr.bf16.mxu0 %v3766
    %3927 = vmatpush1.bf16.msra.mxu0 %v3765
    %3928 = vmatprep.subr.bf16.mxu0 %v3770
    %3929 = vmatpush1.bf16.msra.mxu0 %v3769
    %3930 = vmatprep.subr.bf16.mxu0 %v3774
    %3931 = vmatpush1.bf16.msra.mxu0 %v3773
    %3932 = vmatprep.subr.bf16.mxu0 %v3778
    %3933 = vmatpush1.bf16.msra.mxu0 %v3777
    %3934 = vmatprep.subr.bf16.mxu0 %v3782
    %3935 = vmatpush1.bf16.msra.mxu0 %v3781
    %3936 = vmatprep.subr.bf16.mxu0 %v3786
    %3937 = vmatpush1.bf16.msra.mxu0 %v3785
    %3938 = vmatprep.subr.bf16.mxu0 %v3790
    %3939 = vmatpush1.bf16.msra.mxu0 %v3789
    %3940 = vmatprep.mubr.bf16.mxu0 %v3528
    %3941 = vmatmul.mubr.bf16.gmra.mrb[0].mxu0 %v3527
    %v3942 = vpop.f32.mrb[0].mxu0
    %v3943 = vadd.f32 0.0, %v3942
    %v3944 = vpop.f32.mrb[0].mxu0
    %v3945 = vadd.f32 0.0, %v3944
    %v3946 = vpop.f32.mrb[0].mxu0
    %v3947 = vadd.f32 0.0, %v3946
    %v3948 = vpop.f32.mrb[0].mxu0
    %v3949 = vadd.f32 0.0, %v3948
    %3950 = vmatprep.mubr.bf16.mxu0 %v3530
    %3951 = vmatmul.mubr.bf16.gmra.mrb[0].mxu0 %v3529
    %v3952 = vpop.f32.mrb[0].mxu0
    %v3953 = vadd.f32 0.0, %v3952
    %v3954 = vpop.f32.mrb[0].mxu0
    %v3955 = vadd.f32 0.0, %v3954
    %v3956 = vpop.f32.mrb[0].mxu0
    %v3957 = vadd.f32 0.0, %v3956
    %v3958 = vpop.f32.mrb[0].mxu0
    %v3959 = vadd.f32 0.0, %v3958
    %3960 = vdwg.mxu0
    %v3965 = vunpack.c.l.b16 %v3378
    %v3966 = vunpack.c.h.b16 %v3378
    %v3967 = vunpack.c.l.b16 %v3379
    %v3968 = vunpack.c.h.b16 %v3379
    %v3969 = vunpack.c.l.b16 %v3380
    %v3970 = vunpack.c.h.b16 %v3380
    %v3971 = vunpack.c.l.b16 %v3381
    %v3972 = vunpack.c.h.b16 %v3381
    %v3973 = vpack.c.b16 %v3967, %v3965
    %v3974 = vpack.c.b16 %v3968, %v3966
    %v3975 = vpack.c.b16 %v3971, %v3969
    %v3976 = vpack.c.b16 %v3972, %v3970
    %v4045 = vunpack.c.l.b16 %v3382
    %v4046 = vunpack.c.h.b16 %v3382
    %v4047 = vunpack.c.l.b16 %v3383
    %v4048 = vunpack.c.h.b16 %v3383
    %v4049 = vunpack.c.l.b16 %v3384
    %v4050 = vunpack.c.h.b16 %v3384
    %v4051 = vunpack.c.l.b16 %v3385
    %v4052 = vunpack.c.h.b16 %v3385
    %v4053 = vunpack.c.l.b16 %v3386
    %v4054 = vunpack.c.h.b16 %v3386
    %v4055 = vunpack.c.l.b16 %v3387
    %v4056 = vunpack.c.h.b16 %v3387
    %v4057 = vunpack.c.l.b16 %v3388
    %v4058 = vunpack.c.h.b16 %v3388
    %v4059 = vunpack.c.l.b16 %v3389
    %v4060 = vunpack.c.h.b16 %v3389
    %v4061 = vunpack.c.l.b16 %v3390
    %v4062 = vunpack.c.h.b16 %v3390
    %v4063 = vunpack.c.l.b16 %v3391
    %v4064 = vunpack.c.h.b16 %v3391
    %v4065 = vunpack.c.l.b16 %v3392
    %v4066 = vunpack.c.h.b16 %v3392
    %v4067 = vunpack.c.l.b16 %v3393
    %v4068 = vunpack.c.h.b16 %v3393
    %v4069 = vunpack.c.l.b16 %v3394
    %v4070 = vunpack.c.h.b16 %v3394
    %v4071 = vunpack.c.l.b16 %v3395
    %v4072 = vunpack.c.h.b16 %v3395
    %v4073 = vunpack.c.l.b16 %v3396
    %v4074 = vunpack.c.h.b16 %v3396
    %v4075 = vunpack.c.l.b16 %v3397
    %v4076 = vunpack.c.h.b16 %v3397
    %v4077 = vunpack.c.l.b16 %v3398
    %v4078 = vunpack.c.h.b16 %v3398
    %v4079 = vunpack.c.l.b16 %v3399
    %v4080 = vunpack.c.h.b16 %v3399
    %v4081 = vunpack.c.l.b16 %v3400
    %v4082 = vunpack.c.h.b16 %v3400
    %v4083 = vunpack.c.l.b16 %v3401
    %v4084 = vunpack.c.h.b16 %v3401
    %v4085 = vunpack.c.l.b16 %v3402
    %v4086 = vunpack.c.h.b16 %v3402
    %v4087 = vunpack.c.l.b16 %v3403
    %v4088 = vunpack.c.h.b16 %v3403
    %v4089 = vunpack.c.l.b16 %v3404
    %v4090 = vunpack.c.h.b16 %v3404
    %v4091 = vunpack.c.l.b16 %v3405
    %v4092 = vunpack.c.h.b16 %v3405
    %v4093 = vunpack.c.l.b16 %v3406
    %v4094 = vunpack.c.h.b16 %v3406
    %v4095 = vunpack.c.l.b16 %v3407
    %v4096 = vunpack.c.h.b16 %v3407
    %v4097 = vunpack.c.l.b16 %v3408
    %v4098 = vunpack.c.h.b16 %v3408
    %v4099 = vunpack.c.l.b16 %v3409
    %v4100 = vunpack.c.h.b16 %v3409
    %v4101 = vunpack.c.l.b16 %v3410
    %v4102 = vunpack.c.h.b16 %v3410
    %v4103 = vunpack.c.l.b16 %v3411
    %v4104 = vunpack.c.h.b16 %v3411
    %v4105 = vunpack.c.l.b16 %v3412
    %v4106 = vunpack.c.h.b16 %v3412
    %v4107 = vunpack.c.l.b16 %v3413
    %v4108 = vunpack.c.h.b16 %v3413
    %v4109 = vunpack.c.l.b16 %v3414
    %v4110 = vunpack.c.h.b16 %v3414
    %v4111 = vunpack.c.l.b16 %v3415
    %v4112 = vunpack.c.h.b16 %v3415
    %v4113 = vunpack.c.l.b16 %v3416
    %v4114 = vunpack.c.h.b16 %v3416
    %v4115 = vunpack.c.l.b16 %v3417
    %v4116 = vunpack.c.h.b16 %v3417
    %v4117 = vunpack.c.l.b16 %v3418
    %v4118 = vunpack.c.h.b16 %v3418
    %v4119 = vunpack.c.l.b16 %v3419
    %v4120 = vunpack.c.h.b16 %v3419
    %v4121 = vunpack.c.l.b16 %v3420
    %v4122 = vunpack.c.h.b16 %v3420
    %v4123 = vunpack.c.l.b16 %v3421
    %v4124 = vunpack.c.h.b16 %v3421
    %v4125 = vunpack.c.l.b16 %v3422
    %v4126 = vunpack.c.h.b16 %v3422
    %v4127 = vunpack.c.l.b16 %v3423
    %v4128 = vunpack.c.h.b16 %v3423
    %v4129 = vunpack.c.l.b16 %v3424
    %v4130 = vunpack.c.h.b16 %v3424
    %v4131 = vunpack.c.l.b16 %v3425
    %v4132 = vunpack.c.h.b16 %v3425
    %v4133 = vunpack.c.l.b16 %v3426
    %v4134 = vunpack.c.h.b16 %v3426
    %v4135 = vunpack.c.l.b16 %v3427
    %v4136 = vunpack.c.h.b16 %v3427
    %v4137 = vunpack.c.l.b16 %v3428
    %v4138 = vunpack.c.h.b16 %v3428
    %v4139 = vunpack.c.l.b16 %v3429
    %v4140 = vunpack.c.h.b16 %v3429
    %v4141 = vunpack.c.l.b16 %v3430
    %v4142 = vunpack.c.h.b16 %v3430
    %v4143 = vunpack.c.l.b16 %v3431
    %v4144 = vunpack.c.h.b16 %v3431
    %v4145 = vunpack.c.l.b16 %v3432
    %v4146 = vunpack.c.h.b16 %v3432
    %v4147 = vunpack.c.l.b16 %v3433
    %v4148 = vunpack.c.h.b16 %v3433
    %v4149 = vunpack.c.l.b16 %v3434
    %v4150 = vunpack.c.h.b16 %v3434
    %v4151 = vunpack.c.l.b16 %v3435
    %v4152 = vunpack.c.h.b16 %v3435
    %v4153 = vunpack.c.l.b16 %v3436
    %v4154 = vunpack.c.h.b16 %v3436
    %v4155 = vunpack.c.l.b16 %v3437
    %v4156 = vunpack.c.h.b16 %v3437
    %v4157 = vunpack.c.l.b16 %v3438
    %v4158 = vunpack.c.h.b16 %v3438
    %v4159 = vunpack.c.l.b16 %v3439
    %v4160 = vunpack.c.h.b16 %v3439
    %v4161 = vunpack.c.l.b16 %v3440
    %v4162 = vunpack.c.h.b16 %v3440
    %v4163 = vunpack.c.l.b16 %v3441
    %v4164 = vunpack.c.h.b16 %v3441
    %v4165 = vunpack.c.l.b16 %v3442
    %v4166 = vunpack.c.h.b16 %v3442
    %v4167 = vunpack.c.l.b16 %v3443
    %v4168 = vunpack.c.h.b16 %v3443
    %v4169 = vunpack.c.l.b16 %v3444
    %v4170 = vunpack.c.h.b16 %v3444
    %v4171 = vunpack.c.l.b16 %v3445
    %v4172 = vunpack.c.h.b16 %v3445
    %v4173 = vpack.c.b16 %v4049, %v4045
    %v4174 = vpack.c.b16 %v4050, %v4046
    %v4175 = vpack.c.b16 %v4051, %v4047
    %v4176 = vpack.c.b16 %v4052, %v4048
    %v4177 = vpack.c.b16 %v4057, %v4053
    %v4178 = vpack.c.b16 %v4058, %v4054
    %v4179 = vpack.c.b16 %v4059, %v4055
    %v4180 = vpack.c.b16 %v4060, %v4056
    %v4181 = vpack.c.b16 %v4065, %v4061
    %v4182 = vpack.c.b16 %v4066, %v4062
    %v4183 = vpack.c.b16 %v4067, %v4063
    %v4184 = vpack.c.b16 %v4068, %v4064
    %v4185 = vpack.c.b16 %v4073, %v4069
    %v4186 = vpack.c.b16 %v4074, %v4070
    %v4187 = vpack.c.b16 %v4075, %v4071
    %v4188 = vpack.c.b16 %v4076, %v4072
    %v4189 = vpack.c.b16 %v4081, %v4077
    %v4190 = vpack.c.b16 %v4082, %v4078
    %v4191 = vpack.c.b16 %v4083, %v4079
    %v4192 = vpack.c.b16 %v4084, %v4080
    %v4193 = vpack.c.b16 %v4089, %v4085
    %v4194 = vpack.c.b16 %v4090, %v4086
    %v4195 = vpack.c.b16 %v4091, %v4087
    %v4196 = vpack.c.b16 %v4092, %v4088
    %v4197 = vpack.c.b16 %v4097, %v4093
    %v4198 = vpack.c.b16 %v4098, %v4094
    %v4199 = vpack.c.b16 %v4099, %v4095
    %v4200 = vpack.c.b16 %v4100, %v4096
    %v4201 = vpack.c.b16 %v4105, %v4101
    %v4202 = vpack.c.b16 %v4106, %v4102
    %v4203 = vpack.c.b16 %v4107, %v4103
    %v4204 = vpack.c.b16 %v4108, %v4104
    %v4205 = vpack.c.b16 %v4113, %v4109
    %v4206 = vpack.c.b16 %v4114, %v4110
    %v4207 = vpack.c.b16 %v4115, %v4111
    %v4208 = vpack.c.b16 %v4116, %v4112
    %v4209 = vpack.c.b16 %v4121, %v4117
    %v4210 = vpack.c.b16 %v4122, %v4118
    %v4211 = vpack.c.b16 %v4123, %v4119
    %v4212 = vpack.c.b16 %v4124, %v4120
    %v4213 = vpack.c.b16 %v4129, %v4125
    %v4214 = vpack.c.b16 %v4130, %v4126
    %v4215 = vpack.c.b16 %v4131, %v4127
    %v4216 = vpack.c.b16 %v4132, %v4128
    %v4217 = vpack.c.b16 %v4137, %v4133
    %v4218 = vpack.c.b16 %v4138, %v4134
    %v4219 = vpack.c.b16 %v4139, %v4135
    %v4220 = vpack.c.b16 %v4140, %v4136
    %v4221 = vpack.c.b16 %v4145, %v4141
    %v4222 = vpack.c.b16 %v4146, %v4142
    %v4223 = vpack.c.b16 %v4147, %v4143
    %v4224 = vpack.c.b16 %v4148, %v4144
    %v4225 = vpack.c.b16 %v4153, %v4149
    %v4226 = vpack.c.b16 %v4154, %v4150
    %v4227 = vpack.c.b16 %v4155, %v4151
    %v4228 = vpack.c.b16 %v4156, %v4152
    %v4229 = vpack.c.b16 %v4161, %v4157
    %v4230 = vpack.c.b16 %v4162, %v4158
    %v4231 = vpack.c.b16 %v4163, %v4159
    %v4232 = vpack.c.b16 %v4164, %v4160
    %v4233 = vpack.c.b16 %v4169, %v4165
    %v4234 = vpack.c.b16 %v4170, %v4166
    %v4235 = vpack.c.b16 %v4171, %v4167
    %v4236 = vpack.c.b16 %v4172, %v4168
    %4301 = vmatprep.subr.bf16.mxu0 %v4174
    %4302 = vmatpush1.bf16.msra.mxu0 %v4173
    %4303 = vmatprep.subr.bf16.mxu0 %v4178
    %4304 = vmatpush1.bf16.msra.mxu0 %v4177
    %4305 = vmatprep.subr.bf16.mxu0 %v4182
    %4306 = vmatpush1.bf16.msra.mxu0 %v4181
    %4307 = vmatprep.subr.bf16.mxu0 %v4186
    %4308 = vmatpush1.bf16.msra.mxu0 %v4185
    %4309 = vmatprep.subr.bf16.mxu0 %v4190
    %4310 = vmatpush1.bf16.msra.mxu0 %v4189
    %4311 = vmatprep.subr.bf16.mxu0 %v4194
    %4312 = vmatpush1.bf16.msra.mxu0 %v4193
    %4313 = vmatprep.subr.bf16.mxu0 %v4198
    %4314 = vmatpush1.bf16.msra.mxu0 %v4197
    %4315 = vmatprep.subr.bf16.mxu0 %v4202
    %4316 = vmatpush1.bf16.msra.mxu0 %v4201
    %4317 = vmatprep.subr.bf16.mxu0 %v4206
    %4318 = vmatpush1.bf16.msra.mxu0 %v4205
    %4319 = vmatprep.subr.bf16.mxu0 %v4210
    %4320 = vmatpush1.bf16.msra.mxu0 %v4209
    %4321 = vmatprep.subr.bf16.mxu0 %v4214
    %4322 = vmatpush1.bf16.msra.mxu0 %v4213
    %4323 = vmatprep.subr.bf16.mxu0 %v4218
    %4324 = vmatpush1.bf16.msra.mxu0 %v4217
    %4325 = vmatprep.subr.bf16.mxu0 %v4222
    %4326 = vmatpush1.bf16.msra.mxu0 %v4221
    %4327 = vmatprep.subr.bf16.mxu0 %v4226
    %4328 = vmatpush1.bf16.msra.mxu0 %v4225
    %4329 = vmatprep.subr.bf16.mxu0 %v4230
    %4330 = vmatpush1.bf16.msra.mxu0 %v4229
    %4331 = vmatprep.subr.bf16.mxu0 %v4234
    %4332 = vmatpush1.bf16.msra.mxu0 %v4233
    %4333 = vmatprep.mubr.bf16.mxu0 %v3974
    %4334 = vmatmul.mubr.bf16.gmra.mrb[0].mxu0 %v3973
    %v4335 = vpop.f32.mrb[0].mxu0
    %v4336 = vadd.f32 %v3890, %v4335
    %v4337 = vpop.f32.mrb[0].mxu0
    %v4338 = vadd.f32 %v3892, %v4337
    %v4339 = vpop.f32.mrb[0].mxu0
    %v4340 = vadd.f32 %v3894, %v4339
    %v4341 = vpop.f32.mrb[0].mxu0
    %v4342 = vadd.f32 %v3896, %v4341
    %4343 = vmatprep.mubr.bf16.mxu0 %v3976
    %4344 = vmatmul.mubr.bf16.gmra.mrb[0].mxu0 %v3975
    %v4345 = vpop.f32.mrb[0].mxu0
    %v4346 = vadd.f32 %v3900, %v4345
    %v4347 = vpop.f32.mrb[0].mxu0
    %v4348 = vadd.f32 %v3902, %v4347
    %v4349 = vpop.f32.mrb[0].mxu0
    %v4350 = vadd.f32 %v3904, %v4349
    %v4351 = vpop.f32.mrb[0].mxu0
    %v4352 = vadd.f32 %v3906, %v4351
    %4353 = vdwg.mxu0
    %4354 = vmatprep.subr.bf16.mxu0 %v4176
    %4355 = vmatpush1.bf16.msra.mxu0 %v4175
    %4356 = vmatprep.subr.bf16.mxu0 %v4180
    %4357 = vmatpush1.bf16.msra.mxu0 %v4179
    %4358 = vmatprep.subr.bf16.mxu0 %v4184
    %4359 = vmatpush1.bf16.msra.mxu0 %v4183
    %4360 = vmatprep.subr.bf16.mxu0 %v4188
    %4361 = vmatpush1.bf16.msra.mxu0 %v4187
    %4362 = vmatprep.subr.bf16.mxu0 %v4192
    %4363 = vmatpush1.bf16.msra.mxu0 %v4191
    %4364 = vmatprep.subr.bf16.mxu0 %v4196
    %4365 = vmatpush1.bf16.msra.mxu0 %v4195
    %4366 = vmatprep.subr.bf16.mxu0 %v4200
    %4367 = vmatpush1.bf16.msra.mxu0 %v4199
    %4368 = vmatprep.subr.bf16.mxu0 %v4204
    %4369 = vmatpush1.bf16.msra.mxu0 %v4203
    %4370 = vmatprep.subr.bf16.mxu0 %v4208
    %4371 = vmatpush1.bf16.msra.mxu0 %v4207
    %4372 = vmatprep.subr.bf16.mxu0 %v4212
    %4373 = vmatpush1.bf16.msra.mxu0 %v4211
    %4374 = vmatprep.subr.bf16.mxu0 %v4216
    %4375 = vmatpush1.bf16.msra.mxu0 %v4215
    %4376 = vmatprep.subr.bf16.mxu0 %v4220
    %4377 = vmatpush1.bf16.msra.mxu0 %v4219
    %4378 = vmatprep.subr.bf16.mxu0 %v4224
    %4379 = vmatpush1.bf16.msra.mxu0 %v4223
    %4380 = vmatprep.subr.bf16.mxu0 %v4228
    %4381 = vmatpush1.bf16.msra.mxu0 %v4227
    %4382 = vmatprep.subr.bf16.mxu0 %v4232
    %4383 = vmatpush1.bf16.msra.mxu0 %v4231
    %4384 = vmatprep.subr.bf16.mxu0 %v4236
    %4385 = vmatpush1.bf16.msra.mxu0 %v4235
    %4386 = vmatprep.mubr.bf16.mxu0 %v3974
    %4387 = vmatmul.mubr.bf16.gmra.mrb[0].mxu0 %v3973
    %v4388 = vpop.f32.mrb[0].mxu0
    %v4389 = vadd.f32 %v3943, %v4388
    %v4390 = vpop.f32.mrb[0].mxu0
    %v4391 = vadd.f32 %v3945, %v4390
    %v4392 = vpop.f32.mrb[0].mxu0
    %v4393 = vadd.f32 %v3947, %v4392
    %v4394 = vpop.f32.mrb[0].mxu0
    %v4395 = vadd.f32 %v3949, %v4394
    %4396 = vmatprep.mubr.bf16.mxu0 %v3976
    %4397 = vmatmul.mubr.bf16.gmra.mrb[0].mxu0 %v3975
    %v4398 = vpop.f32.mrb[0].mxu0
    %v4399 = vadd.f32 %v3953, %v4398
    %v4400 = vpop.f32.mrb[0].mxu0
    %v4401 = vadd.f32 %v3955, %v4400
    %v4402 = vpop.f32.mrb[0].mxu0
    %v4403 = vadd.f32 %v3957, %v4402
    %v4404 = vpop.f32.mrb[0].mxu0
    %v4405 = vadd.f32 %v3959, %v4404
    %4406 = vdwg.mxu0
    %s4407 = scalar_lea.vmem [#allocation4], 16
    %v4408 = vld [vmem:[%s4407] sm:$0xff]
    %v4409 = vld [vmem:[%s4407 + $0x8] sm:$0xff]
    %v4410 = vld [vmem:[%s4407 + $0x10] sm:$0xff]
    %v4411 = vld [vmem:[%s4407 + $0x18] sm:$0xff]
    %s4412 = scalar_lea.vmem [#allocation7], 1024
    %v4413 = vld [vmem:[%s4412] sm:$0xff]
    %v4414 = vld [vmem:[%s4412 + $0x8] sm:$0xff]
    %v4415 = vld [vmem:[%s4412 + $0x10] sm:$0xff]
    %v4416 = vld [vmem:[%s4412 + $0x18] sm:$0xff]
    %v4417 = vld [vmem:[%s4412 + $0x20] sm:$0xff]
    %v4418 = vld [vmem:[%s4412 + $0x28] sm:$0xff]
    %v4419 = vld [vmem:[%s4412 + $0x30] sm:$0xff]
    %v4420 = vld [vmem:[%s4412 + $0x38] sm:$0xff]
    %v4421 = vld [vmem:[%s4412 + $0x40] sm:$0xff]
    %v4422 = vld [vmem:[%s4412 + $0x48] sm:$0xff]
    %v4423 = vld [vmem:[%s4412 + $0x50] sm:$0xff]
    %v4424 = vld [vmem:[%s4412 + $0x58] sm:$0xff]
    %v4425 = vld [vmem:[%s4412 + $0x60] sm:$0xff]
    %v4426 = vld [vmem:[%s4412 + $0x68] sm:$0xff]
    %v4427 = vld [vmem:[%s4412 + $0x70] sm:$0xff]
    %v4428 = vld [vmem:[%s4412 + $0x78] sm:$0xff]
    %v4429 = vld [vmem:[%s4412 + $0x80] sm:$0xff]
    %v4430 = vld [vmem:[%s4412 + $0x88] sm:$0xff]
    %v4431 = vld [vmem:[%s4412 + $0x90] sm:$0xff]
    %v4432 = vld [vmem:[%s4412 + $0x98] sm:$0xff]
    %v4433 = vld [vmem:[%s4412 + $0xa0] sm:$0xff]
    %v4434 = vld [vmem:[%s4412 + $0xa8] sm:$0xff]
    %v4435 = vld [vmem:[%s4412 + $0xb0] sm:$0xff]
    %v4436 = vld [vmem:[%s4412 + $0xb8] sm:$0xff]
    %v4437 = vld [vmem:[%s4412 + $0xc0] sm:$0xff]
    %v4438 = vld [vmem:[%s4412 + $0xc8] sm:$0xff]
    %v4439 = vld [vmem:[%s4412 + $0xd0] sm:$0xff]
    %v4440 = vld [vmem:[%s4412 + $0xd8] sm:$0xff]
    %v4441 = vld [vmem:[%s4412 + $0xe0] sm:$0xff]
    %v4442 = vld [vmem:[%s4412 + $0xe8] sm:$0xff]
    %v4443 = vld [vmem:[%s4412 + $0xf0] sm:$0xff]
    %v4444 = vld [vmem:[%s4412 + $0xf8] sm:$0xff]
    %v4445 = vld [vmem:[%s4412 + $0x100] sm:$0xff]
    %v4446 = vld [vmem:[%s4412 + $0x108] sm:$0xff]
    %v4447 = vld [vmem:[%s4412 + $0x110] sm:$0xff]
    %v4448 = vld [vmem:[%s4412 + $0x118] sm:$0xff]
    %v4449 = vld [vmem:[%s4412 + $0x120] sm:$0xff]
    %v4450 = vld [vmem:[%s4412 + $0x128] sm:$0xff]
    %v4451 = vld [vmem:[%s4412 + $0x130] sm:$0xff]
    %v4452 = vld [vmem:[%s4412 + $0x138] sm:$0xff]
    %v4453 = vld [vmem:[%s4412 + $0x140] sm:$0xff]
    %v4454 = vld [vmem:[%s4412 + $0x148] sm:$0xff]
    %v4455 = vld [vmem:[%s4412 + $0x150] sm:$0xff]
    %v4456 = vld [vmem:[%s4412 + $0x158] sm:$0xff]
    %v4457 = vld [vmem:[%s4412 + $0x160] sm:$0xff]
    %v4458 = vld [vmem:[%s4412 + $0x168] sm:$0xff]
    %v4459 = vld [vmem:[%s4412 + $0x170] sm:$0xff]
    %v4460 = vld [vmem:[%s4412 + $0x178] sm:$0xff]
    %v4461 = vld [vmem:[%s4412 + $0x180] sm:$0xff]
    %v4462 = vld [vmem:[%s4412 + $0x188] sm:$0xff]
    %v4463 = vld [vmem:[%s4412 + $0x190] sm:$0xff]
    %v4464 = vld [vmem:[%s4412 + $0x198] sm:$0xff]
    %v4465 = vld [vmem:[%s4412 + $0x1a0] sm:$0xff]
    %v4466 = vld [vmem:[%s4412 + $0x1a8] sm:$0xff]
    %v4467 = vld [vmem:[%s4412 + $0x1b0] sm:$0xff]
    %v4468 = vld [vmem:[%s4412 + $0x1b8] sm:$0xff]
    %v4469 = vld [vmem:[%s4412 + $0x1c0] sm:$0xff]
    %v4470 = vld [vmem:[%s4412 + $0x1c8] sm:$0xff]
    %v4471 = vld [vmem:[%s4412 + $0x1d0] sm:$0xff]
    %v4472 = vld [vmem:[%s4412 + $0x1d8] sm:$0xff]
    %v4473 = vld [vmem:[%s4412 + $0x1e0] sm:$0xff]
    %v4474 = vld [vmem:[%s4412 + $0x1e8] sm:$0xff]
    %v4475 = vld [vmem:[%s4412 + $0x1f0] sm:$0xff]
    %v4476 = vld [vmem:[%s4412 + $0x1f8] sm:$0xff]
    %v4481 = vunpack.c.l.b16 %v4408
    %v4482 = vunpack.c.h.b16 %v4408
    %v4483 = vunpack.c.l.b16 %v4409
    %v4484 = vunpack.c.h.b16 %v4409
    %v4485 = vunpack.c.l.b16 %v4410
    %v4486 = vunpack.c.h.b16 %v4410
    %v4487 = vunpack.c.l.b16 %v4411
    %v4488 = vunpack.c.h.b16 %v4411
    %v4489 = vpack.c.b16 %v4483, %v4481
    %v4490 = vpack.c.b16 %v4484, %v4482
    %v4491 = vpack.c.b16 %v4487, %v4485
    %v4492 = vpack.c.b16 %v4488, %v4486
    %v4561 = vunpack.c.l.b16 %v4413
    %v4562 = vunpack.c.h.b16 %v4413
    %v4563 = vunpack.c.l.b16 %v4414
    %v4564 = vunpack.c.h.b16 %v4414
    %v4565 = vunpack.c.l.b16 %v4415
    %v4566 = vunpack.c.h.b16 %v4415
    %v4567 = vunpack.c.l.b16 %v4416
    %v4568 = vunpack.c.h.b16 %v4416
    %v4569 = vunpack.c.l.b16 %v4417
    %v4570 = vunpack.c.h.b16 %v4417
    %v4571 = vunpack.c.l.b16 %v4418
    %v4572 = vunpack.c.h.b16 %v4418
    %v4573 = vunpack.c.l.b16 %v4419
    %v4574 = vunpack.c.h.b16 %v4419
    %v4575 = vunpack.c.l.b16 %v4420
    %v4576 = vunpack.c.h.b16 %v4420
    %v4577 = vunpack.c.l.b16 %v4421
    %v4578 = vunpack.c.h.b16 %v4421
    %v4579 = vunpack.c.l.b16 %v4422
    %v4580 = vunpack.c.h.b16 %v4422
    %v4581 = vunpack.c.l.b16 %v4423
    %v4582 = vunpack.c.h.b16 %v4423
    %v4583 = vunpack.c.l.b16 %v4424
    %v4584 = vunpack.c.h.b16 %v4424
    %v4585 = vunpack.c.l.b16 %v4425
    %v4586 = vunpack.c.h.b16 %v4425
    %v4587 = vunpack.c.l.b16 %v4426
    %v4588 = vunpack.c.h.b16 %v4426
    %v4589 = vunpack.c.l.b16 %v4427
    %v4590 = vunpack.c.h.b16 %v4427
    %v4591 = vunpack.c.l.b16 %v4428
    %v4592 = vunpack.c.h.b16 %v4428
    %v4593 = vunpack.c.l.b16 %v4429
    %v4594 = vunpack.c.h.b16 %v4429
    %v4595 = vunpack.c.l.b16 %v4430
    %v4596 = vunpack.c.h.b16 %v4430
    %v4597 = vunpack.c.l.b16 %v4431
    %v4598 = vunpack.c.h.b16 %v4431
    %v4599 = vunpack.c.l.b16 %v4432
    %v4600 = vunpack.c.h.b16 %v4432
    %v4601 = vunpack.c.l.b16 %v4433
    %v4602 = vunpack.c.h.b16 %v4433
    %v4603 = vunpack.c.l.b16 %v4434
    %v4604 = vunpack.c.h.b16 %v4434
    %v4605 = vunpack.c.l.b16 %v4435
    %v4606 = vunpack.c.h.b16 %v4435
    %v4607 = vunpack.c.l.b16 %v4436
    %v4608 = vunpack.c.h.b16 %v4436
    %v4609 = vunpack.c.l.b16 %v4437
    %v4610 = vunpack.c.h.b16 %v4437
    %v4611 = vunpack.c.l.b16 %v4438
    %v4612 = vunpack.c.h.b16 %v4438
    %v4613 = vunpack.c.l.b16 %v4439
    %v4614 = vunpack.c.h.b16 %v4439
    %v4615 = vunpack.c.l.b16 %v4440
    %v4616 = vunpack.c.h.b16 %v4440
    %v4617 = vunpack.c.l.b16 %v4441
    %v4618 = vunpack.c.h.b16 %v4441
    %v4619 = vunpack.c.l.b16 %v4442
    %v4620 = vunpack.c.h.b16 %v4442
    %v4621 = vunpack.c.l.b16 %v4443
    %v4622 = vunpack.c.h.b16 %v4443
    %v4623 = vunpack.c.l.b16 %v4444
    %v4624 = vunpack.c.h.b16 %v4444
    %v4625 = vunpack.c.l.b16 %v4445
    %v4626 = vunpack.c.h.b16 %v4445
    %v4627 = vunpack.c.l.b16 %v4446
    %v4628 = vunpack.c.h.b16 %v4446
    %v4629 = vunpack.c.l.b16 %v4447
    %v4630 = vunpack.c.h.b16 %v4447
    %v4631 = vunpack.c.l.b16 %v4448
    %v4632 = vunpack.c.h.b16 %v4448
    %v4633 = vunpack.c.l.b16 %v4449
    %v4634 = vunpack.c.h.b16 %v4449
    %v4635 = vunpack.c.l.b16 %v4450
    %v4636 = vunpack.c.h.b16 %v4450
    %v4637 = vunpack.c.l.b16 %v4451
    %v4638 = vunpack.c.h.b16 %v4451
    %v4639 = vunpack.c.l.b16 %v4452
    %v4640 = vunpack.c.h.b16 %v4452
    %v4641 = vunpack.c.l.b16 %v4453
    %v4642 = vunpack.c.h.b16 %v4453
    %v4643 = vunpack.c.l.b16 %v4454
    %v4644 = vunpack.c.h.b16 %v4454
    %v4645 = vunpack.c.l.b16 %v4455
    %v4646 = vunpack.c.h.b16 %v4455
    %v4647 = vunpack.c.l.b16 %v4456
    %v4648 = vunpack.c.h.b16 %v4456
    %v4649 = vunpack.c.l.b16 %v4457
    %v4650 = vunpack.c.h.b16 %v4457
    %v4651 = vunpack.c.l.b16 %v4458
    %v4652 = vunpack.c.h.b16 %v4458
    %v4653 = vunpack.c.l.b16 %v4459
    %v4654 = vunpack.c.h.b16 %v4459
    %v4655 = vunpack.c.l.b16 %v4460
    %v4656 = vunpack.c.h.b16 %v4460
    %v4657 = vunpack.c.l.b16 %v4461
    %v4658 = vunpack.c.h.b16 %v4461
    %v4659 = vunpack.c.l.b16 %v4462
    %v4660 = vunpack.c.h.b16 %v4462
    %v4661 = vunpack.c.l.b16 %v4463
    %v4662 = vunpack.c.h.b16 %v4463
    %v4663 = vunpack.c.l.b16 %v4464
    %v4664 = vunpack.c.h.b16 %v4464
    %v4665 = vunpack.c.l.b16 %v4465
    %v4666 = vunpack.c.h.b16 %v4465
    %v4667 = vunpack.c.l.b16 %v4466
    %v4668 = vunpack.c.h.b16 %v4466
    %v4669 = vunpack.c.l.b16 %v4467
    %v4670 = vunpack.c.h.b16 %v4467
    %v4671 = vunpack.c.l.b16 %v4468
    %v4672 = vunpack.c.h.b16 %v4468
    %v4673 = vunpack.c.l.b16 %v4469
    %v4674 = vunpack.c.h.b16 %v4469
    %v4675 = vunpack.c.l.b16 %v4470
    %v4676 = vunpack.c.h.b16 %v4470
    %v4677 = vunpack.c.l.b16 %v4471
    %v4678 = vunpack.c.h.b16 %v4471
    %v4679 = vunpack.c.l.b16 %v4472
    %v4680 = vunpack.c.h.b16 %v4472
    %v4681 = vunpack.c.l.b16 %v4473
    %v4682 = vunpack.c.h.b16 %v4473
    %v4683 = vunpack.c.l.b16 %v4474
    %v4684 = vunpack.c.h.b16 %v4474
    %v4685 = vunpack.c.l.b16 %v4475
    %v4686 = vunpack.c.h.b16 %v4475
    %v4687 = vunpack.c.l.b16 %v4476
    %v4688 = vunpack.c.h.b16 %v4476
    %v4689 = vpack.c.b16 %v4565, %v4561
    %v4690 = vpack.c.b16 %v4566, %v4562
    %v4691 = vpack.c.b16 %v4567, %v4563
    %v4692 = vpack.c.b16 %v4568, %v4564
    %v4693 = vpack.c.b16 %v4573, %v4569
    %v4694 = vpack.c.b16 %v4574, %v4570
    %v4695 = vpack.c.b16 %v4575, %v4571
    %v4696 = vpack.c.b16 %v4576, %v4572
    %v4697 = vpack.c.b16 %v4581, %v4577
    %v4698 = vpack.c.b16 %v4582, %v4578
    %v4699 = vpack.c.b16 %v4583, %v4579
    %v4700 = vpack.c.b16 %v4584, %v4580
    %v4701 = vpack.c.b16 %v4589, %v4585
    %v4702 = vpack.c.b16 %v4590, %v4586
    %v4703 = vpack.c.b16 %v4591, %v4587
    %v4704 = vpack.c.b16 %v4592, %v4588
    %v4705 = vpack.c.b16 %v4597, %v4593
    %v4706 = vpack.c.b16 %v4598, %v4594
    %v4707 = vpack.c.b16 %v4599, %v4595
    %v4708 = vpack.c.b16 %v4600, %v4596
    %v4709 = vpack.c.b16 %v4605, %v4601
    %v4710 = vpack.c.b16 %v4606, %v4602
    %v4711 = vpack.c.b16 %v4607, %v4603
    %v4712 = vpack.c.b16 %v4608, %v4604
    %v4713 = vpack.c.b16 %v4613, %v4609
    %v4714 = vpack.c.b16 %v4614, %v4610
    %v4715 = vpack.c.b16 %v4615, %v4611
    %v4716 = vpack.c.b16 %v4616, %v4612
    %v4717 = vpack.c.b16 %v4621, %v4617
    %v4718 = vpack.c.b16 %v4622, %v4618
    %v4719 = vpack.c.b16 %v4623, %v4619
    %v4720 = vpack.c.b16 %v4624, %v4620
    %v4721 = vpack.c.b16 %v4629, %v4625
    %v4722 = vpack.c.b16 %v4630, %v4626
    %v4723 = vpack.c.b16 %v4631, %v4627
    %v4724 = vpack.c.b16 %v4632, %v4628
    %v4725 = vpack.c.b16 %v4637, %v4633
    %v4726 = vpack.c.b16 %v4638, %v4634
    %v4727 = vpack.c.b16 %v4639, %v4635
    %v4728 = vpack.c.b16 %v4640, %v4636
    %v4729 = vpack.c.b16 %v4645, %v4641
    %v4730 = vpack.c.b16 %v4646, %v4642
    %v4731 = vpack.c.b16 %v4647, %v4643
    %v4732 = vpack.c.b16 %v4648, %v4644
    %v4733 = vpack.c.b16 %v4653, %v4649
    %v4734 = vpack.c.b16 %v4654, %v4650
    %v4735 = vpack.c.b16 %v4655, %v4651
    %v4736 = vpack.c.b16 %v4656, %v4652
    %v4737 = vpack.c.b16 %v4661, %v4657
    %v4738 = vpack.c.b16 %v4662, %v4658
    %v4739 = vpack.c.b16 %v4663, %v4659
    %v4740 = vpack.c.b16 %v4664, %v4660
    %v4741 = vpack.c.b16 %v4669, %v4665
    %v4742 = vpack.c.b16 %v4670, %v4666
    %v4743 = vpack.c.b16 %v4671, %v4667
    %v4744 = vpack.c.b16 %v4672, %v4668
    %v4745 = vpack.c.b16 %v4677, %v4673
    %v4746 = vpack.c.b16 %v4678, %v4674
    %v4747 = vpack.c.b16 %v4679, %v4675
    %v4748 = vpack.c.b16 %v4680, %v4676
    %v4749 = vpack.c.b16 %v4685, %v4681
    %v4750 = vpack.c.b16 %v4686, %v4682
    %v4751 = vpack.c.b16 %v4687, %v4683
    %v4752 = vpack.c.b16 %v4688, %v4684
    %4817 = vmatprep.subr.bf16.mxu0 %v4690
    %4818 = vmatpush1.bf16.msra.mxu0 %v4689
    %4819 = vmatprep.subr.bf16.mxu0 %v4694
    %4820 = vmatpush1.bf16.msra.mxu0 %v4693
    %4821 = vmatprep.subr.bf16.mxu0 %v4698
    %4822 = vmatpush1.bf16.msra.mxu0 %v4697
    %4823 = vmatprep.subr.bf16.mxu0 %v4702
    %4824 = vmatpush1.bf16.msra.mxu0 %v4701
    %4825 = vmatprep.subr.bf16.mxu0 %v4706
    %4826 = vmatpush1.bf16.msra.mxu0 %v4705
    %4827 = vmatprep.subr.bf16.mxu0 %v4710
    %4828 = vmatpush1.bf16.msra.mxu0 %v4709
    %4829 = vmatprep.subr.bf16.mxu0 %v4714
    %4830 = vmatpush1.bf16.msra.mxu0 %v4713
    %4831 = vmatprep.subr.bf16.mxu0 %v4718
    %4832 = vmatpush1.bf16.msra.mxu0 %v4717
    %4833 = vmatprep.subr.bf16.mxu0 %v4722
    %4834 = vmatpush1.bf16.msra.mxu0 %v4721
    %4835 = vmatprep.subr.bf16.mxu0 %v4726
    %4836 = vmatpush1.bf16.msra.mxu0 %v4725
    %4837 = vmatprep.subr.bf16.mxu0 %v4730
    %4838 = vmatpush1.bf16.msra.mxu0 %v4729
    %4839 = vmatprep.subr.bf16.mxu0 %v4734
    %4840 = vmatpush1.bf16.msra.mxu0 %v4733
    %4841 = vmatprep.subr.bf16.mxu0 %v4738
    %4842 = vmatpush1.bf16.msra.mxu0 %v4737
    %4843 = vmatprep.subr.bf16.mxu0 %v4742
    %4844 = vmatpush1.bf16.msra.mxu0 %v4741
    %4845 = vmatprep.subr.bf16.mxu0 %v4746
    %4846 = vmatpush1.bf16.msra.mxu0 %v4745
    %4847 = vmatprep.subr.bf16.mxu0 %v4750
    %4848 = vmatpush1.bf16.msra.mxu0 %v4749
    %4849 = vmatprep.mubr.bf16.mxu0 %v4490
    %4850 = vmatmul.mubr.bf16.gmra.mrb[0].mxu0 %v4489
    %v4851 = vpop.f32.mrb[0].mxu0
    %v4852 = vadd.f32 0.0, %v4851
    %v4853 = vpop.f32.mrb[0].mxu0
    %v4854 = vadd.f32 0.0, %v4853
    %v4855 = vpop.f32.mrb[0].mxu0
    %v4856 = vadd.f32 0.0, %v4855
    %v4857 = vpop.f32.mrb[0].mxu0
    %v4858 = vadd.f32 0.0, %v4857
    %4859 = vmatprep.mubr.bf16.mxu0 %v4492
    %4860 = vmatmul.mubr.bf16.gmra.mrb[0].mxu0 %v4491
    %v4861 = vpop.f32.mrb[0].mxu0
    %v4862 = vadd.f32 0.0, %v4861
    %v4863 = vpop.f32.mrb[0].mxu0
    %v4864 = vadd.f32 0.0, %v4863
    %v4865 = vpop.f32.mrb[0].mxu0
    %v4866 = vadd.f32 0.0, %v4865
    %v4867 = vpop.f32.mrb[0].mxu0
    %v4868 = vadd.f32 0.0, %v4867
    %4869 = vdwg.mxu0
    %4870 = vmatprep.subr.bf16.mxu0 %v4692
    %4871 = vmatpush1.bf16.msra.mxu0 %v4691
    %4872 = vmatprep.subr.bf16.mxu0 %v4696
    %4873 = vmatpush1.bf16.msra.mxu0 %v4695
    %4874 = vmatprep.subr.bf16.mxu0 %v4700
    %4875 = vmatpush1.bf16.msra.mxu0 %v4699
    %4876 = vmatprep.subr.bf16.mxu0 %v4704
    %4877 = vmatpush1.bf16.msra.mxu0 %v4703
    %4878 = vmatprep.subr.bf16.mxu0 %v4708
    %4879 = vmatpush1.bf16.msra.mxu0 %v4707
    %4880 = vmatprep.subr.bf16.mxu0 %v4712
    %4881 = vmatpush1.bf16.msra.mxu0 %v4711
    %4882 = vmatprep.subr.bf16.mxu0 %v4716
    %4883 = vmatpush1.bf16.msra.mxu0 %v4715
    %4884 = vmatprep.subr.bf16.mxu0 %v4720
    %4885 = vmatpush1.bf16.msra.mxu0 %v4719
    %4886 = vmatprep.subr.bf16.mxu0 %v4724
    %4887 = vmatpush1.bf16.msra.mxu0 %v4723
    %4888 = vmatprep.subr.bf16.mxu0 %v4728
    %4889 = vmatpush1.bf16.msra.mxu0 %v4727
    %4890 = vmatprep.subr.bf16.mxu0 %v4732
    %4891 = vmatpush1.bf16.msra.mxu0 %v4731
    %4892 = vmatprep.subr.bf16.mxu0 %v4736
    %4893 = vmatpush1.bf16.msra.mxu0 %v4735
    %4894 = vmatprep.subr.bf16.mxu0 %v4740
    %4895 = vmatpush1.bf16.msra.mxu0 %v4739
    %4896 = vmatprep.subr.bf16.mxu0 %v4744
    %4897 = vmatpush1.bf16.msra.mxu0 %v4743
    %4898 = vmatprep.subr.bf16.mxu0 %v4748
    %4899 = vmatpush1.bf16.msra.mxu0 %v4747
    %4900 = vmatprep.subr.bf16.mxu0 %v4752
    %4901 = vmatpush1.bf16.msra.mxu0 %v4751
    %4902 = vmatprep.mubr.bf16.mxu0 %v4490
    %4903 = vmatmul.mubr.bf16.gmra.mrb[0].mxu0 %v4489
    %v4904 = vpop.f32.mrb[0].mxu0
    %v4905 = vadd.f32 0.0, %v4904
    %v4906 = vpop.f32.mrb[0].mxu0
    %v4907 = vadd.f32 0.0, %v4906
    %v4908 = vpop.f32.mrb[0].mxu0
    %v4909 = vadd.f32 0.0, %v4908
    %v4910 = vpop.f32.mrb[0].mxu0
    %v4911 = vadd.f32 0.0, %v4910
    %4912 = vmatprep.mubr.bf16.mxu0 %v4492
    %4913 = vmatmul.mubr.bf16.gmra.mrb[0].mxu0 %v4491
    %v4914 = vpop.f32.mrb[0].mxu0
    %v4915 = vadd.f32 0.0, %v4914
    %v4916 = vpop.f32.mrb[0].mxu0
    %v4917 = vadd.f32 0.0, %v4916
    %v4918 = vpop.f32.mrb[0].mxu0
    %v4919 = vadd.f32 0.0, %v4918
    %v4920 = vpop.f32.mrb[0].mxu0
    %v4921 = vadd.f32 0.0, %v4920
    %4922 = vdwg.mxu0
    %v4923 = vadd.f32 %v4336, %v4852
    %v4924 = vadd.f32 %v4338, %v4854
    %v4925 = vadd.f32 %v4389, %v4905
    %v4926 = vadd.f32 %v4391, %v4907
    %v4927 = vadd.f32 %v4340, %v4856
    %v4928 = vadd.f32 %v4342, %v4858
    %v4929 = vadd.f32 %v4393, %v4909
    %v4930 = vadd.f32 %v4395, %v4911
    %v4931 = vadd.f32 %v4346, %v4862
    %v4932 = vadd.f32 %v4348, %v4864
    %v4933 = vadd.f32 %v4399, %v4915
    %v4934 = vadd.f32 %v4401, %v4917
    %v4935 = vadd.f32 %v4350, %v4866
    %v4936 = vadd.f32 %v4352, %v4868
    %v4937 = vadd.f32 %v4403, %v4919
    %v4938 = vadd.f32 %v4405, %v4921
    %v4939 = vmax.f32 %v4923, %v4925
    %v4940 = vmax.f32 %v4924, %v4926
    %v4941 = vmax.f32 %v4927, %v4929
    %v4942 = vmax.f32 %v4928, %v4930
    %v4943 = vmax.f32 %v4931, %v4933
    %v4944 = vmax.f32 %v4932, %v4934
    %v4945 = vmax.f32 %v4935, %v4937
    %v4946 = vmax.f32 %v4936, %v4938
    %v4947 = vmax.f32 %v4939, %v4941
    %v4948 = vmax.f32 %v4940, %v4942
    %v4949 = vmax.f32 %v4943, %v4945
    %v4950 = vmax.f32 %v4944, %v4946
    %v4951 = vld [vmem:[%s6] sm:$0x3]
    %v4953 = vlaneseq
    %v4954 = vshrl.u32 %v4953, 7
    %v4955 = vsub.s32 0, %v4954
    %v4956 = vrot.slane %v4951, %v4955
    %v4957 = vlaneseq
    %v4958 = vshrl.u32 %v4957, 7
    %v4959 = vsub.s32 1, %v4958
    %v4960 = vrot.slane %v4951, %v4959
    %v4963 = vadd.f32 %v4947, %v4956
    %v4964 = vadd.f32 %v4948, %v4960
    %v4965 = vadd.f32 %v4949, %v4956
    %v4966 = vadd.f32 %v4950, %v4960
    %v4967 = vmax.f32 %v4963, 0.0
    %v4968 = vmax.f32 %v4964, 0.0
    %v4969 = vmax.f32 %v4965, 0.0
    %v4970 = vmax.f32 %v4966, 0.0
    %v4971 = vpack.c.bf16 %v4967, %v4967
    %v4972 = vpack.c.bf16 %v4968, %v4968
    %v4973 = vld [vmem:[#allocation9] sm:$0xff]
    %v4974 = vld [vmem:[#allocation9 + $0x8] sm:$0xff]
    %v4975 = vld [vmem:[#allocation9 + $0x10] sm:$0xff]
    %v4976 = vld [vmem:[#allocation9 + $0x18] sm:$0xff]
    %v4977 = vld [vmem:[#allocation9 + $0x20] sm:$0xff]
    %v4978 = vld [vmem:[#allocation9 + $0x28] sm:$0xff]
    %v4979 = vld [vmem:[#allocation9 + $0x30] sm:$0xff]
    %v4980 = vld [vmem:[#allocation9 + $0x38] sm:$0xff]
    %v4981 = vld [vmem:[#allocation9 + $0x40] sm:$0xff]
    %v4982 = vld [vmem:[#allocation9 + $0x48] sm:$0xff]
    %v4983 = vld [vmem:[#allocation9 + $0x50] sm:$0xff]
    %v4984 = vld [vmem:[#allocation9 + $0x58] sm:$0xff]
    %v4985 = vld [vmem:[#allocation9 + $0x60] sm:$0xff]
    %v4986 = vld [vmem:[#allocation9 + $0x68] sm:$0xff]
    %v4987 = vld [vmem:[#allocation9 + $0x70] sm:$0xff]
    %v4988 = vld [vmem:[#allocation9 + $0x78] sm:$0xff]
    %v4989 = vld [vmem:[#allocation9 + $0x80] sm:$0xff]
    %v4990 = vld [vmem:[#allocation9 + $0x88] sm:$0xff]
    %v4991 = vld [vmem:[#allocation9 + $0x90] sm:$0xff]
    %v4992 = vld [vmem:[#allocation9 + $0x98] sm:$0xff]
    %v4993 = vld [vmem:[#allocation9 + $0xa0] sm:$0xff]
    %v4994 = vld [vmem:[#allocation9 + $0xa8] sm:$0xff]
    %v4995 = vld [vmem:[#allocation9 + $0xb0] sm:$0xff]
    %v4996 = vld [vmem:[#allocation9 + $0xb8] sm:$0xff]
    %v4997 = vld [vmem:[#allocation9 + $0xc0] sm:$0xff]
    %v4998 = vld [vmem:[#allocation9 + $0xc8] sm:$0xff]
    %v4999 = vld [vmem:[#allocation9 + $0xd0] sm:$0xff]
    %v5000 = vld [vmem:[#allocation9 + $0xd8] sm:$0xff]
    %v5001 = vld [vmem:[#allocation9 + $0xe0] sm:$0xff]
    %v5002 = vld [vmem:[#allocation9 + $0xe8] sm:$0xff]
    %v5003 = vld [vmem:[#allocation9 + $0xf0] sm:$0xff]
    %v5004 = vld [vmem:[#allocation9 + $0xf8] sm:$0xff]
    %v5005 = vld [vmem:[#allocation9 + $0x100] sm:$0xff]
    %v5006 = vld [vmem:[#allocation9 + $0x108] sm:$0xff]
    %v5007 = vld [vmem:[#allocation9 + $0x110] sm:$0xff]
    %v5008 = vld [vmem:[#allocation9 + $0x118] sm:$0xff]
    %v5009 = vld [vmem:[#allocation9 + $0x120] sm:$0xff]
    %v5010 = vld [vmem:[#allocation9 + $0x128] sm:$0xff]
    %v5011 = vld [vmem:[#allocation9 + $0x130] sm:$0xff]
    %v5012 = vld [vmem:[#allocation9 + $0x138] sm:$0xff]
    %v5013 = vld [vmem:[#allocation9 + $0x140] sm:$0xff]
    %v5014 = vld [vmem:[#allocation9 + $0x148] sm:$0xff]
    %v5015 = vld [vmem:[#allocation9 + $0x150] sm:$0xff]
    %v5016 = vld [vmem:[#allocation9 + $0x158] sm:$0xff]
    %v5017 = vld [vmem:[#allocation9 + $0x160] sm:$0xff]
    %v5018 = vld [vmem:[#allocation9 + $0x168] sm:$0xff]
    %v5019 = vld [vmem:[#allocation9 + $0x170] sm:$0xff]
    %v5020 = vld [vmem:[#allocation9 + $0x178] sm:$0xff]
    %v5021 = vld [vmem:[#allocation9 + $0x180] sm:$0xff]
    %v5022 = vld [vmem:[#allocation9 + $0x188] sm:$0xff]
    %v5023 = vld [vmem:[#allocation9 + $0x190] sm:$0xff]
    %v5024 = vld [vmem:[#allocation9 + $0x198] sm:$0xff]
    %v5025 = vld [vmem:[#allocation9 + $0x1a0] sm:$0xff]
    %v5026 = vld [vmem:[#allocation9 + $0x1a8] sm:$0xff]
    %v5027 = vld [vmem:[#allocation9 + $0x1b0] sm:$0xff]
    %v5028 = vld [vmem:[#allocation9 + $0x1b8] sm:$0xff]
    %v5029 = vld [vmem:[#allocation9 + $0x1c0] sm:$0xff]
    %v5030 = vld [vmem:[#allocation9 + $0x1c8] sm:$0xff]
    %v5031 = vld [vmem:[#allocation9 + $0x1d0] sm:$0xff]
    %v5032 = vld [vmem:[#allocation9 + $0x1d8] sm:$0xff]
    %v5033 = vld [vmem:[#allocation9 + $0x1e0] sm:$0xff]
    %v5034 = vld [vmem:[#allocation9 + $0x1e8] sm:$0xff]
    %v5035 = vld [vmem:[#allocation9 + $0x1f0] sm:$0xff]
    %v5036 = vld [vmem:[#allocation9 + $0x1f8] sm:$0xff]
    %v5037 = vpack.c.bf16 %v4969, %v4969
    %v5038 = vpack.c.bf16 %v4970, %v4970
    %s5039 = scalar_lea.vmem [#allocation9], 512
    %v5040 = vld [vmem:[%s5039] sm:$0xff]
    %v5041 = vld [vmem:[%s5039 + $0x8] sm:$0xff]
    %v5042 = vld [vmem:[%s5039 + $0x10] sm:$0xff]
    %v5043 = vld [vmem:[%s5039 + $0x18] sm:$0xff]
    %v5044 = vld [vmem:[%s5039 + $0x20] sm:$0xff]
    %v5045 = vld [vmem:[%s5039 + $0x28] sm:$0xff]
    %v5046 = vld [vmem:[%s5039 + $0x30] sm:$0xff]
    %v5047 = vld [vmem:[%s5039 + $0x38] sm:$0xff]
    %v5048 = vld [vmem:[%s5039 + $0x40] sm:$0xff]
    %v5049 = vld [vmem:[%s5039 + $0x48] sm:$0xff]
    %v5050 = vld [vmem:[%s5039 + $0x50] sm:$0xff]
    %v5051 = vld [vmem:[%s5039 + $0x58] sm:$0xff]
    %v5052 = vld [vmem:[%s5039 + $0x60] sm:$0xff]
    %v5053 = vld [vmem:[%s5039 + $0x68] sm:$0xff]
    %v5054 = vld [vmem:[%s5039 + $0x70] sm:$0xff]
    %v5055 = vld [vmem:[%s5039 + $0x78] sm:$0xff]
    %v5056 = vld [vmem:[%s5039 + $0x80] sm:$0xff]
    %v5057 = vld [vmem:[%s5039 + $0x88] sm:$0xff]
    %v5058 = vld [vmem:[%s5039 + $0x90] sm:$0xff]
    %v5059 = vld [vmem:[%s5039 + $0x98] sm:$0xff]
    %v5060 = vld [vmem:[%s5039 + $0xa0] sm:$0xff]
    %v5061 = vld [vmem:[%s5039 + $0xa8] sm:$0xff]
    %v5062 = vld [vmem:[%s5039 + $0xb0] sm:$0xff]
    %v5063 = vld [vmem:[%s5039 + $0xb8] sm:$0xff]
    %v5064 = vld [vmem:[%s5039 + $0xc0] sm:$0xff]
    %v5065 = vld [vmem:[%s5039 + $0xc8] sm:$0xff]
    %v5066 = vld [vmem:[%s5039 + $0xd0] sm:$0xff]
    %v5067 = vld [vmem:[%s5039 + $0xd8] sm:$0xff]
    %v5068 = vld [vmem:[%s5039 + $0xe0] sm:$0xff]
    %v5069 = vld [vmem:[%s5039 + $0xe8] sm:$0xff]
    %v5070 = vld [vmem:[%s5039 + $0xf0] sm:$0xff]
    %v5071 = vld [vmem:[%s5039 + $0xf8] sm:$0xff]
    %v5072 = vld [vmem:[%s5039 + $0x100] sm:$0xff]
    %v5073 = vld [vmem:[%s5039 + $0x108] sm:$0xff]
    %v5074 = vld [vmem:[%s5039 + $0x110] sm:$0xff]
    %v5075 = vld [vmem:[%s5039 + $0x118] sm:$0xff]
    %v5076 = vld [vmem:[%s5039 + $0x120] sm:$0xff]
    %v5077 = vld [vmem:[%s5039 + $0x128] sm:$0xff]
    %v5078 = vld [vmem:[%s5039 + $0x130] sm:$0xff]
    %v5079 = vld [vmem:[%s5039 + $0x138] sm:$0xff]
    %v5080 = vld [vmem:[%s5039 + $0x140] sm:$0xff]
    %v5081 = vld [vmem:[%s5039 + $0x148] sm:$0xff]
    %v5082 = vld [vmem:[%s5039 + $0x150] sm:$0xff]
    %v5083 = vld [vmem:[%s5039 + $0x158] sm:$0xff]
    %v5084 = vld [vmem:[%s5039 + $0x160] sm:$0xff]
    %v5085 = vld [vmem:[%s5039 + $0x168] sm:$0xff]
    %v5086 = vld [vmem:[%s5039 + $0x170] sm:$0xff]
    %v5087 = vld [vmem:[%s5039 + $0x178] sm:$0xff]
    %v5088 = vld [vmem:[%s5039 + $0x180] sm:$0xff]
    %v5089 = vld [vmem:[%s5039 + $0x188] sm:$0xff]
    %v5090 = vld [vmem:[%s5039 + $0x190] sm:$0xff]
    %v5091 = vld [vmem:[%s5039 + $0x198] sm:$0xff]
    %v5092 = vld [vmem:[%s5039 + $0x1a0] sm:$0xff]
    %v5093 = vld [vmem:[%s5039 + $0x1a8] sm:$0xff]
    %v5094 = vld [vmem:[%s5039 + $0x1b0] sm:$0xff]
    %v5095 = vld [vmem:[%s5039 + $0x1b8] sm:$0xff]
    %v5096 = vld [vmem:[%s5039 + $0x1c0] sm:$0xff]
    %v5097 = vld [vmem:[%s5039 + $0x1c8] sm:$0xff]
    %v5098 = vld [vmem:[%s5039 + $0x1d0] sm:$0xff]
    %v5099 = vld [vmem:[%s5039 + $0x1d8] sm:$0xff]
    %v5100 = vld [vmem:[%s5039 + $0x1e0] sm:$0xff]
    %v5101 = vld [vmem:[%s5039 + $0x1e8] sm:$0xff]
    %v5102 = vld [vmem:[%s5039 + $0x1f0] sm:$0xff]
    %v5103 = vld [vmem:[%s5039 + $0x1f8] sm:$0xff]
    %v5168 = vunpack.c.l.b16 %v5040
    %v5169 = vunpack.c.h.b16 %v5040
    %v5170 = vunpack.c.l.b16 %v5041
    %v5171 = vunpack.c.h.b16 %v5041
    %v5172 = vunpack.c.l.b16 %v5042
    %v5173 = vunpack.c.h.b16 %v5042
    %v5174 = vunpack.c.l.b16 %v5043
    %v5175 = vunpack.c.h.b16 %v5043
    %v5176 = vunpack.c.l.b16 %v5044
    %v5177 = vunpack.c.h.b16 %v5044
    %v5178 = vunpack.c.l.b16 %v5045
    %v5179 = vunpack.c.h.b16 %v5045
    %v5180 = vunpack.c.l.b16 %v5046
    %v5181 = vunpack.c.h.b16 %v5046
    %v5182 = vunpack.c.l.b16 %v5047
    %v5183 = vunpack.c.h.b16 %v5047
    %v5184 = vunpack.c.l.b16 %v5048
    %v5185 = vunpack.c.h.b16 %v5048
    %v5186 = vunpack.c.l.b16 %v5049
    %v5187 = vunpack.c.h.b16 %v5049
    %v5188 = vunpack.c.l.b16 %v5050
    %v5189 = vunpack.c.h.b16 %v5050
    %v5190 = vunpack.c.l.b16 %v5051
    %v5191 = vunpack.c.h.b16 %v5051
    %v5192 = vunpack.c.l.b16 %v5052
    %v5193 = vunpack.c.h.b16 %v5052
    %v5194 = vunpack.c.l.b16 %v5053
    %v5195 = vunpack.c.h.b16 %v5053
    %v5196 = vunpack.c.l.b16 %v5054
    %v5197 = vunpack.c.h.b16 %v5054
    %v5198 = vunpack.c.l.b16 %v5055
    %v5199 = vunpack.c.h.b16 %v5055
    %v5200 = vunpack.c.l.b16 %v5056
    %v5201 = vunpack.c.h.b16 %v5056
    %v5202 = vunpack.c.l.b16 %v5057
    %v5203 = vunpack.c.h.b16 %v5057
    %v5204 = vunpack.c.l.b16 %v5058
    %v5205 = vunpack.c.h.b16 %v5058
    %v5206 = vunpack.c.l.b16 %v5059
    %v5207 = vunpack.c.h.b16 %v5059
    %v5208 = vunpack.c.l.b16 %v5060
    %v5209 = vunpack.c.h.b16 %v5060
    %v5210 = vunpack.c.l.b16 %v5061
    %v5211 = vunpack.c.h.b16 %v5061
    %v5212 = vunpack.c.l.b16 %v5062
    %v5213 = vunpack.c.h.b16 %v5062
    %v5214 = vunpack.c.l.b16 %v5063
    %v5215 = vunpack.c.h.b16 %v5063
    %v5216 = vunpack.c.l.b16 %v5064
    %v5217 = vunpack.c.h.b16 %v5064
    %v5218 = vunpack.c.l.b16 %v5065
    %v5219 = vunpack.c.h.b16 %v5065
    %v5220 = vunpack.c.l.b16 %v5066
    %v5221 = vunpack.c.h.b16 %v5066
    %v5222 = vunpack.c.l.b16 %v5067
    %v5223 = vunpack.c.h.b16 %v5067
    %v5224 = vunpack.c.l.b16 %v5068
    %v5225 = vunpack.c.h.b16 %v5068
    %v5226 = vunpack.c.l.b16 %v5069
    %v5227 = vunpack.c.h.b16 %v5069
    %v5228 = vunpack.c.l.b16 %v5070
    %v5229 = vunpack.c.h.b16 %v5070
    %v5230 = vunpack.c.l.b16 %v5071
    %v5231 = vunpack.c.h.b16 %v5071
    %v5232 = vunpack.c.l.b16 %v5072
    %v5233 = vunpack.c.h.b16 %v5072
    %v5234 = vunpack.c.l.b16 %v5073
    %v5235 = vunpack.c.h.b16 %v5073
    %v5236 = vunpack.c.l.b16 %v5074
    %v5237 = vunpack.c.h.b16 %v5074
    %v5238 = vunpack.c.l.b16 %v5075
    %v5239 = vunpack.c.h.b16 %v5075
    %v5240 = vunpack.c.l.b16 %v5076
    %v5241 = vunpack.c.h.b16 %v5076
    %v5242 = vunpack.c.l.b16 %v5077
    %v5243 = vunpack.c.h.b16 %v5077
    %v5244 = vunpack.c.l.b16 %v5078
    %v5245 = vunpack.c.h.b16 %v5078
    %v5246 = vunpack.c.l.b16 %v5079
    %v5247 = vunpack.c.h.b16 %v5079
    %v5248 = vunpack.c.l.b16 %v5080
    %v5249 = vunpack.c.h.b16 %v5080
    %v5250 = vunpack.c.l.b16 %v5081
    %v5251 = vunpack.c.h.b16 %v5081
    %v5252 = vunpack.c.l.b16 %v5082
    %v5253 = vunpack.c.h.b16 %v5082
    %v5254 = vunpack.c.l.b16 %v5083
    %v5255 = vunpack.c.h.b16 %v5083
    %v5256 = vunpack.c.l.b16 %v5084
    %v5257 = vunpack.c.h.b16 %v5084
    %v5258 = vunpack.c.l.b16 %v5085
    %v5259 = vunpack.c.h.b16 %v5085
    %v5260 = vunpack.c.l.b16 %v5086
    %v5261 = vunpack.c.h.b16 %v5086
    %v5262 = vunpack.c.l.b16 %v5087
    %v5263 = vunpack.c.h.b16 %v5087
    %v5264 = vunpack.c.l.b16 %v5088
    %v5265 = vunpack.c.h.b16 %v5088
    %v5266 = vunpack.c.l.b16 %v5089
    %v5267 = vunpack.c.h.b16 %v5089
    %v5268 = vunpack.c.l.b16 %v5090
    %v5269 = vunpack.c.h.b16 %v5090
    %v5270 = vunpack.c.l.b16 %v5091
    %v5271 = vunpack.c.h.b16 %v5091
    %v5272 = vunpack.c.l.b16 %v5092
    %v5273 = vunpack.c.h.b16 %v5092
    %v5274 = vunpack.c.l.b16 %v5093
    %v5275 = vunpack.c.h.b16 %v5093
    %v5276 = vunpack.c.l.b16 %v5094
    %v5277 = vunpack.c.h.b16 %v5094
    %v5278 = vunpack.c.l.b16 %v5095
    %v5279 = vunpack.c.h.b16 %v5095
    %v5280 = vunpack.c.l.b16 %v5096
    %v5281 = vunpack.c.h.b16 %v5096
    %v5282 = vunpack.c.l.b16 %v5097
    %v5283 = vunpack.c.h.b16 %v5097
    %v5284 = vunpack.c.l.b16 %v5098
    %v5285 = vunpack.c.h.b16 %v5098
    %v5286 = vunpack.c.l.b16 %v5099
    %v5287 = vunpack.c.h.b16 %v5099
    %v5288 = vunpack.c.l.b16 %v5100
    %v5289 = vunpack.c.h.b16 %v5100
    %v5290 = vunpack.c.l.b16 %v5101
    %v5291 = vunpack.c.h.b16 %v5101
    %v5292 = vunpack.c.l.b16 %v5102
    %v5293 = vunpack.c.h.b16 %v5102
    %v5294 = vunpack.c.l.b16 %v5103
    %v5295 = vunpack.c.h.b16 %v5103
    %v5296 = vpack.c.b16 %v5172, %v5168
    %v5297 = vpack.c.b16 %v5173, %v5169
    %v5298 = vpack.c.b16 %v5174, %v5170
    %v5299 = vpack.c.b16 %v5175, %v5171
    %v5300 = vpack.c.b16 %v5180, %v5176
    %v5301 = vpack.c.b16 %v5181, %v5177
    %v5302 = vpack.c.b16 %v5182, %v5178
    %v5303 = vpack.c.b16 %v5183, %v5179
    %v5304 = vpack.c.b16 %v5188, %v5184
    %v5305 = vpack.c.b16 %v5189, %v5185
    %v5306 = vpack.c.b16 %v5190, %v5186
    %v5307 = vpack.c.b16 %v5191, %v5187
    %v5308 = vpack.c.b16 %v5196, %v5192
    %v5309 = vpack.c.b16 %v5197, %v5193
    %v5310 = vpack.c.b16 %v5198, %v5194
    %v5311 = vpack.c.b16 %v5199, %v5195
    %v5312 = vpack.c.b16 %v5204, %v5200
    %v5313 = vpack.c.b16 %v5205, %v5201
    %v5314 = vpack.c.b16 %v5206, %v5202
    %v5315 = vpack.c.b16 %v5207, %v5203
    %v5316 = vpack.c.b16 %v5212, %v5208
    %v5317 = vpack.c.b16 %v5213, %v5209
    %v5318 = vpack.c.b16 %v5214, %v5210
    %v5319 = vpack.c.b16 %v5215, %v5211
    %v5320 = vpack.c.b16 %v5220, %v5216
    %v5321 = vpack.c.b16 %v5221, %v5217
    %v5322 = vpack.c.b16 %v5222, %v5218
    %v5323 = vpack.c.b16 %v5223, %v5219
    %v5324 = vpack.c.b16 %v5228, %v5224
    %v5325 = vpack.c.b16 %v5229, %v5225
    %v5326 = vpack.c.b16 %v5230, %v5226
    %v5327 = vpack.c.b16 %v5231, %v5227
    %v5328 = vpack.c.b16 %v5236, %v5232
    %v5329 = vpack.c.b16 %v5237, %v5233
    %v5330 = vpack.c.b16 %v5238, %v5234
    %v5331 = vpack.c.b16 %v5239, %v5235
    %v5332 = vpack.c.b16 %v5244, %v5240
    %v5333 = vpack.c.b16 %v5245, %v5241
    %v5334 = vpack.c.b16 %v5246, %v5242
    %v5335 = vpack.c.b16 %v5247, %v5243
    %v5336 = vpack.c.b16 %v5252, %v5248
    %v5337 = vpack.c.b16 %v5253, %v5249
    %v5338 = vpack.c.b16 %v5254, %v5250
    %v5339 = vpack.c.b16 %v5255, %v5251
    %v5340 = vpack.c.b16 %v5260, %v5256
    %v5341 = vpack.c.b16 %v5261, %v5257
    %v5342 = vpack.c.b16 %v5262, %v5258
    %v5343 = vpack.c.b16 %v5263, %v5259
    %v5344 = vpack.c.b16 %v5268, %v5264
    %v5345 = vpack.c.b16 %v5269, %v5265
    %v5346 = vpack.c.b16 %v5270, %v5266
    %v5347 = vpack.c.b16 %v5271, %v5267
    %v5348 = vpack.c.b16 %v5276, %v5272
    %v5349 = vpack.c.b16 %v5277, %v5273
    %v5350 = vpack.c.b16 %v5278, %v5274
    %v5351 = vpack.c.b16 %v5279, %v5275
    %v5352 = vpack.c.b16 %v5284, %v5280
    %v5353 = vpack.c.b16 %v5285, %v5281
    %v5354 = vpack.c.b16 %v5286, %v5282
    %v5355 = vpack.c.b16 %v5287, %v5283
    %v5356 = vpack.c.b16 %v5292, %v5288
    %v5357 = vpack.c.b16 %v5293, %v5289
    %v5358 = vpack.c.b16 %v5294, %v5290
    %v5359 = vpack.c.b16 %v5295, %v5291
    %5424 = vmatprep.subr.bf16.mxu0 %v5297
    %5425 = vmatpush1.bf16.msra.mxu0 %v5296
    %5426 = vmatprep.subr.bf16.mxu0 %v5301
    %5427 = vmatpush1.bf16.msra.mxu0 %v5300
    %5428 = vmatprep.subr.bf16.mxu0 %v5305
    %5429 = vmatpush1.bf16.msra.mxu0 %v5304
    %5430 = vmatprep.subr.bf16.mxu0 %v5309
    %5431 = vmatpush1.bf16.msra.mxu0 %v5308
    %5432 = vmatprep.subr.bf16.mxu0 %v5313
    %5433 = vmatpush1.bf16.msra.mxu0 %v5312
    %5434 = vmatprep.subr.bf16.mxu0 %v5317
    %5435 = vmatpush1.bf16.msra.mxu0 %v5316
    %5436 = vmatprep.subr.bf16.mxu0 %v5321
    %5437 = vmatpush1.bf16.msra.mxu0 %v5320
    %5438 = vmatprep.subr.bf16.mxu0 %v5325
    %5439 = vmatpush1.bf16.msra.mxu0 %v5324
    %5440 = vmatprep.subr.bf16.mxu0 %v5329
    %5441 = vmatpush1.bf16.msra.mxu0 %v5328
    %5442 = vmatprep.subr.bf16.mxu0 %v5333
    %5443 = vmatpush1.bf16.msra.mxu0 %v5332
    %5444 = vmatprep.subr.bf16.mxu0 %v5337
    %5445 = vmatpush1.bf16.msra.mxu0 %v5336
    %5446 = vmatprep.subr.bf16.mxu0 %v5341
    %5447 = vmatpush1.bf16.msra.mxu0 %v5340
    %5448 = vmatprep.subr.bf16.mxu0 %v5345
    %5449 = vmatpush1.bf16.msra.mxu0 %v5344
    %5450 = vmatprep.subr.bf16.mxu0 %v5349
    %5451 = vmatpush1.bf16.msra.mxu0 %v5348
    %5452 = vmatprep.subr.bf16.mxu0 %v5353
    %5453 = vmatpush1.bf16.msra.mxu0 %v5352
    %5454 = vmatprep.subr.bf16.mxu0 %v5357
    %5455 = vmatpush1.bf16.msra.mxu0 %v5356
    %5456 = vmatprep.mubr.bf16.mxu0 %v5038
    %5457 = vmatmul.mubr.bf16.gmra.mrb[0].mxu0 %v5037
    %v5458 = vpop.f32.mrb[0].mxu0
    %v5459 = vadd.f32 0.0, %v5458
    %v5460 = vpop.f32.mrb[0].mxu0
    %v5461 = vadd.f32 0.0, %v5460
    %v5462 = vpop.f32.mrb[0].mxu0
    %v5463 = vpop.f32.mrb[0].mxu0
    %5464 = vdwg.mxu0
    %5465 = vmatprep.subr.bf16.mxu0 %v5299
    %5466 = vmatpush1.bf16.msra.mxu0 %v5298
    %5467 = vmatprep.subr.bf16.mxu0 %v5303
    %5468 = vmatpush1.bf16.msra.mxu0 %v5302
    %5469 = vmatprep.subr.bf16.mxu0 %v5307
    %5470 = vmatpush1.bf16.msra.mxu0 %v5306
    %5471 = vmatprep.subr.bf16.mxu0 %v5311
    %5472 = vmatpush1.bf16.msra.mxu0 %v5310
    %5473 = vmatprep.subr.bf16.mxu0 %v5315
    %5474 = vmatpush1.bf16.msra.mxu0 %v5314
    %5475 = vmatprep.subr.bf16.mxu0 %v5319
    %5476 = vmatpush1.bf16.msra.mxu0 %v5318
    %5477 = vmatprep.subr.bf16.mxu0 %v5323
    %5478 = vmatpush1.bf16.msra.mxu0 %v5322
    %5479 = vmatprep.subr.bf16.mxu0 %v5327
    %5480 = vmatpush1.bf16.msra.mxu0 %v5326
    %5481 = vmatprep.subr.bf16.mxu0 %v5331
    %5482 = vmatpush1.bf16.msra.mxu0 %v5330
    %5483 = vmatprep.subr.bf16.mxu0 %v5335
    %5484 = vmatpush1.bf16.msra.mxu0 %v5334
    %5485 = vmatprep.subr.bf16.mxu0 %v5339
    %5486 = vmatpush1.bf16.msra.mxu0 %v5338
    %5487 = vmatprep.subr.bf16.mxu0 %v5343
    %5488 = vmatpush1.bf16.msra.mxu0 %v5342
    %5489 = vmatprep.subr.bf16.mxu0 %v5347
    %5490 = vmatpush1.bf16.msra.mxu0 %v5346
    %5491 = vmatprep.subr.bf16.mxu0 %v5351
    %5492 = vmatpush1.bf16.msra.mxu0 %v5350
    %5493 = vmatprep.subr.bf16.mxu0 %v5355
    %5494 = vmatpush1.bf16.msra.mxu0 %v5354
    %5495 = vmatprep.subr.bf16.mxu0 %v5359
    %5496 = vmatpush1.bf16.msra.mxu0 %v5358
    %5497 = vmatprep.mubr.bf16.mxu0 %v5038
    %5498 = vmatmul.mubr.bf16.gmra.mrb[0].mxu0 %v5037
    %v5499 = vpop.f32.mrb[0].mxu0
    %v5500 = vadd.f32 0.0, %v5499
    %v5501 = vpop.f32.mrb[0].mxu0
    %v5502 = vadd.f32 0.0, %v5501
    %v5503 = vpop.f32.mrb[0].mxu0
    %v5504 = vpop.f32.mrb[0].mxu0
    %5505 = vdwg.mxu0
    %v5570 = vunpack.c.l.b16 %v4973
    %v5571 = vunpack.c.h.b16 %v4973
    %v5572 = vunpack.c.l.b16 %v4974
    %v5573 = vunpack.c.h.b16 %v4974
    %v5574 = vunpack.c.l.b16 %v4975
    %v5575 = vunpack.c.h.b16 %v4975
    %v5576 = vunpack.c.l.b16 %v4976
    %v5577 = vunpack.c.h.b16 %v4976
    %v5578 = vunpack.c.l.b16 %v4977
    %v5579 = vunpack.c.h.b16 %v4977
    %v5580 = vunpack.c.l.b16 %v4978
    %v5581 = vunpack.c.h.b16 %v4978
    %v5582 = vunpack.c.l.b16 %v4979
    %v5583 = vunpack.c.h.b16 %v4979
    %v5584 = vunpack.c.l.b16 %v4980
    %v5585 = vunpack.c.h.b16 %v4980
    %v5586 = vunpack.c.l.b16 %v4981
    %v5587 = vunpack.c.h.b16 %v4981
    %v5588 = vunpack.c.l.b16 %v4982
    %v5589 = vunpack.c.h.b16 %v4982
    %v5590 = vunpack.c.l.b16 %v4983
    %v5591 = vunpack.c.h.b16 %v4983
    %v5592 = vunpack.c.l.b16 %v4984
    %v5593 = vunpack.c.h.b16 %v4984
    %v5594 = vunpack.c.l.b16 %v4985
    %v5595 = vunpack.c.h.b16 %v4985
    %v5596 = vunpack.c.l.b16 %v4986
    %v5597 = vunpack.c.h.b16 %v4986
    %v5598 = vunpack.c.l.b16 %v4987
    %v5599 = vunpack.c.h.b16 %v4987
    %v5600 = vunpack.c.l.b16 %v4988
    %v5601 = vunpack.c.h.b16 %v4988
    %v5602 = vunpack.c.l.b16 %v4989
    %v5603 = vunpack.c.h.b16 %v4989
    %v5604 = vunpack.c.l.b16 %v4990
    %v5605 = vunpack.c.h.b16 %v4990
    %v5606 = vunpack.c.l.b16 %v4991
    %v5607 = vunpack.c.h.b16 %v4991
    %v5608 = vunpack.c.l.b16 %v4992
    %v5609 = vunpack.c.h.b16 %v4992
    %v5610 = vunpack.c.l.b16 %v4993
    %v5611 = vunpack.c.h.b16 %v4993
    %v5612 = vunpack.c.l.b16 %v4994
    %v5613 = vunpack.c.h.b16 %v4994
    %v5614 = vunpack.c.l.b16 %v4995
    %v5615 = vunpack.c.h.b16 %v4995
    %v5616 = vunpack.c.l.b16 %v4996
    %v5617 = vunpack.c.h.b16 %v4996
    %v5618 = vunpack.c.l.b16 %v4997
    %v5619 = vunpack.c.h.b16 %v4997
    %v5620 = vunpack.c.l.b16 %v4998
    %v5621 = vunpack.c.h.b16 %v4998
    %v5622 = vunpack.c.l.b16 %v4999
    %v5623 = vunpack.c.h.b16 %v4999
    %v5624 = vunpack.c.l.b16 %v5000
    %v5625 = vunpack.c.h.b16 %v5000
    %v5626 = vunpack.c.l.b16 %v5001
    %v5627 = vunpack.c.h.b16 %v5001
    %v5628 = vunpack.c.l.b16 %v5002
    %v5629 = vunpack.c.h.b16 %v5002
    %v5630 = vunpack.c.l.b16 %v5003
    %v5631 = vunpack.c.h.b16 %v5003
    %v5632 = vunpack.c.l.b16 %v5004
    %v5633 = vunpack.c.h.b16 %v5004
    %v5634 = vunpack.c.l.b16 %v5005
    %v5635 = vunpack.c.h.b16 %v5005
    %v5636 = vunpack.c.l.b16 %v5006
    %v5637 = vunpack.c.h.b16 %v5006
    %v5638 = vunpack.c.l.b16 %v5007
    %v5639 = vunpack.c.h.b16 %v5007
    %v5640 = vunpack.c.l.b16 %v5008
    %v5641 = vunpack.c.h.b16 %v5008
    %v5642 = vunpack.c.l.b16 %v5009
    %v5643 = vunpack.c.h.b16 %v5009
    %v5644 = vunpack.c.l.b16 %v5010
    %v5645 = vunpack.c.h.b16 %v5010
    %v5646 = vunpack.c.l.b16 %v5011
    %v5647 = vunpack.c.h.b16 %v5011
    %v5648 = vunpack.c.l.b16 %v5012
    %v5649 = vunpack.c.h.b16 %v5012
    %v5650 = vunpack.c.l.b16 %v5013
    %v5651 = vunpack.c.h.b16 %v5013
    %v5652 = vunpack.c.l.b16 %v5014
    %v5653 = vunpack.c.h.b16 %v5014
    %v5654 = vunpack.c.l.b16 %v5015
    %v5655 = vunpack.c.h.b16 %v5015
    %v5656 = vunpack.c.l.b16 %v5016
    %v5657 = vunpack.c.h.b16 %v5016
    %v5658 = vunpack.c.l.b16 %v5017
    %v5659 = vunpack.c.h.b16 %v5017
    %v5660 = vunpack.c.l.b16 %v5018
    %v5661 = vunpack.c.h.b16 %v5018
    %v5662 = vunpack.c.l.b16 %v5019
    %v5663 = vunpack.c.h.b16 %v5019
    %v5664 = vunpack.c.l.b16 %v5020
    %v5665 = vunpack.c.h.b16 %v5020
    %v5666 = vunpack.c.l.b16 %v5021
    %v5667 = vunpack.c.h.b16 %v5021
    %v5668 = vunpack.c.l.b16 %v5022
    %v5669 = vunpack.c.h.b16 %v5022
    %v5670 = vunpack.c.l.b16 %v5023
    %v5671 = vunpack.c.h.b16 %v5023
    %v5672 = vunpack.c.l.b16 %v5024
    %v5673 = vunpack.c.h.b16 %v5024
    %v5674 = vunpack.c.l.b16 %v5025
    %v5675 = vunpack.c.h.b16 %v5025
    %v5676 = vunpack.c.l.b16 %v5026
    %v5677 = vunpack.c.h.b16 %v5026
    %v5678 = vunpack.c.l.b16 %v5027
    %v5679 = vunpack.c.h.b16 %v5027
    %v5680 = vunpack.c.l.b16 %v5028
    %v5681 = vunpack.c.h.b16 %v5028
    %v5682 = vunpack.c.l.b16 %v5029
    %v5683 = vunpack.c.h.b16 %v5029
    %v5684 = vunpack.c.l.b16 %v5030
    %v5685 = vunpack.c.h.b16 %v5030
    %v5686 = vunpack.c.l.b16 %v5031
    %v5687 = vunpack.c.h.b16 %v5031
    %v5688 = vunpack.c.l.b16 %v5032
    %v5689 = vunpack.c.h.b16 %v5032
    %v5690 = vunpack.c.l.b16 %v5033
    %v5691 = vunpack.c.h.b16 %v5033
    %v5692 = vunpack.c.l.b16 %v5034
    %v5693 = vunpack.c.h.b16 %v5034
    %v5694 = vunpack.c.l.b16 %v5035
    %v5695 = vunpack.c.h.b16 %v5035
    %v5696 = vunpack.c.l.b16 %v5036
    %v5697 = vunpack.c.h.b16 %v5036
    %v5698 = vpack.c.b16 %v5574, %v5570
    %v5699 = vpack.c.b16 %v5575, %v5571
    %v5700 = vpack.c.b16 %v5576, %v5572
    %v5701 = vpack.c.b16 %v5577, %v5573
    %v5702 = vpack.c.b16 %v5582, %v5578
    %v5703 = vpack.c.b16 %v5583, %v5579
    %v5704 = vpack.c.b16 %v5584, %v5580
    %v5705 = vpack.c.b16 %v5585, %v5581
    %v5706 = vpack.c.b16 %v5590, %v5586
    %v5707 = vpack.c.b16 %v5591, %v5587
    %v5708 = vpack.c.b16 %v5592, %v5588
    %v5709 = vpack.c.b16 %v5593, %v5589
    %v5710 = vpack.c.b16 %v5598, %v5594
    %v5711 = vpack.c.b16 %v5599, %v5595
    %v5712 = vpack.c.b16 %v5600, %v5596
    %v5713 = vpack.c.b16 %v5601, %v5597
    %v5714 = vpack.c.b16 %v5606, %v5602
    %v5715 = vpack.c.b16 %v5607, %v5603
    %v5716 = vpack.c.b16 %v5608, %v5604
    %v5717 = vpack.c.b16 %v5609, %v5605
    %v5718 = vpack.c.b16 %v5614, %v5610
    %v5719 = vpack.c.b16 %v5615, %v5611
    %v5720 = vpack.c.b16 %v5616, %v5612
    %v5721 = vpack.c.b16 %v5617, %v5613
    %v5722 = vpack.c.b16 %v5622, %v5618
    %v5723 = vpack.c.b16 %v5623, %v5619
    %v5724 = vpack.c.b16 %v5624, %v5620
    %v5725 = vpack.c.b16 %v5625, %v5621
    %v5726 = vpack.c.b16 %v5630, %v5626
    %v5727 = vpack.c.b16 %v5631, %v5627
    %v5728 = vpack.c.b16 %v5632, %v5628
    %v5729 = vpack.c.b16 %v5633, %v5629
    %v5730 = vpack.c.b16 %v5638, %v5634
    %v5731 = vpack.c.b16 %v5639, %v5635
    %v5732 = vpack.c.b16 %v5640, %v5636
    %v5733 = vpack.c.b16 %v5641, %v5637
    %v5734 = vpack.c.b16 %v5646, %v5642
    %v5735 = vpack.c.b16 %v5647, %v5643
    %v5736 = vpack.c.b16 %v5648, %v5644
    %v5737 = vpack.c.b16 %v5649, %v5645
    %v5738 = vpack.c.b16 %v5654, %v5650
    %v5739 = vpack.c.b16 %v5655, %v5651
    %v5740 = vpack.c.b16 %v5656, %v5652
    %v5741 = vpack.c.b16 %v5657, %v5653
    %v5742 = vpack.c.b16 %v5662, %v5658
    %v5743 = vpack.c.b16 %v5663, %v5659
    %v5744 = vpack.c.b16 %v5664, %v5660
    %v5745 = vpack.c.b16 %v5665, %v5661
    %v5746 = vpack.c.b16 %v5670, %v5666
    %v5747 = vpack.c.b16 %v5671, %v5667
    %v5748 = vpack.c.b16 %v5672, %v5668
    %v5749 = vpack.c.b16 %v5673, %v5669
    %v5750 = vpack.c.b16 %v5678, %v5674
    %v5751 = vpack.c.b16 %v5679, %v5675
    %v5752 = vpack.c.b16 %v5680, %v5676
    %v5753 = vpack.c.b16 %v5681, %v5677
    %v5754 = vpack.c.b16 %v5686, %v5682
    %v5755 = vpack.c.b16 %v5687, %v5683
    %v5756 = vpack.c.b16 %v5688, %v5684
    %v5757 = vpack.c.b16 %v5689, %v5685
    %v5758 = vpack.c.b16 %v5694, %v5690
    %v5759 = vpack.c.b16 %v5695, %v5691
    %v5760 = vpack.c.b16 %v5696, %v5692
    %v5761 = vpack.c.b16 %v5697, %v5693
    %5826 = vmatprep.subr.bf16.mxu0 %v5699
    %5827 = vmatpush1.bf16.msra.mxu0 %v5698
    %5828 = vmatprep.subr.bf16.mxu0 %v5703
    %5829 = vmatpush1.bf16.msra.mxu0 %v5702
    %5830 = vmatprep.subr.bf16.mxu0 %v5707
    %5831 = vmatpush1.bf16.msra.mxu0 %v5706
    %5832 = vmatprep.subr.bf16.mxu0 %v5711
    %5833 = vmatpush1.bf16.msra.mxu0 %v5710
    %5834 = vmatprep.subr.bf16.mxu0 %v5715
    %5835 = vmatpush1.bf16.msra.mxu0 %v5714
    %5836 = vmatprep.subr.bf16.mxu0 %v5719
    %5837 = vmatpush1.bf16.msra.mxu0 %v5718
    %5838 = vmatprep.subr.bf16.mxu0 %v5723
    %5839 = vmatpush1.bf16.msra.mxu0 %v5722
    %5840 = vmatprep.subr.bf16.mxu0 %v5727
    %5841 = vmatpush1.bf16.msra.mxu0 %v5726
    %5842 = vmatprep.subr.bf16.mxu0 %v5731
    %5843 = vmatpush1.bf16.msra.mxu0 %v5730
    %5844 = vmatprep.subr.bf16.mxu0 %v5735
    %5845 = vmatpush1.bf16.msra.mxu0 %v5734
    %5846 = vmatprep.subr.bf16.mxu0 %v5739
    %5847 = vmatpush1.bf16.msra.mxu0 %v5738
    %5848 = vmatprep.subr.bf16.mxu0 %v5743
    %5849 = vmatpush1.bf16.msra.mxu0 %v5742
    %5850 = vmatprep.subr.bf16.mxu0 %v5747
    %5851 = vmatpush1.bf16.msra.mxu0 %v5746
    %5852 = vmatprep.subr.bf16.mxu0 %v5751
    %5853 = vmatpush1.bf16.msra.mxu0 %v5750
    %5854 = vmatprep.subr.bf16.mxu0 %v5755
    %5855 = vmatpush1.bf16.msra.mxu0 %v5754
    %5856 = vmatprep.subr.bf16.mxu0 %v5759
    %5857 = vmatpush1.bf16.msra.mxu0 %v5758
    %5858 = vmatprep.mubr.bf16.mxu0 %v4972
    %5859 = vmatmul.mubr.bf16.gmra.mrb[0].mxu0 %v4971
    %v5860 = vpop.f32.mrb[0].mxu0
    %v5861 = vadd.f32 %v5459, %v5860
    %v5862 = vpop.f32.mrb[0].mxu0
    %v5863 = vadd.f32 %v5461, %v5862
    %v5864 = vpop.f32.mrb[0].mxu0
    %v5865 = vpop.f32.mrb[0].mxu0
    %5866 = vdwg.mxu0
    %5867 = vmatprep.subr.bf16.mxu0 %v5701
    %5868 = vmatpush1.bf16.msra.mxu0 %v5700
    %5869 = vmatprep.subr.bf16.mxu0 %v5705
    %5870 = vmatpush1.bf16.msra.mxu0 %v5704
    %5871 = vmatprep.subr.bf16.mxu0 %v5709
    %5872 = vmatpush1.bf16.msra.mxu0 %v5708
    %5873 = vmatprep.subr.bf16.mxu0 %v5713
    %5874 = vmatpush1.bf16.msra.mxu0 %v5712
    %5875 = vmatprep.subr.bf16.mxu0 %v5717
    %5876 = vmatpush1.bf16.msra.mxu0 %v5716
    %5877 = vmatprep.subr.bf16.mxu0 %v5721
    %5878 = vmatpush1.bf16.msra.mxu0 %v5720
    %5879 = vmatprep.subr.bf16.mxu0 %v5725
    %5880 = vmatpush1.bf16.msra.mxu0 %v5724
    %5881 = vmatprep.subr.bf16.mxu0 %v5729
    %5882 = vmatpush1.bf16.msra.mxu0 %v5728
    %5883 = vmatprep.subr.bf16.mxu0 %v5733
    %5884 = vmatpush1.bf16.msra.mxu0 %v5732
    %5885 = vmatprep.subr.bf16.mxu0 %v5737
    %5886 = vmatpush1.bf16.msra.mxu0 %v5736
    %5887 = vmatprep.subr.bf16.mxu0 %v5741
    %5888 = vmatpush1.bf16.msra.mxu0 %v5740
    %5889 = vmatprep.subr.bf16.mxu0 %v5745
    %5890 = vmatpush1.bf16.msra.mxu0 %v5744
    %5891 = vmatprep.subr.bf16.mxu0 %v5749
    %5892 = vmatpush1.bf16.msra.mxu0 %v5748
    %5893 = vmatprep.subr.bf16.mxu0 %v5753
    %5894 = vmatpush1.bf16.msra.mxu0 %v5752
    %5895 = vmatprep.subr.bf16.mxu0 %v5757
    %5896 = vmatpush1.bf16.msra.mxu0 %v5756
    %5897 = vmatprep.subr.bf16.mxu0 %v5761
    %5898 = vmatpush1.bf16.msra.mxu0 %v5760
    %5899 = vmatprep.mubr.bf16.mxu0 %v4972
    %5900 = vmatmul.mubr.bf16.gmra.mrb[0].mxu0 %v4971
    %v5901 = vpop.f32.mrb[0].mxu0
    %v5902 = vadd.f32 %v5500, %v5901
    %v5903 = vpop.f32.mrb[0].mxu0
    %v5904 = vadd.f32 %v5502, %v5903
    %v5905 = vpop.f32.mrb[0].mxu0
    %v5906 = vpop.f32.mrb[0].mxu0
    %5907 = vdwg.mxu0
    %v5908 = vld [vmem:[%s8] sm:$0xf]
    %v5910 = vlaneseq
    %v5911 = vshrl.u32 %v5910, 7
    %v5912 = vsub.s32 0, %v5911
    %v5913 = vrot.slane %v5908, %v5912
    %v5914 = vlaneseq
    %v5915 = vshrl.u32 %v5914, 7
    %v5916 = vsub.s32 1, %v5915
    %v5917 = vrot.slane %v5908, %v5916
    %v5918 = vlaneseq
    %v5919 = vshrl.u32 %v5918, 7
    %v5920 = vsub.s32 2, %v5919
    %v5921 = vrot.slane %v5908, %v5920
    %v5922 = vlaneseq
    %v5923 = vshrl.u32 %v5922, 7
    %v5924 = vsub.s32 3, %v5923
    %v5925 = vrot.slane %v5908, %v5924
    %v5930 = vadd.f32 %v5861, %v5913
    %v5931 = vadd.f32 %v5863, %v5917
    %v5932 = vadd.f32 %v5902, %v5921
    %v5933 = vadd.f32 %v5904, %v5925
    %v5934 = vmax.f32 %v5930, 0.0
    %v5935 = vmax.f32 %v5931, 0.0
    %v5936 = vmax.f32 %v5932, 0.0
    %v5937 = vmax.f32 %v5933, 0.0
    %v5938 = vpack.c.bf16 %v5934, %v5934
    %v5939 = vpack.c.bf16 %v5935, %v5935
    %v5940 = vpack.c.bf16 %v5936, %v5936
    %v5941 = vpack.c.bf16 %v5937, %v5937
    %v5942 = vld [vmem:[#allocation10] sm:$0xf]
    %v5943 = vld [vmem:[#allocation10 + $0x4] sm:$0xf]
    %v5944 = vld [vmem:[#allocation10 + $0x8] sm:$0xf]
    %v5945 = vld [vmem:[#allocation10 + $0xc] sm:$0xf]
    %v5946 = vld [vmem:[#allocation10 + $0x10] sm:$0xf]
    %v5947 = vld [vmem:[#allocation10 + $0x14] sm:$0xf]
    %v5948 = vld [vmem:[#allocation10 + $0x18] sm:$0xf]
    %v5949 = vld [vmem:[#allocation10 + $0x1c] sm:$0xf]
    %v5950 = vld [vmem:[#allocation10 + $0x20] sm:$0xf]
    %v5951 = vld [vmem:[#allocation10 + $0x24] sm:$0xf]
    %v5952 = vld [vmem:[#allocation10 + $0x28] sm:$0xf]
    %v5953 = vld [vmem:[#allocation10 + $0x2c] sm:$0xf]
    %v5954 = vld [vmem:[#allocation10 + $0x30] sm:$0xf]
    %v5955 = vld [vmem:[#allocation10 + $0x34] sm:$0xf]
    %v5956 = vld [vmem:[#allocation10 + $0x38] sm:$0xf]
    %v5957 = vld [vmem:[#allocation10 + $0x3c] sm:$0xf]
    %v5958 = vld [vmem:[#allocation10 + $0x40] sm:$0xf]
    %v5959 = vld [vmem:[#allocation10 + $0x44] sm:$0xf]
    %v5960 = vld [vmem:[#allocation10 + $0x48] sm:$0xf]
    %v5961 = vld [vmem:[#allocation10 + $0x4c] sm:$0xf]
    %v5962 = vld [vmem:[#allocation10 + $0x50] sm:$0xf]
    %v5963 = vld [vmem:[#allocation10 + $0x54] sm:$0xf]
    %v5964 = vld [vmem:[#allocation10 + $0x58] sm:$0xf]
    %v5965 = vld [vmem:[#allocation10 + $0x5c] sm:$0xf]
    %v5966 = vld [vmem:[#allocation10 + $0x60] sm:$0xf]
    %v5967 = vld [vmem:[#allocation10 + $0x64] sm:$0xf]
    %v5968 = vld [vmem:[#allocation10 + $0x68] sm:$0xf]
    %v5969 = vld [vmem:[#allocation10 + $0x6c] sm:$0xf]
    %v5970 = vld [vmem:[#allocation10 + $0x70] sm:$0xf]
    %v5971 = vld [vmem:[#allocation10 + $0x74] sm:$0xf]
    %v5972 = vld [vmem:[#allocation10 + $0x78] sm:$0xf]
    %v5973 = vld [vmem:[#allocation10 + $0x7c] sm:$0xf]
    %v5974 = vld [vmem:[#allocation10 + $0x80] sm:$0xf]
    %v5975 = vld [vmem:[#allocation10 + $0x84] sm:$0xf]
    %v5976 = vld [vmem:[#allocation10 + $0x88] sm:$0xf]
    %v5977 = vld [vmem:[#allocation10 + $0x8c] sm:$0xf]
    %v5978 = vld [vmem:[#allocation10 + $0x90] sm:$0xf]
    %v5979 = vld [vmem:[#allocation10 + $0x94] sm:$0xf]
    %v5980 = vld [vmem:[#allocation10 + $0x98] sm:$0xf]
    %v5981 = vld [vmem:[#allocation10 + $0x9c] sm:$0xf]
    %v5982 = vld [vmem:[#allocation10 + $0xa0] sm:$0xf]
    %v5983 = vld [vmem:[#allocation10 + $0xa4] sm:$0xf]
    %v5984 = vld [vmem:[#allocation10 + $0xa8] sm:$0xf]
    %v5985 = vld [vmem:[#allocation10 + $0xac] sm:$0xf]
    %v5986 = vld [vmem:[#allocation10 + $0xb0] sm:$0xf]
    %v5987 = vld [vmem:[#allocation10 + $0xb4] sm:$0xf]
    %v5988 = vld [vmem:[#allocation10 + $0xb8] sm:$0xf]
    %v5989 = vld [vmem:[#allocation10 + $0xbc] sm:$0xf]
    %v5990 = vld [vmem:[#allocation10 + $0xc0] sm:$0xf]
    %v5991 = vld [vmem:[#allocation10 + $0xc4] sm:$0xf]
    %v5992 = vld [vmem:[#allocation10 + $0xc8] sm:$0xf]
    %v5993 = vld [vmem:[#allocation10 + $0xcc] sm:$0xf]
    %v5994 = vld [vmem:[#allocation10 + $0xd0] sm:$0xf]
    %v5995 = vld [vmem:[#allocation10 + $0xd4] sm:$0xf]
    %v5996 = vld [vmem:[#allocation10 + $0xd8] sm:$0xf]
    %v5997 = vld [vmem:[#allocation10 + $0xdc] sm:$0xf]
    %v5998 = vld [vmem:[#allocation10 + $0xe0] sm:$0xf]
    %v5999 = vld [vmem:[#allocation10 + $0xe4] sm:$0xf]
    %v6000 = vld [vmem:[#allocation10 + $0xe8] sm:$0xf]
    %v6001 = vld [vmem:[#allocation10 + $0xec] sm:$0xf]
    %v6002 = vld [vmem:[#allocation10 + $0xf0] sm:$0xf]
    %v6003 = vld [vmem:[#allocation10 + $0xf4] sm:$0xf]
    %v6004 = vld [vmem:[#allocation10 + $0xf8] sm:$0xf]
    %v6005 = vld [vmem:[#allocation10 + $0xfc] sm:$0xf]
    %v6006 = vld [vmem:[%s10] sm:$0x1]
    %v6008 = vlaneseq
    %v6009 = vshrl.u32 %v6008, 7
    %v6010 = vsub.s32 0, %v6009
    %v6011 = vrot.slane %v6006, %v6010
    %v6077 = vunpack.c.l.b16 %v5942
    %v6078 = vunpack.c.l.b16 %v5943
    %v6079 = vunpack.c.l.b16 %v5944
    %v6080 = vunpack.c.l.b16 %v5945
    %v6081 = vunpack.c.l.b16 %v5946
    %v6082 = vunpack.c.l.b16 %v5947
    %v6083 = vunpack.c.l.b16 %v5948
    %v6084 = vunpack.c.l.b16 %v5949
    %v6085 = vunpack.c.l.b16 %v5950
    %v6086 = vunpack.c.l.b16 %v5951
    %v6087 = vunpack.c.l.b16 %v5952
    %v6088 = vunpack.c.l.b16 %v5953
    %v6089 = vunpack.c.l.b16 %v5954
    %v6090 = vunpack.c.l.b16 %v5955
    %v6091 = vunpack.c.l.b16 %v5956
    %v6092 = vunpack.c.l.b16 %v5957
    %v6093 = vunpack.c.l.b16 %v5958
    %v6094 = vunpack.c.l.b16 %v5959
    %v6095 = vunpack.c.l.b16 %v5960
    %v6096 = vunpack.c.l.b16 %v5961
    %v6097 = vunpack.c.l.b16 %v5962
    %v6098 = vunpack.c.l.b16 %v5963
    %v6099 = vunpack.c.l.b16 %v5964
    %v6100 = vunpack.c.l.b16 %v5965
    %v6101 = vunpack.c.l.b16 %v5966
    %v6102 = vunpack.c.l.b16 %v5967
    %v6103 = vunpack.c.l.b16 %v5968
    %v6104 = vunpack.c.l.b16 %v5969
    %v6105 = vunpack.c.l.b16 %v5970
    %v6106 = vunpack.c.l.b16 %v5971
    %v6107 = vunpack.c.l.b16 %v5972
    %v6108 = vunpack.c.l.b16 %v5973
    %v6109 = vunpack.c.l.b16 %v5974
    %v6110 = vunpack.c.l.b16 %v5975
    %v6111 = vunpack.c.l.b16 %v5976
    %v6112 = vunpack.c.l.b16 %v5977
    %v6113 = vunpack.c.l.b16 %v5978
    %v6114 = vunpack.c.l.b16 %v5979
    %v6115 = vunpack.c.l.b16 %v5980
    %v6116 = vunpack.c.l.b16 %v5981
    %v6117 = vunpack.c.l.b16 %v5982
    %v6118 = vunpack.c.l.b16 %v5983
    %v6119 = vunpack.c.l.b16 %v5984
    %v6120 = vunpack.c.l.b16 %v5985
    %v6121 = vunpack.c.l.b16 %v5986
    %v6122 = vunpack.c.l.b16 %v5987
    %v6123 = vunpack.c.l.b16 %v5988
    %v6124 = vunpack.c.l.b16 %v5989
    %v6125 = vunpack.c.l.b16 %v5990
    %v6126 = vunpack.c.l.b16 %v5991
    %v6127 = vunpack.c.l.b16 %v5992
    %v6128 = vunpack.c.l.b16 %v5993
    %v6129 = vunpack.c.l.b16 %v5994
    %v6130 = vunpack.c.l.b16 %v5995
    %v6131 = vunpack.c.l.b16 %v5996
    %v6132 = vunpack.c.l.b16 %v5997
    %v6133 = vunpack.c.l.b16 %v5998
    %v6134 = vunpack.c.l.b16 %v5999
    %v6135 = vunpack.c.l.b16 %v6000
    %v6136 = vunpack.c.l.b16 %v6001
    %v6137 = vunpack.c.l.b16 %v6002
    %v6138 = vunpack.c.l.b16 %v6003
    %v6139 = vunpack.c.l.b16 %v6004
    %v6140 = vunpack.c.l.b16 %v6005
    %v6141 = vpack.c.b16 %v6078, %v6077
    %v6142 = vpack.c.b16 %v6080, %v6079
    %v6143 = vpack.c.b16 %v6082, %v6081
    %v6144 = vpack.c.b16 %v6084, %v6083
    %v6145 = vpack.c.b16 %v6086, %v6085
    %v6146 = vpack.c.b16 %v6088, %v6087
    %v6147 = vpack.c.b16 %v6090, %v6089
    %v6148 = vpack.c.b16 %v6092, %v6091
    %v6149 = vpack.c.b16 %v6094, %v6093
    %v6150 = vpack.c.b16 %v6096, %v6095
    %v6151 = vpack.c.b16 %v6098, %v6097
    %v6152 = vpack.c.b16 %v6100, %v6099
    %v6153 = vpack.c.b16 %v6102, %v6101
    %v6154 = vpack.c.b16 %v6104, %v6103
    %v6155 = vpack.c.b16 %v6106, %v6105
    %v6156 = vpack.c.b16 %v6108, %v6107
    %v6157 = vpack.c.b16 %v6110, %v6109
    %v6158 = vpack.c.b16 %v6112, %v6111
    %v6159 = vpack.c.b16 %v6114, %v6113
    %v6160 = vpack.c.b16 %v6116, %v6115
    %v6161 = vpack.c.b16 %v6118, %v6117
    %v6162 = vpack.c.b16 %v6120, %v6119
    %v6163 = vpack.c.b16 %v6122, %v6121
    %v6164 = vpack.c.b16 %v6124, %v6123
    %v6165 = vpack.c.b16 %v6126, %v6125
    %v6166 = vpack.c.b16 %v6128, %v6127
    %v6167 = vpack.c.b16 %v6130, %v6129
    %v6168 = vpack.c.b16 %v6132, %v6131
    %v6169 = vpack.c.b16 %v6134, %v6133
    %v6170 = vpack.c.b16 %v6136, %v6135
    %v6171 = vpack.c.b16 %v6138, %v6137
    %v6172 = vpack.c.b16 %v6140, %v6139
    %6205 = vmatprep.subr.bf16.mxu0 0
    %6206 = vmatpush1.bf16.msra.mxu0 %v6141
    %6207 = vmatprep.subr.bf16.mxu0 0
    %6208 = vmatpush1.bf16.msra.mxu0 %v6142
    %6209 = vmatprep.subr.bf16.mxu0 0
    %6210 = vmatpush1.bf16.msra.mxu0 %v6143
    %6211 = vmatprep.subr.bf16.mxu0 0
    %6212 = vmatpush1.bf16.msra.mxu0 %v6144
    %6213 = vmatprep.subr.bf16.mxu0 0
    %6214 = vmatpush1.bf16.msra.mxu0 %v6145
    %6215 = vmatprep.subr.bf16.mxu0 0
    %6216 = vmatpush1.bf16.msra.mxu0 %v6146
    %6217 = vmatprep.subr.bf16.mxu0 0
    %6218 = vmatpush1.bf16.msra.mxu0 %v6147
    %6219 = vmatprep.subr.bf16.mxu0 0
    %6220 = vmatpush1.bf16.msra.mxu0 %v6148
    %6221 = vmatprep.subr.bf16.mxu0 0
    %6222 = vmatpush1.bf16.msra.mxu0 %v6149
    %6223 = vmatprep.subr.bf16.mxu0 0
    %6224 = vmatpush1.bf16.msra.mxu0 %v6150
    %6225 = vmatprep.subr.bf16.mxu0 0
    %6226 = vmatpush1.bf16.msra.mxu0 %v6151
    %6227 = vmatprep.subr.bf16.mxu0 0
    %6228 = vmatpush1.bf16.msra.mxu0 %v6152
    %6229 = vmatprep.subr.bf16.mxu0 0
    %6230 = vmatpush1.bf16.msra.mxu0 %v6153
    %6231 = vmatprep.subr.bf16.mxu0 0
    %6232 = vmatpush1.bf16.msra.mxu0 %v6154
    %6233 = vmatprep.subr.bf16.mxu0 0
    %6234 = vmatpush1.bf16.msra.mxu0 %v6155
    %6235 = vmatprep.subr.bf16.mxu0 0
    %6236 = vmatpush1.bf16.msra.mxu0 %v6156
    %6237 = vmatprep.mubr.bf16.mxu0 %v5939
    %6238 = vmatmul.mubr.bf16.gmra.mrb[0].mxu0 %v5938
    %v6239 = vpop.f32.mrb[0].mxu0
    %v6240 = vadd.f32 %v6011, %v6239
    %v6241 = vpop.f32.mrb[0].mxu0
    %v6242 = vpop.f32.mrb[0].mxu0
    %v6243 = vpop.f32.mrb[0].mxu0
    %6244 = vdwg.mxu0
    %6245 = vmatprep.subr.bf16.mxu0 0
    %6246 = vmatpush1.bf16.msra.mxu0 %v6157
    %6247 = vmatprep.subr.bf16.mxu0 0
    %6248 = vmatpush1.bf16.msra.mxu0 %v6158
    %6249 = vmatprep.subr.bf16.mxu0 0
    %6250 = vmatpush1.bf16.msra.mxu0 %v6159
    %6251 = vmatprep.subr.bf16.mxu0 0
    %6252 = vmatpush1.bf16.msra.mxu0 %v6160
    %6253 = vmatprep.subr.bf16.mxu0 0
    %6254 = vmatpush1.bf16.msra.mxu0 %v6161
    %6255 = vmatprep.subr.bf16.mxu0 0
    %6256 = vmatpush1.bf16.msra.mxu0 %v6162
    %6257 = vmatprep.subr.bf16.mxu0 0
    %6258 = vmatpush1.bf16.msra.mxu0 %v6163
    %6259 = vmatprep.subr.bf16.mxu0 0
    %6260 = vmatpush1.bf16.msra.mxu0 %v6164
    %6261 = vmatprep.subr.bf16.mxu0 0
    %6262 = vmatpush1.bf16.msra.mxu0 %v6165
    %6263 = vmatprep.subr.bf16.mxu0 0
    %6264 = vmatpush1.bf16.msra.mxu0 %v6166
    %6265 = vmatprep.subr.bf16.mxu0 0
    %6266 = vmatpush1.bf16.msra.mxu0 %v6167
    %6267 = vmatprep.subr.bf16.mxu0 0
    %6268 = vmatpush1.bf16.msra.mxu0 %v6168
    %6269 = vmatprep.subr.bf16.mxu0 0
    %6270 = vmatpush1.bf16.msra.mxu0 %v6169
    %6271 = vmatprep.subr.bf16.mxu0 0
    %6272 = vmatpush1.bf16.msra.mxu0 %v6170
    %6273 = vmatprep.subr.bf16.mxu0 0
    %6274 = vmatpush1.bf16.msra.mxu0 %v6171
    %6275 = vmatprep.subr.bf16.mxu0 0
    %6276 = vmatpush1.bf16.msra.mxu0 %v6172
    %6277 = vmatprep.mubr.bf16.mxu0 %v5941
    %6278 = vmatmul.mubr.bf16.gmra.mrb[0].mxu0 %v5940
    %v6279 = vpop.f32.mrb[0].mxu0
    %v6280 = vadd.f32 %v6240, %v6279
    %v6281 = vpop.f32.mrb[0].mxu0
    %v6282 = vpop.f32.mrb[0].mxu0
    %v6283 = vpop.f32.mrb[0].mxu0
    %6284 = vdwg.mxu0
    %6285 = vst [vmem:[%s11] sm:$0xff] %v6280
    // Predicated region
    $region62: #{cnn_forward.1} parent=1 // pred_check
      _
    $region63: #{cnn_forward.1} parent=1 // pred_check_branch
      %6287 = sbr.rel (0) target = $region65
    $region64: #{cnn_forward.1} parent=1 // pred_region
      _
    $region65: #{cnn_forward.1} parent=1 // pred_fallthru
      _
    // Predicated region
    $region66: #{cnn_forward.1} parent=1 // pred_check
      _
    $region67: #{cnn_forward.1} parent=1 // pred_check_branch
      %6289 = sbr.rel (0) target = $region69
    $region68: #{cnn_forward.1} parent=1 // pred_region
      _
    $region69: #{cnn_forward.1} parent=1 // pred_fallthru
      _
    %6290 = vsyncpa [#allocation6], 1
    %6291 = vsyncpa [#allocation8], 1
    %6292 = vsyncpa [#allocation11], 1

</llo_original>
